<compile_context>
chip_gen: v6e
topology: v6e:2x2x1
jax: 0.10.0
libtpu: 0.0.40
codegen_flags: <defaults>
</compile_context>

<pallas_src>
import jax
import jax.numpy as jnp
from jax.experimental import pallas as pl
from jax.experimental.pallas import tpu as pltpu


# ------------------------------ Pallas kernel -------------------------------

def _make_bilstm_kernel(num_layers, seq_len, batch_pad, hidden, mxu_dtype):
    T, BP, H = seq_len, batch_pad, hidden
    G4 = 4 * H                      # per-direction gate width (4*32 = 128 lanes)

    def kernel(*refs):
        # refs = [x] + num_layers*[w_ih, w_hh, b] + [fc_w, fc_b]
        #        + [out] + [gx_f, gx_b, act_f, act_b] scratch
        x_ref = refs[0]
        layer_refs = [refs[1 + 3 * l: 4 + 3 * l] for l in range(num_layers)]
        fc_w_ref = refs[1 + 3 * num_layers]            # (2H, O)
        fc_b_ref = refs[2 + 3 * num_layers]            # (1, O)   f32
        out_ref = refs[3 + 3 * num_layers]             # (BP, O)  f32
        gxf_ref = refs[4 + 3 * num_layers]             # (T, BP, 4H) f32
        gxb_ref = refs[5 + 3 * num_layers]             # (T, BP, 4H) f32
        actf_ref = refs[6 + 3 * num_layers]            # (T, BP, H)  mxu_dtype
        actb_ref = refs[7 + 3 * num_layers]            # (T, BP, H)  mxu_dtype

        # Row-block selector, built once: rows 0:BP = forward direction,
        # rows BP:2BP = backward direction of the stacked state.
        fwd_rows = jax.lax.broadcasted_iota(jnp.int32, (2 * BP, G4), 0) < BP

        h_bwd_last = None
        for l in range(num_layers):
            w_ih_ref, w_hh_ref, b_ref = layer_refs[l]
            last = (l == num_layers - 1)

            w_ih = w_ih_ref[...]      # (D_l, 8H) cols [fwd i,f,2g,o | bwd i,f,2g,o]
            bias = b_ref[...]         # (1, 8H) f32, g columns pre-doubled

            # ---- hoisted input projection: one shot per layer, lane-dense ----
            if l == 0:
                src = x_ref[...]                                   # (T*BP, D)
                if src.shape[1] == 1:
                    # degenerate contraction (input_size == 1): VPU broadcast-mul
                    gx = src * w_ih.astype(jnp.float32) + bias     # (T*BP, 8H)
                else:
                    gx = jnp.dot(src.astype(mxu_dtype), w_ih,
                                 preferred_element_type=jnp.float32) + bias
            else:
                # previous layer output = [fwd | bwd]; split the weight along
                # the contraction dim instead of concatenating activations.
                af = actf_ref[...].reshape(T * BP, H)
                ab = actb_ref[...].reshape(T * BP, H)
                gx = (jnp.dot(af, w_ih[0:H, :],
                              preferred_element_type=jnp.float32)
                      + jnp.dot(ab, w_ih[H:2 * H, :],
                                preferred_element_type=jnp.float32)
                      + bias)                                      # (T*BP, 8H) f32
            # Per-timestep, sublane-aligned, leading-axis-addressable layout.
            gxf_ref[...] = gx[:, 0:G4].reshape(T, BP, G4)
            gxb_ref[...] = gx[:, G4:2 * G4].reshape(T, BP, G4)

            w_hh = w_hh_ref[...]                                   # (H, 8H)

            # Stacked state: rows 0:BP forward, rows BP:2BP backward.
            h_st = jnp.zeros((2 * BP, H), jnp.float32)
            c_st = jnp.zeros((2 * BP, H), jnp.float32)

            # Fully unrolled recurrence (T is tiny); backward direction is pure
            # index arithmetic (tb = T-1-t) — no data reversal anywhere.
            for t in range(T):
                tb = T - 1 - t
                # (2BP, 4H): [gx_fwd(t) ; gx_bwd(tb)] — sublane concat of two
                # aligned (BP, 128) tiles read with leading-axis indices.
                gx_t = jnp.concatenate([gxf_ref[t], gxb_ref[tb]], axis=0)
                # ONE MXU issue for both directions.
                rec = jnp.dot(h_st.astype(mxu_dtype), w_hh,
                              preferred_element_type=jnp.float32)  # (2BP, 8H)
                gates = gx_t + jnp.where(fwd_rows,
                                         rec[:, 0:G4], rec[:, G4:2 * G4])
                # EUP issue #1: full-width sigmoid covers i, f, o and (because
                # the g columns were pre-scaled by 2) sigmoid(2*pre_g).
                s = jax.nn.sigmoid(gates)                          # (2BP, 4H)
                i_g = s[:, 0:H]
                f_g = s[:, H:2 * H]            # lane-offset slice -> XLU rotate
                o_g = s[:, 3 * H:4 * H]
                # g gate: tanh(x) = 2*sigmoid(2x) - 1; aligned with an XLU roll
                # (shift = 2H = half the lane width, direction-agnostic).
                g_s = pltpu.roll(s, 2 * H, axis=1)[:, 0:H]
                c_st = f_g * c_st + i_g * (g_s + g_s - 1.0)
                # EUP issue #2: tanh(c) through the same sigmoid identity.
                t_c = jax.nn.sigmoid(c_st + c_st)
                h_st = o_g * (t_c + t_c - 1.0)

                if not last:
                    actf_ref[t] = h_st[0:BP, :].astype(mxu_dtype)
                    actb_ref[tb] = h_st[BP:2 * BP, :].astype(mxu_dtype)
                elif t == 0:
                    # Last layer only needs h_bwd at time T-1, i.e. the very
                    # first backward step from zero state.
                    h_bwd_last = h_st[BP:2 * BP, :]

            if last:
                # out[:, -1, :] = [h_fwd(T-1) | h_bwd(T-1)]; FC fused as a
                # single MXU issue on the (BP, 2H) lane concat.
                h_cat = jnp.concatenate([h_st[0:BP, :], h_bwd_last], axis=1)
                out_ref[...] = (jnp.dot(h_cat.astype(mxu_dtype), fc_w_ref[...],
                                        preferred_element_type=jnp.float32)
                                + fc_b_ref[...])

    return kernel


# --------------------------------- wrapper ----------------------------------

def _prep_operands(params, x, mxu_dtype):
    """Pad the batch to the f32 sublane tile, build time-major rows, and fold
    the tanh(x)=2*sigmoid(2x)-1 pre-scale into the g-gate weight columns."""
    B, T, D = x.shape
    H = params["lstm"][0]["w_hh_f"].shape[0]
    B_pad = max(8, -(-B // 8) * 8)

    x_t = jnp.transpose(x.astype(jnp.float32), (1, 0, 2))       # (T, B, D)
    x_t = jnp.pad(x_t, ((0, 0), (0, B_pad - B), (0, 0)))        # (T, B_pad, D)
    x2d = x_t.reshape(T * B_pad, D)

    col = jnp.arange(8 * H)
    g_cols = ((col >= 2 * H) & (col < 3 * H)) | ((col >= 6 * H) & (col < 7 * H))
    g_scale = jnp.where(g_cols, 2.0, 1.0).astype(jnp.float32)   # (8H,)

    inputs = [x2d]
    for layer in params["lstm"]:
        w_ih = (layer["w_ih"] * g_scale).astype(mxu_dtype)                   # (D_l, 8H)
        w_hh = (jnp.concatenate([layer["w_hh_f"], layer["w_hh_b"]], axis=1)
                * g_scale).astype(mxu_dtype)                                 # (H, 8H)
        b = layer["b"] * g_scale                                             # (1, 8H)
        inputs += [w_ih, w_hh, b]
    inputs += [params["fc_w_t"].astype(mxu_dtype), params["fc_b"]]
    return inputs, B_pad


def bilstm_forward(params, x, *, mxu_dtype=jnp.bfloat16):
    """x: (B, T, input_size) -> (B, output_size).  h0 = c0 = 0 (as in module).

    mxu_dtype: dtype of all matmul operands (weights / recurrent LHS /
    inter-layer activations).  Accumulation, cell state and all gate math are
    always f32 (v5e has no bf16 VPU/EUP; bf16 is an MXU-operand-only win)."""
    B, T, D = x.shape
    H = params["lstm"][0]["w_hh_f"].shape[0]
    O = params["fc_w_t"].shape[1]
    num_layers = len(params["lstm"])

    inputs, B_pad = _prep_operands(params, x, mxu_dtype)
    kernel = _make_bilstm_kernel(num_layers, T, B_pad, H, mxu_dtype)

    out = pl.pallas_call(
        kernel,
        out_shape=jax.ShapeDtypeStruct((B_pad, O), jnp.float32),
        scratch_shapes=[
            pltpu.VMEM((T, B_pad, 4 * H), jnp.float32),   # fwd gate pre-activations
            pltpu.VMEM((T, B_pad, 4 * H), jnp.float32),   # bwd gate pre-activations
            pltpu.VMEM((T, B_pad, H), mxu_dtype),         # fwd activations l -> l+1
            pltpu.VMEM((T, B_pad, H), mxu_dtype),         # bwd activations l -> l+1
        ],
    )(*inputs)
    return out[:B]


# ------------------------- deterministic params ----------------------------

def init_params(key, input_size=1, hidden_size=32, num_layers=2, output_size=1):
    H = hidden_size
    params = {"lstm": []}
    k = 1.0 / float(H) ** 0.5
    keys = jax.random.split(key, num_layers * 2 * 4 + 2)
    idx = 0
    for layer in range(num_layers):
        layer_in = input_size if layer == 0 else 2 * H
        dirs = []
        for _direction in range(2):
            w_ih = jax.random.uniform(keys[idx], (4 * H, layer_in),
                                      minval=-k, maxval=k, dtype=jnp.float32)
            idx += 1
            w_hh = jax.random.uniform(keys[idx], (4 * H, H),
                                      minval=-k, maxval=k, dtype=jnp.float32)
            idx += 1
            b_ih = jax.random.uniform(keys[idx], (4 * H,),
                                      minval=-k, maxval=k, dtype=jnp.float32)
            idx += 1
            b_hh = jax.random.uniform(keys[idx], (4 * H,),
                                      minval=-k, maxval=k, dtype=jnp.float32)
            idx += 1
            dirs.append((w_ih, w_hh, b_ih, b_hh))
        (wif, whf, bif, bhf), (wib, whb, bib, bhb) = dirs
        params["lstm"].append({
            # columns: [fwd gates 4H | bwd gates 4H], torch layout transposed
            "w_ih": jnp.concatenate([wif.T, wib.T], axis=1),      # (D_in, 8H)
            "w_hh_f": whf.T,                                      # (H, 4H)
            "w_hh_b": whb.T,                                      # (H, 4H)
            "b": jnp.concatenate([bif + bhf, bib + bhb]).reshape(1, 8 * H),
        })
    kf = 1.0 / float(2 * H) ** 0.5
    fc_w = jax.random.uniform(keys[idx], (output_size, 2 * H),
                              minval=-kf, maxval=kf, dtype=jnp.float32)
    idx += 1
    fc_b = jax.random.uniform(keys[idx], (output_size,),
                              minval=-kf, maxval=kf, dtype=jnp.float32)
    params["fc_w_t"] = fc_w.T                                     # (2H, O)
    params["fc_b"] = fc_b.reshape(1, output_size)
    return params


# --------------------------- pure-JAX reference -----------------------------

def _lstm_dir_ref(x_tbd, w_ih_t, w_hh_t, bias):
    H = w_hh_t.shape[0]
    B = x_tbd.shape[1]

    def step(carry, x_t):
        h, c = carry
        gates = x_t @ w_ih_t + h @ w_hh_t + bias
        i = jax.nn.sigmoid(gates[:, :H])
        f = jax.nn.sigmoid(gates[:, H:2 * H])
        g = jnp.tanh(gates[:, 2 * H:3 * H])
        o = jax.nn.sigmoid(gates[:, 3 * H:])
        c = f * c + i * g
        h = o * jnp.tanh(c)
        return (h, c), h

    init = (jnp.zeros((B, H), jnp.float32), jnp.zeros((B, H), jnp.float32))
    _, hs = jax.lax.scan(step, init, x_tbd)
    return hs


def reference_forward(params, x):
    H = params["lstm"][0]["w_hh_f"].shape[0]
    h = x.astype(jnp.float32)
    for layer in params["lstm"]:
        x_tbd = jnp.transpose(h, (1, 0, 2))
        w_ih = layer["w_ih"]
        b = layer["b"]
        fwd = _lstm_dir_ref(x_tbd, w_ih[:, :4 * H], layer["w_hh_f"], b[:, :4 * H])
        bwd = _lstm_dir_ref(x_tbd[::-1], w_ih[:, 4 * H:], layer["w_hh_b"],
                            b[:, 4 * H:])[::-1]
        h = jnp.transpose(jnp.concatenate([fwd, bwd], axis=-1), (1, 0, 2))
    return h[:, -1, :] @ params["fc_w_t"] + params["fc_b"]


# --------------------------------- main -------------------------------------

if __name__ == "__main__":
    B, T = 2, 8
    input_size, hidden_size, num_layers, output_size = 1, 32, 2, 1

    key = jax.random.PRNGKey(0)
    kp, kx = jax.random.split(key)
    params = init_params(kp, input_size=input_size, hidden_size=hidden_size,
                         num_layers=num_layers, output_size=output_size)
    x = jax.random.normal(kx, (B, T, input_size), dtype=jnp.float32)

    ref = reference_forward(params, x)

    # Strict check: exact-f32 MXU operands must match the pure-JAX reference.
    out_f32 = jax.block_until_ready(
        bilstm_forward(params, x, mxu_dtype=jnp.float32))
    assert out_f32.shape == (B, output_size), out_f32.shape
    assert jnp.allclose(out_f32, ref, atol=2e-3, rtol=2e-3), (out_f32, ref)

    # Perf path (v6e/v7x review item): bf16 MXU operands, f32 accumulation /
    # cell state / gate math.  Looser tolerance covers bf16 operand rounding.
    out_bf16 = jax.block_until_ready(
        bilstm_forward(params, x, mxu_dtype=jnp.bfloat16))
    assert out_bf16.shape == (B, output_size), out_bf16.shape
    assert jnp.allclose(out_bf16, ref, atol=2e-2, rtol=2e-2), (out_bf16, ref)

    print("KERNEL_OK")
</pallas_src>

<mosaic_0001>
module attributes {stable_mosaic.version = 11 : i64} {
  func.func @kernel(%arg0: memref<64x1xf32, #tpu.memory_space<vmem>>, %arg1: memref<1x256xf32, #tpu.memory_space<vmem>>, %arg2: memref<32x256xf32, #tpu.memory_space<vmem>>, %arg3: memref<1x256xf32, #tpu.memory_space<vmem>>, %arg4: memref<64x256xf32, #tpu.memory_space<vmem>>, %arg5: memref<32x256xf32, #tpu.memory_space<vmem>>, %arg6: memref<1x256xf32, #tpu.memory_space<vmem>>, %arg7: memref<64x1xf32, #tpu.memory_space<vmem>>, %arg8: memref<1x1xf32, #tpu.memory_space<vmem>>, %arg9: memref<8x1xf32, #tpu.memory_space<vmem>>, %arg10: memref<8x8x128xf32, #tpu.memory_space<vmem>>, %arg11: memref<8x8x128xf32, #tpu.memory_space<vmem>>, %arg12: memref<8x8x32xf32, #tpu.memory_space<vmem>>, %arg13: memref<8x8x32xf32, #tpu.memory_space<vmem>>) attributes {dimension_semantics = [], scalar_prefetch = 0 : i64, scratch_operands = 4 : i64, tpu.core_type = #tpu.core_type<tc>} {
    %0 = tpu.iota {dimensions = array<i32: 0>} : vector<16x128xi32>
    %c8_i32 = arith.constant 8 : i32
    %1 = vector.broadcast %c8_i32 : i32 to vector<16x128xi32>
    %2 = arith.cmpi slt, %0, %1 : vector<16x128xi32>
    %c0 = arith.constant 0 : index
    %c0_0 = arith.constant 0 : index
    %3 = vector.load %arg1[%c0, %c0_0] : memref<1x256xf32, #tpu.memory_space<vmem>>, vector<1x256xf32>
    %c0_1 = arith.constant 0 : index
    %c0_2 = arith.constant 0 : index
    %4 = vector.load %arg3[%c0_1, %c0_2] : memref<1x256xf32, #tpu.memory_space<vmem>>, vector<1x256xf32>
    %c0_3 = arith.constant 0 : index
    %c0_4 = arith.constant 0 : index
    %5 = vector.load %arg0[%c0_3, %c0_4] : memref<64x1xf32, #tpu.memory_space<vmem>>, vector<64x1xf32>
    %6 = vector.broadcast %5 : vector<64x1xf32> to vector<64x256xf32>
    %7 = vector.broadcast %3 : vector<1x256xf32> to vector<64x256xf32>
    %8 = arith.mulf %6, %7 : vector<64x256xf32>
    %9 = vector.broadcast %4 : vector<1x256xf32> to vector<64x256xf32>
    %10 = arith.addf %8, %9 : vector<64x256xf32>
    %11 = vector.extract_strided_slice %10 {offsets = [0, 0], sizes = [64, 128], strides = [1, 1]} : vector<64x256xf32> to vector<64x128xf32>
    %12 = vector.shape_cast %11 : vector<64x128xf32> to vector<8x8x128xf32>
    %c0_5 = arith.constant 0 : index
    %c0_6 = arith.constant 0 : index
    %c0_7 = arith.constant 0 : index
    %13 = vector.load %arg10[%c0_5, %c0_6, %c0_7] : memref<8x8x128xf32, #tpu.memory_space<vmem>>, vector<8x8x128xf32>
    tpu.vector_store %arg10[%c0_5, %c0_6, %c0_7], %12 {strides = array<i32>} : memref<8x8x128xf32, #tpu.memory_space<vmem>>, vector<8x8x128xf32>,
    %14 = vector.extract_strided_slice %10 {offsets = [0, 128], sizes = [64, 128], strides = [1, 1]} : vector<64x256xf32> to vector<64x128xf32>
    %15 = vector.shape_cast %14 : vector<64x128xf32> to vector<8x8x128xf32>
    %c0_8 = arith.constant 0 : index
    %c0_9 = arith.constant 0 : index
    %c0_10 = arith.constant 0 : index
    %16 = vector.load %arg11[%c0_8, %c0_9, %c0_10] : memref<8x8x128xf32, #tpu.memory_space<vmem>>, vector<8x8x128xf32>
    tpu.vector_store %arg11[%c0_8, %c0_9, %c0_10], %15 {strides = array<i32>} : memref<8x8x128xf32, #tpu.memory_space<vmem>>, vector<8x8x128xf32>,
    %c0_11 = arith.constant 0 : index
    %c0_12 = arith.constant 0 : index
    %17 = vector.load %arg2[%c0_11, %c0_12] : memref<32x256xf32, #tpu.memory_space<vmem>>, vector<32x256xf32>
    %cst = arith.constant 0.000000e+00 : f32
    %18 = vector.broadcast %cst : f32 to vector<16x32xf32>
    %cst_13 = arith.constant 0.000000e+00 : f32
    %19 = vector.broadcast %cst_13 : f32 to vector<16x32xf32>
    %c0_14 = arith.constant 0 : index
    %c0_15 = arith.constant 0 : index
    %c0_16 = arith.constant 0 : index
    %20 = vector.load %arg10[%c0_14, %c0_15, %c0_16] : memref<8x8x128xf32, #tpu.memory_space<vmem>>, vector<1x8x128xf32>
    %21 = vector.shape_cast %20 : vector<1x8x128xf32> to vector<8x128xf32>
    %c7 = arith.constant 7 : index
    %c0_17 = arith.constant 0 : index
    %c0_18 = arith.constant 0 : index
    %22 = vector.load %arg11[%c7, %c0_17, %c0_18] : memref<8x8x128xf32, #tpu.memory_space<vmem>>, vector<1x8x128xf32>
    %23 = vector.shape_cast %22 : vector<1x8x128xf32> to vector<8x128xf32>
    %24 = tpu.concatenate %21, %23 in 0 : vector<8x128xf32>, vector<8x128xf32> -> vector<16x128xf32>
    %cst_19 = arith.constant dense<0.000000e+00> : vector<16x256xf32>
    %25 = tpu.matmul %18, %17, %cst_19 {dimension_numbers = #tpu.dot_dimension_numbers<[1], [0], [0], [1], [0, 0, 1, 1], [], []>} : vector<16x32xf32>, vector<32x256xf32>, vector<16x256xf32> -> vector<16x256xf32>
    %26 = vector.extract_strided_slice %25 {offsets = [0, 0], sizes = [16, 128], strides = [1, 1]} : vector<16x256xf32> to vector<16x128xf32>
    %27 = vector.extract_strided_slice %25 {offsets = [0, 128], sizes = [16, 128], strides = [1, 1]} : vector<16x256xf32> to vector<16x128xf32>
    %28 = arith.select %2, %26, %27 : vector<16x128xi1>, vector<16x128xf32>
    %29 = arith.addf %24, %28 : vector<16x128xf32>
    %30 = arith.negf %29 : vector<16x128xf32>
    %31 = math.exp %30 : vector<16x128xf32>
    %cst_20 = arith.constant 1.000000e+00 : f32
    %32 = vector.broadcast %cst_20 : f32 to vector<16x128xf32>
    %33 = arith.addf %32, %31 : vector<16x128xf32>
    %34 = arith.divf %32, %33 : vector<16x128xf32>
    %35 = vector.extract_strided_slice %34 {offsets = [0, 0], sizes = [16, 32], strides = [1, 1]} : vector<16x128xf32> to vector<16x32xf32>
    %36 = vector.extract_strided_slice %34 {offsets = [0, 32], sizes = [16, 32], strides = [1, 1]} : vector<16x128xf32> to vector<16x32xf32>
    %37 = vector.extract_strided_slice %34 {offsets = [0, 96], sizes = [16, 32], strides = [1, 1]} : vector<16x128xf32> to vector<16x32xf32>
    %c64_i32 = arith.constant 64 : i32
    %38 = tpu.dynamic_rotate %34 by %c64_i32 dim 1 : vector<16x128xf32>, i32 -> vector<16x128xf32>
    %39 = vector.extract_strided_slice %38 {offsets = [0, 0], sizes = [16, 32], strides = [1, 1]} : vector<16x128xf32> to vector<16x32xf32>
    %40 = arith.mulf %36, %19 : vector<16x32xf32>
    %41 = arith.addf %39, %39 : vector<16x32xf32>
    %cst_21 = arith.constant 1.000000e+00 : f32
    %42 = vector.broadcast %cst_21 : f32 to vector<16x32xf32>
    %43 = arith.subf %41, %42 : vector<16x32xf32>
    %44 = arith.mulf %35, %43 : vector<16x32xf32>
    %45 = arith.addf %40, %44 : vector<16x32xf32>
    %46 = arith.addf %45, %45 : vector<16x32xf32>
    %47 = arith.negf %46 : vector<16x32xf32>
    %48 = math.exp %47 : vector<16x32xf32>
    %cst_22 = arith.constant 1.000000e+00 : f32
    %49 = vector.broadcast %cst_22 : f32 to vector<16x32xf32>
    %50 = arith.addf %49, %48 : vector<16x32xf32>
    %51 = arith.divf %49, %50 : vector<16x32xf32>
    %52 = arith.addf %51, %51 : vector<16x32xf32>
    %cst_23 = arith.constant 1.000000e+00 : f32
    %53 = vector.broadcast %cst_23 : f32 to vector<16x32xf32>
    %54 = arith.subf %52, %53 : vector<16x32xf32>
    %55 = arith.mulf %37, %54 : vector<16x32xf32>
    %56 = vector.extract_strided_slice %55 {offsets = [0, 0], sizes = [8, 32], strides = [1, 1]} : vector<16x32xf32> to vector<8x32xf32>
    %c0_24 = arith.constant 0 : index
    %c0_25 = arith.constant 0 : index
    %c0_26 = arith.constant 0 : index
    %57 = vector.load %arg12[%c0_24, %c0_25, %c0_26] : memref<8x8x32xf32, #tpu.memory_space<vmem>>, vector<1x8x32xf32>
    %58 = vector.shape_cast %57 : vector<1x8x32xf32> to vector<8x32xf32>
    %59 = vector.shape_cast %56 : vector<8x32xf32> to vector<1x8x32xf32>
    tpu.vector_store %arg12[%c0_24, %c0_25, %c0_26], %59 {strides = array<i32>} : memref<8x8x32xf32, #tpu.memory_space<vmem>>, vector<1x8x32xf32>,
    %60 = vector.extract_strided_slice %55 {offsets = [8, 0], sizes = [8, 32], strides = [1, 1]} : vector<16x32xf32> to vector<8x32xf32>
    %c7_27 = arith.constant 7 : index
    %c0_28 = arith.constant 0 : index
    %c0_29 = arith.constant 0 : index
    %61 = vector.load %arg13[%c7_27, %c0_28, %c0_29] : memref<8x8x32xf32, #tpu.memory_space<vmem>>, vector<1x8x32xf32>
    %62 = vector.shape_cast %61 : vector<1x8x32xf32> to vector<8x32xf32>
    %63 = vector.shape_cast %60 : vector<8x32xf32> to vector<1x8x32xf32>
    tpu.vector_store %arg13[%c7_27, %c0_28, %c0_29], %63 {strides = array<i32>} : memref<8x8x32xf32, #tpu.memory_space<vmem>>, vector<1x8x32xf32>,
    %c1 = arith.constant 1 : index
    %c0_30 = arith.constant 0 : index
    %c0_31 = arith.constant 0 : index
    %64 = vector.load %arg10[%c1, %c0_30, %c0_31] : memref<8x8x128xf32, #tpu.memory_space<vmem>>, vector<1x8x128xf32>
    %65 = vector.shape_cast %64 : vector<1x8x128xf32> to vector<8x128xf32>
    %c6 = arith.constant 6 : index
    %c0_32 = arith.constant 0 : index
    %c0_33 = arith.constant 0 : index
    %66 = vector.load %arg11[%c6, %c0_32, %c0_33] : memref<8x8x128xf32, #tpu.memory_space<vmem>>, vector<1x8x128xf32>
    %67 = vector.shape_cast %66 : vector<1x8x128xf32> to vector<8x128xf32>
    %68 = tpu.concatenate %65, %67 in 0 : vector<8x128xf32>, vector<8x128xf32> -> vector<16x128xf32>
    %cst_34 = arith.constant dense<0.000000e+00> : vector<16x256xf32>
    %69 = tpu.matmul %55, %17, %cst_34 {dimension_numbers = #tpu.dot_dimension_numbers<[1], [0], [0], [1], [0, 0, 1, 1], [], []>} : vector<16x32xf32>, vector<32x256xf32>, vector<16x256xf32> -> vector<16x256xf32>
    %70 = vector.extract_strided_slice %69 {offsets = [0, 0], sizes = [16, 128], strides = [1, 1]} : vector<16x256xf32> to vector<16x128xf32>
    %71 = vector.extract_strided_slice %69 {offsets = [0, 128], sizes = [16, 128], strides = [1, 1]} : vector<16x256xf32> to vector<16x128xf32>
    %72 = arith.select %2, %70, %71 : vector<16x128xi1>, vector<16x128xf32>
    %73 = arith.addf %68, %72 : vector<16x128xf32>
    %74 = arith.negf %73 : vector<16x128xf32>
    %75 = math.exp %74 : vector<16x128xf32>
    %cst_35 = arith.constant 1.000000e+00 : f32
    %76 = vector.broadcast %cst_35 : f32 to vector<16x128xf32>
    %77 = arith.addf %76, %75 : vector<16x128xf32>
    %78 = arith.divf %76, %77 : vector<16x128xf32>
    %79 = vector.extract_strided_slice %78 {offsets = [0, 0], sizes = [16, 32], strides = [1, 1]} : vector<16x128xf32> to vector<16x32xf32>
    %80 = vector.extract_strided_slice %78 {offsets = [0, 32], sizes = [16, 32], strides = [1, 1]} : vector<16x128xf32> to vector<16x32xf32>
    %81 = vector.extract_strided_slice %78 {offsets = [0, 96], sizes = [16, 32], strides = [1, 1]} : vector<16x128xf32> to vector<16x32xf32>
    %c64_i32_36 = arith.constant 64 : i32
    %82 = tpu.dynamic_rotate %78 by %c64_i32_36 dim 1 : vector<16x128xf32>, i32 -> vector<16x128xf32>
    %83 = vector.extract_strided_slice %82 {offsets = [0, 0], sizes = [16, 32], strides = [1, 1]} : vector<16x128xf32> to vector<16x32xf32>
    %84 = arith.mulf %80, %45 : vector<16x32xf32>
    %85 = arith.addf %83, %83 : vector<16x32xf32>
    %cst_37 = arith.constant 1.000000e+00 : f32
    %86 = vector.broadcast %cst_37 : f32 to vector<16x32xf32>
    %87 = arith.subf %85, %86 : vector<16x32xf32>
    %88 = arith.mulf %79, %87 : vector<16x32xf32>
    %89 = arith.addf %84, %88 : vector<16x32xf32>
    %90 = arith.addf %89, %89 : vector<16x32xf32>
    %91 = arith.negf %90 : vector<16x32xf32>
    %92 = math.exp %91 : vector<16x32xf32>
    %cst_38 = arith.constant 1.000000e+00 : f32
    %93 = vector.broadcast %cst_38 : f32 to vector<16x32xf32>
    %94 = arith.addf %93, %92 : vector<16x32xf32>
    %95 = arith.divf %93, %94 : vector<16x32xf32>
    %96 = arith.addf %95, %95 : vector<16x32xf32>
    %cst_39 = arith.constant 1.000000e+00 : f32
    %97 = vector.broadcast %cst_39 : f32 to vector<16x32xf32>
    %98 = arith.subf %96, %97 : vector<16x32xf32>
    %99 = arith.mulf %81, %98 : vector<16x32xf32>
    %100 = vector.extract_strided_slice %99 {offsets = [0, 0], sizes = [8, 32], strides = [1, 1]} : vector<16x32xf32> to vector<8x32xf32>
    %c1_40 = arith.constant 1 : index
    %c0_41 = arith.constant 0 : index
    %c0_42 = arith.constant 0 : index
    %101 = vector.load %arg12[%c1_40, %c0_41, %c0_42] : memref<8x8x32xf32, #tpu.memory_space<vmem>>, vector<1x8x32xf32>
    %102 = vector.shape_cast %101 : vector<1x8x32xf32> to vector<8x32xf32>
    %103 = vector.shape_cast %100 : vector<8x32xf32> to vector<1x8x32xf32>
    tpu.vector_store %arg12[%c1_40, %c0_41, %c0_42], %103 {strides = array<i32>} : memref<8x8x32xf32, #tpu.memory_space<vmem>>, vector<1x8x32xf32>,
    %104 = vector.extract_strided_slice %99 {offsets = [8, 0], sizes = [8, 32], strides = [1, 1]} : vector<16x32xf32> to vector<8x32xf32>
    %c6_43 = arith.constant 6 : index
    %c0_44 = arith.constant 0 : index
    %c0_45 = arith.constant 0 : index
    %105 = vector.load %arg13[%c6_43, %c0_44, %c0_45] : memref<8x8x32xf32, #tpu.memory_space<vmem>>, vector<1x8x32xf32>
    %106 = vector.shape_cast %105 : vector<1x8x32xf32> to vector<8x32xf32>
    %107 = vector.shape_cast %104 : vector<8x32xf32> to vector<1x8x32xf32>
    tpu.vector_store %arg13[%c6_43, %c0_44, %c0_45], %107 {strides = array<i32>} : memref<8x8x32xf32, #tpu.memory_space<vmem>>, vector<1x8x32xf32>,
    %c2 = arith.constant 2 : index
    %c0_46 = arith.constant 0 : index
    %c0_47 = arith.constant 0 : index
    %108 = vector.load %arg10[%c2, %c0_46, %c0_47] : memref<8x8x128xf32, #tpu.memory_space<vmem>>, vector<1x8x128xf32>
    %109 = vector.shape_cast %108 : vector<1x8x128xf32> to vector<8x128xf32>
    %c5 = arith.constant 5 : index
    %c0_48 = arith.constant 0 : index
    %c0_49 = arith.constant 0 : index
    %110 = vector.load %arg11[%c5, %c0_48, %c0_49] : memref<8x8x128xf32, #tpu.memory_space<vmem>>, vector<1x8x128xf32>
    %111 = vector.shape_cast %110 : vector<1x8x128xf32> to vector<8x128xf32>
    %112 = tpu.concatenate %109, %111 in 0 : vector<8x128xf32>, vector<8x128xf32> -> vector<16x128xf32>
    %cst_50 = arith.constant dense<0.000000e+00> : vector<16x256xf32>
    %113 = tpu.matmul %99, %17, %cst_50 {dimension_numbers = #tpu.dot_dimension_numbers<[1], [0], [0], [1], [0, 0, 1, 1], [], []>} : vector<16x32xf32>, vector<32x256xf32>, vector<16x256xf32> -> vector<16x256xf32>
    %114 = vector.extract_strided_slice %113 {offsets = [0, 0], sizes = [16, 128], strides = [1, 1]} : vector<16x256xf32> to vector<16x128xf32>
    %115 = vector.extract_strided_slice %113 {offsets = [0, 128], sizes = [16, 128], strides = [1, 1]} : vector<16x256xf32> to vector<16x128xf32>
    %116 = arith.select %2, %114, %115 : vector<16x128xi1>, vector<16x128xf32>
    %117 = arith.addf %112, %116 : vector<16x128xf32>
    %118 = arith.negf %117 : vector<16x128xf32>
    %119 = math.exp %118 : vector<16x128xf32>
    %cst_51 = arith.constant 1.000000e+00 : f32
    %120 = vector.broadcast %cst_51 : f32 to vector<16x128xf32>
    %121 = arith.addf %120, %119 : vector<16x128xf32>
    %122 = arith.divf %120, %121 : vector<16x128xf32>
    %123 = vector.extract_strided_slice %122 {offsets = [0, 0], sizes = [16, 32], strides = [1, 1]} : vector<16x128xf32> to vector<16x32xf32>
    %124 = vector.extract_strided_slice %122 {offsets = [0, 32], sizes = [16, 32], strides = [1, 1]} : vector<16x128xf32> to vector<16x32xf32>
    %125 = vector.extract_strided_slice %122 {offsets = [0, 96], sizes = [16, 32], strides = [1, 1]} : vector<16x128xf32> to vector<16x32xf32>
    %c64_i32_52 = arith.constant 64 : i32
    %126 = tpu.dynamic_rotate %122 by %c64_i32_52 dim 1 : vector<16x128xf32>, i32 -> vector<16x128xf32>
    %127 = vector.extract_strided_slice %126 {offsets = [0, 0], sizes = [16, 32], strides = [1, 1]} : vector<16x128xf32> to vector<16x32xf32>
    %128 = arith.mulf %124, %89 : vector<16x32xf32>
    %129 = arith.addf %127, %127 : vector<16x32xf32>
    %cst_53 = arith.constant 1.000000e+00 : f32
    %130 = vector.broadcast %cst_53 : f32 to vector<16x32xf32>
    %131 = arith.subf %129, %130 : vector<16x32xf32>
    %132 = arith.mulf %123, %131 : vector<16x32xf32>
    %133 = arith.addf %128, %132 : vector<16x32xf32>
    %134 = arith.addf %133, %133 : vector<16x32xf32>
    %135 = arith.negf %134 : vector<16x32xf32>
    %136 = math.exp %135 : vector<16x32xf32>
    %cst_54 = arith.constant 1.000000e+00 : f32
    %137 = vector.broadcast %cst_54 : f32 to vector<16x32xf32>
    %138 = arith.addf %137, %136 : vector<16x32xf32>
    %139 = arith.divf %137, %138 : vector<16x32xf32>
    %140 = arith.addf %139, %139 : vector<16x32xf32>
    %cst_55 = arith.constant 1.000000e+00 : f32
    %141 = vector.broadcast %cst_55 : f32 to vector<16x32xf32>
    %142 = arith.subf %140, %141 : vector<16x32xf32>
    %143 = arith.mulf %125, %142 : vector<16x32xf32>
    %144 = vector.extract_strided_slice %143 {offsets = [0, 0], sizes = [8, 32], strides = [1, 1]} : vector<16x32xf32> to vector<8x32xf32>
    %c2_56 = arith.constant 2 : index
    %c0_57 = arith.constant 0 : index
    %c0_58 = arith.constant 0 : index
    %145 = vector.load %arg12[%c2_56, %c0_57, %c0_58] : memref<8x8x32xf32, #tpu.memory_space<vmem>>, vector<1x8x32xf32>
    %146 = vector.shape_cast %145 : vector<1x8x32xf32> to vector<8x32xf32>
    %147 = vector.shape_cast %144 : vector<8x32xf32> to vector<1x8x32xf32>
    tpu.vector_store %arg12[%c2_56, %c0_57, %c0_58], %147 {strides = array<i32>} : memref<8x8x32xf32, #tpu.memory_space<vmem>>, vector<1x8x32xf32>,
    %148 = vector.extract_strided_slice %143 {offsets = [8, 0], sizes = [8, 32], strides = [1, 1]} : vector<16x32xf32> to vector<8x32xf32>
    %c5_59 = arith.constant 5 : index
    %c0_60 = arith.constant 0 : index
    %c0_61 = arith.constant 0 : index
    %149 = vector.load %arg13[%c5_59, %c0_60, %c0_61] : memref<8x8x32xf32, #tpu.memory_space<vmem>>, vector<1x8x32xf32>
    %150 = vector.shape_cast %149 : vector<1x8x32xf32> to vector<8x32xf32>
    %151 = vector.shape_cast %148 : vector<8x32xf32> to vector<1x8x32xf32>
    tpu.vector_store %arg13[%c5_59, %c0_60, %c0_61], %151 {strides = array<i32>} : memref<8x8x32xf32, #tpu.memory_space<vmem>>, vector<1x8x32xf32>,
    %c3 = arith.constant 3 : index
    %c0_62 = arith.constant 0 : index
    %c0_63 = arith.constant 0 : index
    %152 = vector.load %arg10[%c3, %c0_62, %c0_63] : memref<8x8x128xf32, #tpu.memory_space<vmem>>, vector<1x8x128xf32>
    %153 = vector.shape_cast %152 : vector<1x8x128xf32> to vector<8x128xf32>
    %c4 = arith.constant 4 : index
    %c0_64 = arith.constant 0 : index
    %c0_65 = arith.constant 0 : index
    %154 = vector.load %arg11[%c4, %c0_64, %c0_65] : memref<8x8x128xf32, #tpu.memory_space<vmem>>, vector<1x8x128xf32>
    %155 = vector.shape_cast %154 : vector<1x8x128xf32> to vector<8x128xf32>
    %156 = tpu.concatenate %153, %155 in 0 : vector<8x128xf32>, vector<8x128xf32> -> vector<16x128xf32>
    %cst_66 = arith.constant dense<0.000000e+00> : vector<16x256xf32>
    %157 = tpu.matmul %143, %17, %cst_66 {dimension_numbers = #tpu.dot_dimension_numbers<[1], [0], [0], [1], [0, 0, 1, 1], [], []>} : vector<16x32xf32>, vector<32x256xf32>, vector<16x256xf32> -> vector<16x256xf32>
    %158 = vector.extract_strided_slice %157 {offsets = [0, 0], sizes = [16, 128], strides = [1, 1]} : vector<16x256xf32> to vector<16x128xf32>
    %159 = vector.extract_strided_slice %157 {offsets = [0, 128], sizes = [16, 128], strides = [1, 1]} : vector<16x256xf32> to vector<16x128xf32>
    %160 = arith.select %2, %158, %159 : vector<16x128xi1>, vector<16x128xf32>
    %161 = arith.addf %156, %160 : vector<16x128xf32>
    %162 = arith.negf %161 : vector<16x128xf32>
    %163 = math.exp %162 : vector<16x128xf32>
    %cst_67 = arith.constant 1.000000e+00 : f32
    %164 = vector.broadcast %cst_67 : f32 to vector<16x128xf32>
    %165 = arith.addf %164, %163 : vector<16x128xf32>
    %166 = arith.divf %164, %165 : vector<16x128xf32>
    %167 = vector.extract_strided_slice %166 {offsets = [0, 0], sizes = [16, 32], strides = [1, 1]} : vector<16x128xf32> to vector<16x32xf32>
    %168 = vector.extract_strided_slice %166 {offsets = [0, 32], sizes = [16, 32], strides = [1, 1]} : vector<16x128xf32> to vector<16x32xf32>
    %169 = vector.extract_strided_slice %166 {offsets = [0, 96], sizes = [16, 32], strides = [1, 1]} : vector<16x128xf32> to vector<16x32xf32>
    %c64_i32_68 = arith.constant 64 : i32
    %170 = tpu.dynamic_rotate %166 by %c64_i32_68 dim 1 : vector<16x128xf32>, i32 -> vector<16x128xf32>
    %171 = vector.extract_strided_slice %170 {offsets = [0, 0], sizes = [16, 32], strides = [1, 1]} : vector<16x128xf32> to vector<16x32xf32>
    %172 = arith.mulf %168, %133 : vector<16x32xf32>
    %173 = arith.addf %171, %171 : vector<16x32xf32>
    %cst_69 = arith.constant 1.000000e+00 : f32
    %174 = vector.broadcast %cst_69 : f32 to vector<16x32xf32>
    %175 = arith.subf %173, %174 : vector<16x32xf32>
    %176 = arith.mulf %167, %175 : vector<16x32xf32>
    %177 = arith.addf %172, %176 : vector<16x32xf32>
    %178 = arith.addf %177, %177 : vector<16x32xf32>
    %179 = arith.negf %178 : vector<16x32xf32>
    %180 = math.exp %179 : vector<16x32xf32>
    %cst_70 = arith.constant 1.000000e+00 : f32
    %181 = vector.broadcast %cst_70 : f32 to vector<16x32xf32>
    %182 = arith.addf %181, %180 : vector<16x32xf32>
    %183 = arith.divf %181, %182 : vector<16x32xf32>
    %184 = arith.addf %183, %183 : vector<16x32xf32>
    %cst_71 = arith.constant 1.000000e+00 : f32
    %185 = vector.broadcast %cst_71 : f32 to vector<16x32xf32>
    %186 = arith.subf %184, %185 : vector<16x32xf32>
    %187 = arith.mulf %169, %186 : vector<16x32xf32>
    %188 = vector.extract_strided_slice %187 {offsets = [0, 0], sizes = [8, 32], strides = [1, 1]} : vector<16x32xf32> to vector<8x32xf32>
    %c3_72 = arith.constant 3 : index
    %c0_73 = arith.constant 0 : index
    %c0_74 = arith.constant 0 : index
    %189 = vector.load %arg12[%c3_72, %c0_73, %c0_74] : memref<8x8x32xf32, #tpu.memory_space<vmem>>, vector<1x8x32xf32>
    %190 = vector.shape_cast %189 : vector<1x8x32xf32> to vector<8x32xf32>
    %191 = vector.shape_cast %188 : vector<8x32xf32> to vector<1x8x32xf32>
    tpu.vector_store %arg12[%c3_72, %c0_73, %c0_74], %191 {strides = array<i32>} : memref<8x8x32xf32, #tpu.memory_space<vmem>>, vector<1x8x32xf32>,
    %192 = vector.extract_strided_slice %187 {offsets = [8, 0], sizes = [8, 32], strides = [1, 1]} : vector<16x32xf32> to vector<8x32xf32>
    %c4_75 = arith.constant 4 : index
    %c0_76 = arith.constant 0 : index
    %c0_77 = arith.constant 0 : index
    %193 = vector.load %arg13[%c4_75, %c0_76, %c0_77] : memref<8x8x32xf32, #tpu.memory_space<vmem>>, vector<1x8x32xf32>
    %194 = vector.shape_cast %193 : vector<1x8x32xf32> to vector<8x32xf32>
    %195 = vector.shape_cast %192 : vector<8x32xf32> to vector<1x8x32xf32>
    tpu.vector_store %arg13[%c4_75, %c0_76, %c0_77], %195 {strides = array<i32>} : memref<8x8x32xf32, #tpu.memory_space<vmem>>, vector<1x8x32xf32>,
    %c4_78 = arith.constant 4 : index
    %c0_79 = arith.constant 0 : index
    %c0_80 = arith.constant 0 : index
    %196 = vector.load %arg10[%c4_78, %c0_79, %c0_80] : memref<8x8x128xf32, #tpu.memory_space<vmem>>, vector<1x8x128xf32>
    %197 = vector.shape_cast %196 : vector<1x8x128xf32> to vector<8x128xf32>
    %c3_81 = arith.constant 3 : index
    %c0_82 = arith.constant 0 : index
    %c0_83 = arith.constant 0 : index
    %198 = vector.load %arg11[%c3_81, %c0_82, %c0_83] : memref<8x8x128xf32, #tpu.memory_space<vmem>>, vector<1x8x128xf32>
    %199 = vector.shape_cast %198 : vector<1x8x128xf32> to vector<8x128xf32>
    %200 = tpu.concatenate %197, %199 in 0 : vector<8x128xf32>, vector<8x128xf32> -> vector<16x128xf32>
    %cst_84 = arith.constant dense<0.000000e+00> : vector<16x256xf32>
    %201 = tpu.matmul %187, %17, %cst_84 {dimension_numbers = #tpu.dot_dimension_numbers<[1], [0], [0], [1], [0, 0, 1, 1], [], []>} : vector<16x32xf32>, vector<32x256xf32>, vector<16x256xf32> -> vector<16x256xf32>
    %202 = vector.extract_strided_slice %201 {offsets = [0, 0], sizes = [16, 128], strides = [1, 1]} : vector<16x256xf32> to vector<16x128xf32>
    %203 = vector.extract_strided_slice %201 {offsets = [0, 128], sizes = [16, 128], strides = [1, 1]} : vector<16x256xf32> to vector<16x128xf32>
    %204 = arith.select %2, %202, %203 : vector<16x128xi1>, vector<16x128xf32>
    %205 = arith.addf %200, %204 : vector<16x128xf32>
    %206 = arith.negf %205 : vector<16x128xf32>
    %207 = math.exp %206 : vector<16x128xf32>
    %cst_85 = arith.constant 1.000000e+00 : f32
    %208 = vector.broadcast %cst_85 : f32 to vector<16x128xf32>
    %209 = arith.addf %208, %207 : vector<16x128xf32>
    %210 = arith.divf %208, %209 : vector<16x128xf32>
    %211 = vector.extract_strided_slice %210 {offsets = [0, 0], sizes = [16, 32], strides = [1, 1]} : vector<16x128xf32> to vector<16x32xf32>
    %212 = vector.extract_strided_slice %210 {offsets = [0, 32], sizes = [16, 32], strides = [1, 1]} : vector<16x128xf32> to vector<16x32xf32>
    %213 = vector.extract_strided_slice %210 {offsets = [0, 96], sizes = [16, 32], strides = [1, 1]} : vector<16x128xf32> to vector<16x32xf32>
    %c64_i32_86 = arith.constant 64 : i32
    %214 = tpu.dynamic_rotate %210 by %c64_i32_86 dim 1 : vector<16x128xf32>, i32 -> vector<16x128xf32>
    %215 = vector.extract_strided_slice %214 {offsets = [0, 0], sizes = [16, 32], strides = [1, 1]} : vector<16x128xf32> to vector<16x32xf32>
    %216 = arith.mulf %212, %177 : vector<16x32xf32>
    %217 = arith.addf %215, %215 : vector<16x32xf32>
    %cst_87 = arith.constant 1.000000e+00 : f32
    %218 = vector.broadcast %cst_87 : f32 to vector<16x32xf32>
    %219 = arith.subf %217, %218 : vector<16x32xf32>
    %220 = arith.mulf %211, %219 : vector<16x32xf32>
    %221 = arith.addf %216, %220 : vector<16x32xf32>
    %222 = arith.addf %221, %221 : vector<16x32xf32>
    %223 = arith.negf %222 : vector<16x32xf32>
    %224 = math.exp %223 : vector<16x32xf32>
    %cst_88 = arith.constant 1.000000e+00 : f32
    %225 = vector.broadcast %cst_88 : f32 to vector<16x32xf32>
    %226 = arith.addf %225, %224 : vector<16x32xf32>
    %227 = arith.divf %225, %226 : vector<16x32xf32>
    %228 = arith.addf %227, %227 : vector<16x32xf32>
    %cst_89 = arith.constant 1.000000e+00 : f32
    %229 = vector.broadcast %cst_89 : f32 to vector<16x32xf32>
    %230 = arith.subf %228, %229 : vector<16x32xf32>
    %231 = arith.mulf %213, %230 : vector<16x32xf32>
    %232 = vector.extract_strided_slice %231 {offsets = [0, 0], sizes = [8, 32], strides = [1, 1]} : vector<16x32xf32> to vector<8x32xf32>
    %c4_90 = arith.constant 4 : index
    %c0_91 = arith.constant 0 : index
    %c0_92 = arith.constant 0 : index
    %233 = vector.load %arg12[%c4_90, %c0_91, %c0_92] : memref<8x8x32xf32, #tpu.memory_space<vmem>>, vector<1x8x32xf32>
    %234 = vector.shape_cast %233 : vector<1x8x32xf32> to vector<8x32xf32>
    %235 = vector.shape_cast %232 : vector<8x32xf32> to vector<1x8x32xf32>
    tpu.vector_store %arg12[%c4_90, %c0_91, %c0_92], %235 {strides = array<i32>} : memref<8x8x32xf32, #tpu.memory_space<vmem>>, vector<1x8x32xf32>,
    %236 = vector.extract_strided_slice %231 {offsets = [8, 0], sizes = [8, 32], strides = [1, 1]} : vector<16x32xf32> to vector<8x32xf32>
    %c3_93 = arith.constant 3 : index
    %c0_94 = arith.constant 0 : index
    %c0_95 = arith.constant 0 : index
    %237 = vector.load %arg13[%c3_93, %c0_94, %c0_95] : memref<8x8x32xf32, #tpu.memory_space<vmem>>, vector<1x8x32xf32>
    %238 = vector.shape_cast %237 : vector<1x8x32xf32> to vector<8x32xf32>
    %239 = vector.shape_cast %236 : vector<8x32xf32> to vector<1x8x32xf32>
    tpu.vector_store %arg13[%c3_93, %c0_94, %c0_95], %239 {strides = array<i32>} : memref<8x8x32xf32, #tpu.memory_space<vmem>>, vector<1x8x32xf32>,
    %c5_96 = arith.constant 5 : index
    %c0_97 = arith.constant 0 : index
    %c0_98 = arith.constant 0 : index
    %240 = vector.load %arg10[%c5_96, %c0_97, %c0_98] : memref<8x8x128xf32, #tpu.memory_space<vmem>>, vector<1x8x128xf32>
    %241 = vector.shape_cast %240 : vector<1x8x128xf32> to vector<8x128xf32>
    %c2_99 = arith.constant 2 : index
    %c0_100 = arith.constant 0 : index
    %c0_101 = arith.constant 0 : index
    %242 = vector.load %arg11[%c2_99, %c0_100, %c0_101] : memref<8x8x128xf32, #tpu.memory_space<vmem>>, vector<1x8x128xf32>
    %243 = vector.shape_cast %242 : vector<1x8x128xf32> to vector<8x128xf32>
    %244 = tpu.concatenate %241, %243 in 0 : vector<8x128xf32>, vector<8x128xf32> -> vector<16x128xf32>
    %cst_102 = arith.constant dense<0.000000e+00> : vector<16x256xf32>
    %245 = tpu.matmul %231, %17, %cst_102 {dimension_numbers = #tpu.dot_dimension_numbers<[1], [0], [0], [1], [0, 0, 1, 1], [], []>} : vector<16x32xf32>, vector<32x256xf32>, vector<16x256xf32> -> vector<16x256xf32>
    %246 = vector.extract_strided_slice %245 {offsets = [0, 0], sizes = [16, 128], strides = [1, 1]} : vector<16x256xf32> to vector<16x128xf32>
    %247 = vector.extract_strided_slice %245 {offsets = [0, 128], sizes = [16, 128], strides = [1, 1]} : vector<16x256xf32> to vector<16x128xf32>
    %248 = arith.select %2, %246, %247 : vector<16x128xi1>, vector<16x128xf32>
    %249 = arith.addf %244, %248 : vector<16x128xf32>
    %250 = arith.negf %249 : vector<16x128xf32>
    %251 = math.exp %250 : vector<16x128xf32>
    %cst_103 = arith.constant 1.000000e+00 : f32
    %252 = vector.broadcast %cst_103 : f32 to vector<16x128xf32>
    %253 = arith.addf %252, %251 : vector<16x128xf32>
    %254 = arith.divf %252, %253 : vector<16x128xf32>
    %255 = vector.extract_strided_slice %254 {offsets = [0, 0], sizes = [16, 32], strides = [1, 1]} : vector<16x128xf32> to vector<16x32xf32>
    %256 = vector.extract_strided_slice %254 {offsets = [0, 32], sizes = [16, 32], strides = [1, 1]} : vector<16x128xf32> to vector<16x32xf32>
    %257 = vector.extract_strided_slice %254 {offsets = [0, 96], sizes = [16, 32], strides = [1, 1]} : vector<16x128xf32> to vector<16x32xf32>
    %c64_i32_104 = arith.constant 64 : i32
    %258 = tpu.dynamic_rotate %254 by %c64_i32_104 dim 1 : vector<16x128xf32>, i32 -> vector<16x128xf32>
    %259 = vector.extract_strided_slice %258 {offsets = [0, 0], sizes = [16, 32], strides = [1, 1]} : vector<16x128xf32> to vector<16x32xf32>
    %260 = arith.mulf %256, %221 : vector<16x32xf32>
    %261 = arith.addf %259, %259 : vector<16x32xf32>
    %cst_105 = arith.constant 1.000000e+00 : f32
    %262 = vector.broadcast %cst_105 : f32 to vector<16x32xf32>
    %263 = arith.subf %261, %262 : vector<16x32xf32>
    %264 = arith.mulf %255, %263 : vector<16x32xf32>
    %265 = arith.addf %260, %264 : vector<16x32xf32>
    %266 = arith.addf %265, %265 : vector<16x32xf32>
    %267 = arith.negf %266 : vector<16x32xf32>
    %268 = math.exp %267 : vector<16x32xf32>
    %cst_106 = arith.constant 1.000000e+00 : f32
    %269 = vector.broadcast %cst_106 : f32 to vector<16x32xf32>
    %270 = arith.addf %269, %268 : vector<16x32xf32>
    %271 = arith.divf %269, %270 : vector<16x32xf32>
    %272 = arith.addf %271, %271 : vector<16x32xf32>
    %cst_107 = arith.constant 1.000000e+00 : f32
    %273 = vector.broadcast %cst_107 : f32 to vector<16x32xf32>
    %274 = arith.subf %272, %273 : vector<16x32xf32>
    %275 = arith.mulf %257, %274 : vector<16x32xf32>
    %276 = vector.extract_strided_slice %275 {offsets = [0, 0], sizes = [8, 32], strides = [1, 1]} : vector<16x32xf32> to vector<8x32xf32>
    %c5_108 = arith.constant 5 : index
    %c0_109 = arith.constant 0 : index
    %c0_110 = arith.constant 0 : index
    %277 = vector.load %arg12[%c5_108, %c0_109, %c0_110] : memref<8x8x32xf32, #tpu.memory_space<vmem>>, vector<1x8x32xf32>
    %278 = vector.shape_cast %277 : vector<1x8x32xf32> to vector<8x32xf32>
    %279 = vector.shape_cast %276 : vector<8x32xf32> to vector<1x8x32xf32>
    tpu.vector_store %arg12[%c5_108, %c0_109, %c0_110], %279 {strides = array<i32>} : memref<8x8x32xf32, #tpu.memory_space<vmem>>, vector<1x8x32xf32>,
    %280 = vector.extract_strided_slice %275 {offsets = [8, 0], sizes = [8, 32], strides = [1, 1]} : vector<16x32xf32> to vector<8x32xf32>
    %c2_111 = arith.constant 2 : index
    %c0_112 = arith.constant 0 : index
    %c0_113 = arith.constant 0 : index
    %281 = vector.load %arg13[%c2_111, %c0_112, %c0_113] : memref<8x8x32xf32, #tpu.memory_space<vmem>>, vector<1x8x32xf32>
    %282 = vector.shape_cast %281 : vector<1x8x32xf32> to vector<8x32xf32>
    %283 = vector.shape_cast %280 : vector<8x32xf32> to vector<1x8x32xf32>
    tpu.vector_store %arg13[%c2_111, %c0_112, %c0_113], %283 {strides = array<i32>} : memref<8x8x32xf32, #tpu.memory_space<vmem>>, vector<1x8x32xf32>,
    %c6_114 = arith.constant 6 : index
    %c0_115 = arith.constant 0 : index
    %c0_116 = arith.constant 0 : index
    %284 = vector.load %arg10[%c6_114, %c0_115, %c0_116] : memref<8x8x128xf32, #tpu.memory_space<vmem>>, vector<1x8x128xf32>
    %285 = vector.shape_cast %284 : vector<1x8x128xf32> to vector<8x128xf32>
    %c1_117 = arith.constant 1 : index
    %c0_118 = arith.constant 0 : index
    %c0_119 = arith.constant 0 : index
    %286 = vector.load %arg11[%c1_117, %c0_118, %c0_119] : memref<8x8x128xf32, #tpu.memory_space<vmem>>, vector<1x8x128xf32>
    %287 = vector.shape_cast %286 : vector<1x8x128xf32> to vector<8x128xf32>
    %288 = tpu.concatenate %285, %287 in 0 : vector<8x128xf32>, vector<8x128xf32> -> vector<16x128xf32>
    %cst_120 = arith.constant dense<0.000000e+00> : vector<16x256xf32>
    %289 = tpu.matmul %275, %17, %cst_120 {dimension_numbers = #tpu.dot_dimension_numbers<[1], [0], [0], [1], [0, 0, 1, 1], [], []>} : vector<16x32xf32>, vector<32x256xf32>, vector<16x256xf32> -> vector<16x256xf32>
    %290 = vector.extract_strided_slice %289 {offsets = [0, 0], sizes = [16, 128], strides = [1, 1]} : vector<16x256xf32> to vector<16x128xf32>
    %291 = vector.extract_strided_slice %289 {offsets = [0, 128], sizes = [16, 128], strides = [1, 1]} : vector<16x256xf32> to vector<16x128xf32>
    %292 = arith.select %2, %290, %291 : vector<16x128xi1>, vector<16x128xf32>
    %293 = arith.addf %288, %292 : vector<16x128xf32>
    %294 = arith.negf %293 : vector<16x128xf32>
    %295 = math.exp %294 : vector<16x128xf32>
    %cst_121 = arith.constant 1.000000e+00 : f32
    %296 = vector.broadcast %cst_121 : f32 to vector<16x128xf32>
    %297 = arith.addf %296, %295 : vector<16x128xf32>
    %298 = arith.divf %296, %297 : vector<16x128xf32>
    %299 = vector.extract_strided_slice %298 {offsets = [0, 0], sizes = [16, 32], strides = [1, 1]} : vector<16x128xf32> to vector<16x32xf32>
    %300 = vector.extract_strided_slice %298 {offsets = [0, 32], sizes = [16, 32], strides = [1, 1]} : vector<16x128xf32> to vector<16x32xf32>
    %301 = vector.extract_strided_slice %298 {offsets = [0, 96], sizes = [16, 32], strides = [1, 1]} : vector<16x128xf32> to vector<16x32xf32>
    %c64_i32_122 = arith.constant 64 : i32
    %302 = tpu.dynamic_rotate %298 by %c64_i32_122 dim 1 : vector<16x128xf32>, i32 -> vector<16x128xf32>
    %303 = vector.extract_strided_slice %302 {offsets = [0, 0], sizes = [16, 32], strides = [1, 1]} : vector<16x128xf32> to vector<16x32xf32>
    %304 = arith.mulf %300, %265 : vector<16x32xf32>
    %305 = arith.addf %303, %303 : vector<16x32xf32>
    %cst_123 = arith.constant 1.000000e+00 : f32
    %306 = vector.broadcast %cst_123 : f32 to vector<16x32xf32>
    %307 = arith.subf %305, %306 : vector<16x32xf32>
    %308 = arith.mulf %299, %307 : vector<16x32xf32>
    %309 = arith.addf %304, %308 : vector<16x32xf32>
    %310 = arith.addf %309, %309 : vector<16x32xf32>
    %311 = arith.negf %310 : vector<16x32xf32>
    %312 = math.exp %311 : vector<16x32xf32>
    %cst_124 = arith.constant 1.000000e+00 : f32
    %313 = vector.broadcast %cst_124 : f32 to vector<16x32xf32>
    %314 = arith.addf %313, %312 : vector<16x32xf32>
    %315 = arith.divf %313, %314 : vector<16x32xf32>
    %316 = arith.addf %315, %315 : vector<16x32xf32>
    %cst_125 = arith.constant 1.000000e+00 : f32
    %317 = vector.broadcast %cst_125 : f32 to vector<16x32xf32>
    %318 = arith.subf %316, %317 : vector<16x32xf32>
    %319 = arith.mulf %301, %318 : vector<16x32xf32>
    %320 = vector.extract_strided_slice %319 {offsets = [0, 0], sizes = [8, 32], strides = [1, 1]} : vector<16x32xf32> to vector<8x32xf32>
    %c6_126 = arith.constant 6 : index
    %c0_127 = arith.constant 0 : index
    %c0_128 = arith.constant 0 : index
    %321 = vector.load %arg12[%c6_126, %c0_127, %c0_128] : memref<8x8x32xf32, #tpu.memory_space<vmem>>, vector<1x8x32xf32>
    %322 = vector.shape_cast %321 : vector<1x8x32xf32> to vector<8x32xf32>
    %323 = vector.shape_cast %320 : vector<8x32xf32> to vector<1x8x32xf32>
    tpu.vector_store %arg12[%c6_126, %c0_127, %c0_128], %323 {strides = array<i32>} : memref<8x8x32xf32, #tpu.memory_space<vmem>>, vector<1x8x32xf32>,
    %324 = vector.extract_strided_slice %319 {offsets = [8, 0], sizes = [8, 32], strides = [1, 1]} : vector<16x32xf32> to vector<8x32xf32>
    %c1_129 = arith.constant 1 : index
    %c0_130 = arith.constant 0 : index
    %c0_131 = arith.constant 0 : index
    %325 = vector.load %arg13[%c1_129, %c0_130, %c0_131] : memref<8x8x32xf32, #tpu.memory_space<vmem>>, vector<1x8x32xf32>
    %326 = vector.shape_cast %325 : vector<1x8x32xf32> to vector<8x32xf32>
    %327 = vector.shape_cast %324 : vector<8x32xf32> to vector<1x8x32xf32>
    tpu.vector_store %arg13[%c1_129, %c0_130, %c0_131], %327 {strides = array<i32>} : memref<8x8x32xf32, #tpu.memory_space<vmem>>, vector<1x8x32xf32>,
    %c7_132 = arith.constant 7 : index
    %c0_133 = arith.constant 0 : index
    %c0_134 = arith.constant 0 : index
    %328 = vector.load %arg10[%c7_132, %c0_133, %c0_134] : memref<8x8x128xf32, #tpu.memory_space<vmem>>, vector<1x8x128xf32>
    %329 = vector.shape_cast %328 : vector<1x8x128xf32> to vector<8x128xf32>
    %c0_135 = arith.constant 0 : index
    %c0_136 = arith.constant 0 : index
    %c0_137 = arith.constant 0 : index
    %330 = vector.load %arg11[%c0_135, %c0_136, %c0_137] : memref<8x8x128xf32, #tpu.memory_space<vmem>>, vector<1x8x128xf32>
    %331 = vector.shape_cast %330 : vector<1x8x128xf32> to vector<8x128xf32>
    %332 = tpu.concatenate %329, %331 in 0 : vector<8x128xf32>, vector<8x128xf32> -> vector<16x128xf32>
    %cst_138 = arith.constant dense<0.000000e+00> : vector<16x256xf32>
    %333 = tpu.matmul %319, %17, %cst_138 {dimension_numbers = #tpu.dot_dimension_numbers<[1], [0], [0], [1], [0, 0, 1, 1], [], []>} : vector<16x32xf32>, vector<32x256xf32>, vector<16x256xf32> -> vector<16x256xf32>
    %334 = vector.extract_strided_slice %333 {offsets = [0, 0], sizes = [16, 128], strides = [1, 1]} : vector<16x256xf32> to vector<16x128xf32>
    %335 = vector.extract_strided_slice %333 {offsets = [0, 128], sizes = [16, 128], strides = [1, 1]} : vector<16x256xf32> to vector<16x128xf32>
    %336 = arith.select %2, %334, %335 : vector<16x128xi1>, vector<16x128xf32>
    %337 = arith.addf %332, %336 : vector<16x128xf32>
    %338 = arith.negf %337 : vector<16x128xf32>
    %339 = math.exp %338 : vector<16x128xf32>
    %cst_139 = arith.constant 1.000000e+00 : f32
    %340 = vector.broadcast %cst_139 : f32 to vector<16x128xf32>
    %341 = arith.addf %340, %339 : vector<16x128xf32>
    %342 = arith.divf %340, %341 : vector<16x128xf32>
    %343 = vector.extract_strided_slice %342 {offsets = [0, 0], sizes = [16, 32], strides = [1, 1]} : vector<16x128xf32> to vector<16x32xf32>
    %344 = vector.extract_strided_slice %342 {offsets = [0, 32], sizes = [16, 32], strides = [1, 1]} : vector<16x128xf32> to vector<16x32xf32>
    %345 = vector.extract_strided_slice %342 {offsets = [0, 96], sizes = [16, 32], strides = [1, 1]} : vector<16x128xf32> to vector<16x32xf32>
    %c64_i32_140 = arith.constant 64 : i32
    %346 = tpu.dynamic_rotate %342 by %c64_i32_140 dim 1 : vector<16x128xf32>, i32 -> vector<16x128xf32>
    %347 = vector.extract_strided_slice %346 {offsets = [0, 0], sizes = [16, 32], strides = [1, 1]} : vector<16x128xf32> to vector<16x32xf32>
    %348 = arith.mulf %344, %309 : vector<16x32xf32>
    %349 = arith.addf %347, %347 : vector<16x32xf32>
    %cst_141 = arith.constant 1.000000e+00 : f32
    %350 = vector.broadcast %cst_141 : f32 to vector<16x32xf32>
    %351 = arith.subf %349, %350 : vector<16x32xf32>
    %352 = arith.mulf %343, %351 : vector<16x32xf32>
    %353 = arith.addf %348, %352 : vector<16x32xf32>
    %354 = arith.addf %353, %353 : vector<16x32xf32>
    %355 = arith.negf %354 : vector<16x32xf32>
    %356 = math.exp %355 : vector<16x32xf32>
    %cst_142 = arith.constant 1.000000e+00 : f32
    %357 = vector.broadcast %cst_142 : f32 to vector<16x32xf32>
    %358 = arith.addf %357, %356 : vector<16x32xf32>
    %359 = arith.divf %357, %358 : vector<16x32xf32>
    %360 = arith.addf %359, %359 : vector<16x32xf32>
    %cst_143 = arith.constant 1.000000e+00 : f32
    %361 = vector.broadcast %cst_143 : f32 to vector<16x32xf32>
    %362 = arith.subf %360, %361 : vector<16x32xf32>
    %363 = arith.mulf %345, %362 : vector<16x32xf32>
    %364 = vector.extract_strided_slice %363 {offsets = [0, 0], sizes = [8, 32], strides = [1, 1]} : vector<16x32xf32> to vector<8x32xf32>
    %c7_144 = arith.constant 7 : index
    %c0_145 = arith.constant 0 : index
    %c0_146 = arith.constant 0 : index
    %365 = vector.load %arg12[%c7_144, %c0_145, %c0_146] : memref<8x8x32xf32, #tpu.memory_space<vmem>>, vector<1x8x32xf32>
    %366 = vector.shape_cast %365 : vector<1x8x32xf32> to vector<8x32xf32>
    %367 = vector.shape_cast %364 : vector<8x32xf32> to vector<1x8x32xf32>
    tpu.vector_store %arg12[%c7_144, %c0_145, %c0_146], %367 {strides = array<i32>} : memref<8x8x32xf32, #tpu.memory_space<vmem>>, vector<1x8x32xf32>,
    %368 = vector.extract_strided_slice %363 {offsets = [8, 0], sizes = [8, 32], strides = [1, 1]} : vector<16x32xf32> to vector<8x32xf32>
    %c0_147 = arith.constant 0 : index
    %c0_148 = arith.constant 0 : index
    %c0_149 = arith.constant 0 : index
    %369 = vector.load %arg13[%c0_147, %c0_148, %c0_149] : memref<8x8x32xf32, #tpu.memory_space<vmem>>, vector<1x8x32xf32>
    %370 = vector.shape_cast %369 : vector<1x8x32xf32> to vector<8x32xf32>
    %371 = vector.shape_cast %368 : vector<8x32xf32> to vector<1x8x32xf32>
    tpu.vector_store %arg13[%c0_147, %c0_148, %c0_149], %371 {strides = array<i32>} : memref<8x8x32xf32, #tpu.memory_space<vmem>>, vector<1x8x32xf32>,
    %c0_150 = arith.constant 0 : index
    %c0_151 = arith.constant 0 : index
    %372 = vector.load %arg4[%c0_150, %c0_151] : memref<64x256xf32, #tpu.memory_space<vmem>>, vector<64x256xf32>
    %c0_152 = arith.constant 0 : index
    %c0_153 = arith.constant 0 : index
    %373 = vector.load %arg6[%c0_152, %c0_153] : memref<1x256xf32, #tpu.memory_space<vmem>>, vector<1x256xf32>
    %c0_154 = arith.constant 0 : index
    %c0_155 = arith.constant 0 : index
    %c0_156 = arith.constant 0 : index
    %374 = vector.load %arg12[%c0_154, %c0_155, %c0_156] : memref<8x8x32xf32, #tpu.memory_space<vmem>>, vector<8x8x32xf32>
    %375 = vector.shape_cast %374 : vector<8x8x32xf32> to vector<64x32xf32>
    %c0_157 = arith.constant 0 : index
    %c0_158 = arith.constant 0 : index
    %c0_159 = arith.constant 0 : index
    %376 = vector.load %arg13[%c0_157, %c0_158, %c0_159] : memref<8x8x32xf32, #tpu.memory_space<vmem>>, vector<8x8x32xf32>
    %377 = vector.shape_cast %376 : vector<8x8x32xf32> to vector<64x32xf32>
    %378 = vector.extract_strided_slice %372 {offsets = [0, 0], sizes = [32, 256], strides = [1, 1]} : vector<64x256xf32> to vector<32x256xf32>
    %cst_160 = arith.constant dense<0.000000e+00> : vector<64x256xf32>
    %379 = tpu.matmul %375, %378, %cst_160 {dimension_numbers = #tpu.dot_dimension_numbers<[1], [0], [0], [1], [0, 0, 1, 1], [], []>} : vector<64x32xf32>, vector<32x256xf32>, vector<64x256xf32> -> vector<64x256xf32>
    %380 = vector.extract_strided_slice %372 {offsets = [32, 0], sizes = [32, 256], strides = [1, 1]} : vector<64x256xf32> to vector<32x256xf32>
    %cst_161 = arith.constant dense<0.000000e+00> : vector<64x256xf32>
    %381 = tpu.matmul %377, %380, %cst_161 {dimension_numbers = #tpu.dot_dimension_numbers<[1], [0], [0], [1], [0, 0, 1, 1], [], []>} : vector<64x32xf32>, vector<32x256xf32>, vector<64x256xf32> -> vector<64x256xf32>
    %382 = arith.addf %379, %381 : vector<64x256xf32>
    %383 = vector.broadcast %373 : vector<1x256xf32> to vector<64x256xf32>
    %384 = arith.addf %382, %383 : vector<64x256xf32>
    %385 = vector.extract_strided_slice %384 {offsets = [0, 0], sizes = [64, 128], strides = [1, 1]} : vector<64x256xf32> to vector<64x128xf32>
    %386 = vector.shape_cast %385 : vector<64x128xf32> to vector<8x8x128xf32>
    %c0_162 = arith.constant 0 : index
    %c0_163 = arith.constant 0 : index
    %c0_164 = arith.constant 0 : index
    %387 = vector.load %arg10[%c0_162, %c0_163, %c0_164] : memref<8x8x128xf32, #tpu.memory_space<vmem>>, vector<8x8x128xf32>
    tpu.vector_store %arg10[%c0_162, %c0_163, %c0_164], %386 {strides = array<i32>} : memref<8x8x128xf32, #tpu.memory_space<vmem>>, vector<8x8x128xf32>,
    %388 = vector.extract_strided_slice %384 {offsets = [0, 128], sizes = [64, 128], strides = [1, 1]} : vector<64x256xf32> to vector<64x128xf32>
    %389 = vector.shape_cast %388 : vector<64x128xf32> to vector<8x8x128xf32>
    %c0_165 = arith.constant 0 : index
    %c0_166 = arith.constant 0 : index
    %c0_167 = arith.constant 0 : index
    %390 = vector.load %arg11[%c0_165, %c0_166, %c0_167] : memref<8x8x128xf32, #tpu.memory_space<vmem>>, vector<8x8x128xf32>
    tpu.vector_store %arg11[%c0_165, %c0_166, %c0_167], %389 {strides = array<i32>} : memref<8x8x128xf32, #tpu.memory_space<vmem>>, vector<8x8x128xf32>,
    %c0_168 = arith.constant 0 : index
    %c0_169 = arith.constant 0 : index
    %391 = vector.load %arg5[%c0_168, %c0_169] : memref<32x256xf32, #tpu.memory_space<vmem>>, vector<32x256xf32>
    %cst_170 = arith.constant 0.000000e+00 : f32
    %392 = vector.broadcast %cst_170 : f32 to vector<16x32xf32>
    %cst_171 = arith.constant 0.000000e+00 : f32
    %393 = vector.broadcast %cst_171 : f32 to vector<16x32xf32>
    %c0_172 = arith.constant 0 : index
    %c0_173 = arith.constant 0 : index
    %c0_174 = arith.constant 0 : index
    %394 = vector.load %arg10[%c0_172, %c0_173, %c0_174] : memref<8x8x128xf32, #tpu.memory_space<vmem>>, vector<1x8x128xf32>
    %395 = vector.shape_cast %394 : vector<1x8x128xf32> to vector<8x128xf32>
    %c7_175 = arith.constant 7 : index
    %c0_176 = arith.constant 0 : index
    %c0_177 = arith.constant 0 : index
    %396 = vector.load %arg11[%c7_175, %c0_176, %c0_177] : memref<8x8x128xf32, #tpu.memory_space<vmem>>, vector<1x8x128xf32>
    %397 = vector.shape_cast %396 : vector<1x8x128xf32> to vector<8x128xf32>
    %398 = tpu.concatenate %395, %397 in 0 : vector<8x128xf32>, vector<8x128xf32> -> vector<16x128xf32>
    %cst_178 = arith.constant dense<0.000000e+00> : vector<16x256xf32>
    %399 = tpu.matmul %392, %391, %cst_178 {dimension_numbers = #tpu.dot_dimension_numbers<[1], [0], [0], [1], [0, 0, 1, 1], [], []>} : vector<16x32xf32>, vector<32x256xf32>, vector<16x256xf32> -> vector<16x256xf32>
    %400 = vector.extract_strided_slice %399 {offsets = [0, 0], sizes = [16, 128], strides = [1, 1]} : vector<16x256xf32> to vector<16x128xf32>
    %401 = vector.extract_strided_slice %399 {offsets = [0, 128], sizes = [16, 128], strides = [1, 1]} : vector<16x256xf32> to vector<16x128xf32>
    %402 = arith.select %2, %400, %401 : vector<16x128xi1>, vector<16x128xf32>
    %403 = arith.addf %398, %402 : vector<16x128xf32>
    %404 = arith.negf %403 : vector<16x128xf32>
    %405 = math.exp %404 : vector<16x128xf32>
    %cst_179 = arith.constant 1.000000e+00 : f32
    %406 = vector.broadcast %cst_179 : f32 to vector<16x128xf32>
    %407 = arith.addf %406, %405 : vector<16x128xf32>
    %408 = arith.divf %406, %407 : vector<16x128xf32>
    %409 = vector.extract_strided_slice %408 {offsets = [0, 0], sizes = [16, 32], strides = [1, 1]} : vector<16x128xf32> to vector<16x32xf32>
    %410 = vector.extract_strided_slice %408 {offsets = [0, 32], sizes = [16, 32], strides = [1, 1]} : vector<16x128xf32> to vector<16x32xf32>
    %411 = vector.extract_strided_slice %408 {offsets = [0, 96], sizes = [16, 32], strides = [1, 1]} : vector<16x128xf32> to vector<16x32xf32>
    %c64_i32_180 = arith.constant 64 : i32
    %412 = tpu.dynamic_rotate %408 by %c64_i32_180 dim 1 : vector<16x128xf32>, i32 -> vector<16x128xf32>
    %413 = vector.extract_strided_slice %412 {offsets = [0, 0], sizes = [16, 32], strides = [1, 1]} : vector<16x128xf32> to vector<16x32xf32>
    %414 = arith.mulf %410, %393 : vector<16x32xf32>
    %415 = arith.addf %413, %413 : vector<16x32xf32>
    %cst_181 = arith.constant 1.000000e+00 : f32
    %416 = vector.broadcast %cst_181 : f32 to vector<16x32xf32>
    %417 = arith.subf %415, %416 : vector<16x32xf32>
    %418 = arith.mulf %409, %417 : vector<16x32xf32>
    %419 = arith.addf %414, %418 : vector<16x32xf32>
    %420 = arith.addf %419, %419 : vector<16x32xf32>
    %421 = arith.negf %420 : vector<16x32xf32>
    %422 = math.exp %421 : vector<16x32xf32>
    %cst_182 = arith.constant 1.000000e+00 : f32
    %423 = vector.broadcast %cst_182 : f32 to vector<16x32xf32>
    %424 = arith.addf %423, %422 : vector<16x32xf32>
    %425 = arith.divf %423, %424 : vector<16x32xf32>
    %426 = arith.addf %425, %425 : vector<16x32xf32>
    %cst_183 = arith.constant 1.000000e+00 : f32
    %427 = vector.broadcast %cst_183 : f32 to vector<16x32xf32>
    %428 = arith.subf %426, %427 : vector<16x32xf32>
    %429 = arith.mulf %411, %428 : vector<16x32xf32>
    %430 = vector.extract_strided_slice %429 {offsets = [8, 0], sizes = [8, 32], strides = [1, 1]} : vector<16x32xf32> to vector<8x32xf32>
    %c1_184 = arith.constant 1 : index
    %c0_185 = arith.constant 0 : index
    %c0_186 = arith.constant 0 : index
    %431 = vector.load %arg10[%c1_184, %c0_185, %c0_186] : memref<8x8x128xf32, #tpu.memory_space<vmem>>, vector<1x8x128xf32>
    %432 = vector.shape_cast %431 : vector<1x8x128xf32> to vector<8x128xf32>
    %c6_187 = arith.constant 6 : index
    %c0_188 = arith.constant 0 : index
    %c0_189 = arith.constant 0 : index
    %433 = vector.load %arg11[%c6_187, %c0_188, %c0_189] : memref<8x8x128xf32, #tpu.memory_space<vmem>>, vector<1x8x128xf32>
    %434 = vector.shape_cast %433 : vector<1x8x128xf32> to vector<8x128xf32>
    %435 = tpu.concatenate %432, %434 in 0 : vector<8x128xf32>, vector<8x128xf32> -> vector<16x128xf32>
    %cst_190 = arith.constant dense<0.000000e+00> : vector<16x256xf32>
    %436 = tpu.matmul %429, %391, %cst_190 {dimension_numbers = #tpu.dot_dimension_numbers<[1], [0], [0], [1], [0, 0, 1, 1], [], []>} : vector<16x32xf32>, vector<32x256xf32>, vector<16x256xf32> -> vector<16x256xf32>
    %437 = vector.extract_strided_slice %436 {offsets = [0, 0], sizes = [16, 128], strides = [1, 1]} : vector<16x256xf32> to vector<16x128xf32>
    %438 = vector.extract_strided_slice %436 {offsets = [0, 128], sizes = [16, 128], strides = [1, 1]} : vector<16x256xf32> to vector<16x128xf32>
    %439 = arith.select %2, %437, %438 : vector<16x128xi1>, vector<16x128xf32>
    %440 = arith.addf %435, %439 : vector<16x128xf32>
    %441 = arith.negf %440 : vector<16x128xf32>
    %442 = math.exp %441 : vector<16x128xf32>
    %cst_191 = arith.constant 1.000000e+00 : f32
    %443 = vector.broadcast %cst_191 : f32 to vector<16x128xf32>
    %444 = arith.addf %443, %442 : vector<16x128xf32>
    %445 = arith.divf %443, %444 : vector<16x128xf32>
    %446 = vector.extract_strided_slice %445 {offsets = [0, 0], sizes = [16, 32], strides = [1, 1]} : vector<16x128xf32> to vector<16x32xf32>
    %447 = vector.extract_strided_slice %445 {offsets = [0, 32], sizes = [16, 32], strides = [1, 1]} : vector<16x128xf32> to vector<16x32xf32>
    %448 = vector.extract_strided_slice %445 {offsets = [0, 96], sizes = [16, 32], strides = [1, 1]} : vector<16x128xf32> to vector<16x32xf32>
    %c64_i32_192 = arith.constant 64 : i32
    %449 = tpu.dynamic_rotate %445 by %c64_i32_192 dim 1 : vector<16x128xf32>, i32 -> vector<16x128xf32>
    %450 = vector.extract_strided_slice %449 {offsets = [0, 0], sizes = [16, 32], strides = [1, 1]} : vector<16x128xf32> to vector<16x32xf32>
    %451 = arith.mulf %447, %419 : vector<16x32xf32>
    %452 = arith.addf %450, %450 : vector<16x32xf32>
    %cst_193 = arith.constant 1.000000e+00 : f32
    %453 = vector.broadcast %cst_193 : f32 to vector<16x32xf32>
    %454 = arith.subf %452, %453 : vector<16x32xf32>
    %455 = arith.mulf %446, %454 : vector<16x32xf32>
    %456 = arith.addf %451, %455 : vector<16x32xf32>
    %457 = arith.addf %456, %456 : vector<16x32xf32>
    %458 = arith.negf %457 : vector<16x32xf32>
    %459 = math.exp %458 : vector<16x32xf32>
    %cst_194 = arith.constant 1.000000e+00 : f32
    %460 = vector.broadcast %cst_194 : f32 to vector<16x32xf32>
    %461 = arith.addf %460, %459 : vector<16x32xf32>
    %462 = arith.divf %460, %461 : vector<16x32xf32>
    %463 = arith.addf %462, %462 : vector<16x32xf32>
    %cst_195 = arith.constant 1.000000e+00 : f32
    %464 = vector.broadcast %cst_195 : f32 to vector<16x32xf32>
    %465 = arith.subf %463, %464 : vector<16x32xf32>
    %466 = arith.mulf %448, %465 : vector<16x32xf32>
    %c2_196 = arith.constant 2 : index
    %c0_197 = arith.constant 0 : index
    %c0_198 = arith.constant 0 : index
    %467 = vector.load %arg10[%c2_196, %c0_197, %c0_198] : memref<8x8x128xf32, #tpu.memory_space<vmem>>, vector<1x8x128xf32>
    %468 = vector.shape_cast %467 : vector<1x8x128xf32> to vector<8x128xf32>
    %c5_199 = arith.constant 5 : index
    %c0_200 = arith.constant 0 : index
    %c0_201 = arith.constant 0 : index
    %469 = vector.load %arg11[%c5_199, %c0_200, %c0_201] : memref<8x8x128xf32, #tpu.memory_space<vmem>>, vector<1x8x128xf32>
    %470 = vector.shape_cast %469 : vector<1x8x128xf32> to vector<8x128xf32>
    %471 = tpu.concatenate %468, %470 in 0 : vector<8x128xf32>, vector<8x128xf32> -> vector<16x128xf32>
    %cst_202 = arith.constant dense<0.000000e+00> : vector<16x256xf32>
    %472 = tpu.matmul %466, %391, %cst_202 {dimension_numbers = #tpu.dot_dimension_numbers<[1], [0], [0], [1], [0, 0, 1, 1], [], []>} : vector<16x32xf32>, vector<32x256xf32>, vector<16x256xf32> -> vector<16x256xf32>
    %473 = vector.extract_strided_slice %472 {offsets = [0, 0], sizes = [16, 128], strides = [1, 1]} : vector<16x256xf32> to vector<16x128xf32>
    %474 = vector.extract_strided_slice %472 {offsets = [0, 128], sizes = [16, 128], strides = [1, 1]} : vector<16x256xf32> to vector<16x128xf32>
    %475 = arith.select %2, %473, %474 : vector<16x128xi1>, vector<16x128xf32>
    %476 = arith.addf %471, %475 : vector<16x128xf32>
    %477 = arith.negf %476 : vector<16x128xf32>
    %478 = math.exp %477 : vector<16x128xf32>
    %cst_203 = arith.constant 1.000000e+00 : f32
    %479 = vector.broadcast %cst_203 : f32 to vector<16x128xf32>
    %480 = arith.addf %479, %478 : vector<16x128xf32>
    %481 = arith.divf %479, %480 : vector<16x128xf32>
    %482 = vector.extract_strided_slice %481 {offsets = [0, 0], sizes = [16, 32], strides = [1, 1]} : vector<16x128xf32> to vector<16x32xf32>
    %483 = vector.extract_strided_slice %481 {offsets = [0, 32], sizes = [16, 32], strides = [1, 1]} : vector<16x128xf32> to vector<16x32xf32>
    %484 = vector.extract_strided_slice %481 {offsets = [0, 96], sizes = [16, 32], strides = [1, 1]} : vector<16x128xf32> to vector<16x32xf32>
    %c64_i32_204 = arith.constant 64 : i32
    %485 = tpu.dynamic_rotate %481 by %c64_i32_204 dim 1 : vector<16x128xf32>, i32 -> vector<16x128xf32>
    %486 = vector.extract_strided_slice %485 {offsets = [0, 0], sizes = [16, 32], strides = [1, 1]} : vector<16x128xf32> to vector<16x32xf32>
    %487 = arith.mulf %483, %456 : vector<16x32xf32>
    %488 = arith.addf %486, %486 : vector<16x32xf32>
    %cst_205 = arith.constant 1.000000e+00 : f32
    %489 = vector.broadcast %cst_205 : f32 to vector<16x32xf32>
    %490 = arith.subf %488, %489 : vector<16x32xf32>
    %491 = arith.mulf %482, %490 : vector<16x32xf32>
    %492 = arith.addf %487, %491 : vector<16x32xf32>
    %493 = arith.addf %492, %492 : vector<16x32xf32>
    %494 = arith.negf %493 : vector<16x32xf32>
    %495 = math.exp %494 : vector<16x32xf32>
    %cst_206 = arith.constant 1.000000e+00 : f32
    %496 = vector.broadcast %cst_206 : f32 to vector<16x32xf32>
    %497 = arith.addf %496, %495 : vector<16x32xf32>
    %498 = arith.divf %496, %497 : vector<16x32xf32>
    %499 = arith.addf %498, %498 : vector<16x32xf32>
    %cst_207 = arith.constant 1.000000e+00 : f32
    %500 = vector.broadcast %cst_207 : f32 to vector<16x32xf32>
    %501 = arith.subf %499, %500 : vector<16x32xf32>
    %502 = arith.mulf %484, %501 : vector<16x32xf32>
    %c3_208 = arith.constant 3 : index
    %c0_209 = arith.constant 0 : index
    %c0_210 = arith.constant 0 : index
    %503 = vector.load %arg10[%c3_208, %c0_209, %c0_210] : memref<8x8x128xf32, #tpu.memory_space<vmem>>, vector<1x8x128xf32>
    %504 = vector.shape_cast %503 : vector<1x8x128xf32> to vector<8x128xf32>
    %c4_211 = arith.constant 4 : index
    %c0_212 = arith.constant 0 : index
    %c0_213 = arith.constant 0 : index
    %505 = vector.load %arg11[%c4_211, %c0_212, %c0_213] : memref<8x8x128xf32, #tpu.memory_space<vmem>>, vector<1x8x128xf32>
    %506 = vector.shape_cast %505 : vector<1x8x128xf32> to vector<8x128xf32>
    %507 = tpu.concatenate %504, %506 in 0 : vector<8x128xf32>, vector<8x128xf32> -> vector<16x128xf32>
    %cst_214 = arith.constant dense<0.000000e+00> : vector<16x256xf32>
    %508 = tpu.matmul %502, %391, %cst_214 {dimension_numbers = #tpu.dot_dimension_numbers<[1], [0], [0], [1], [0, 0, 1, 1], [], []>} : vector<16x32xf32>, vector<32x256xf32>, vector<16x256xf32> -> vector<16x256xf32>
    %509 = vector.extract_strided_slice %508 {offsets = [0, 0], sizes = [16, 128], strides = [1, 1]} : vector<16x256xf32> to vector<16x128xf32>
    %510 = vector.extract_strided_slice %508 {offsets = [0, 128], sizes = [16, 128], strides = [1, 1]} : vector<16x256xf32> to vector<16x128xf32>
    %511 = arith.select %2, %509, %510 : vector<16x128xi1>, vector<16x128xf32>
    %512 = arith.addf %507, %511 : vector<16x128xf32>
    %513 = arith.negf %512 : vector<16x128xf32>
    %514 = math.exp %513 : vector<16x128xf32>
    %cst_215 = arith.constant 1.000000e+00 : f32
    %515 = vector.broadcast %cst_215 : f32 to vector<16x128xf32>
    %516 = arith.addf %515, %514 : vector<16x128xf32>
    %517 = arith.divf %515, %516 : vector<16x128xf32>
    %518 = vector.extract_strided_slice %517 {offsets = [0, 0], sizes = [16, 32], strides = [1, 1]} : vector<16x128xf32> to vector<16x32xf32>
    %519 = vector.extract_strided_slice %517 {offsets = [0, 32], sizes = [16, 32], strides = [1, 1]} : vector<16x128xf32> to vector<16x32xf32>
    %520 = vector.extract_strided_slice %517 {offsets = [0, 96], sizes = [16, 32], strides = [1, 1]} : vector<16x128xf32> to vector<16x32xf32>
    %c64_i32_216 = arith.constant 64 : i32
    %521 = tpu.dynamic_rotate %517 by %c64_i32_216 dim 1 : vector<16x128xf32>, i32 -> vector<16x128xf32>
    %522 = vector.extract_strided_slice %521 {offsets = [0, 0], sizes = [16, 32], strides = [1, 1]} : vector<16x128xf32> to vector<16x32xf32>
    %523 = arith.mulf %519, %492 : vector<16x32xf32>
    %524 = arith.addf %522, %522 : vector<16x32xf32>
    %cst_217 = arith.constant 1.000000e+00 : f32
    %525 = vector.broadcast %cst_217 : f32 to vector<16x32xf32>
    %526 = arith.subf %524, %525 : vector<16x32xf32>
    %527 = arith.mulf %518, %526 : vector<16x32xf32>
    %528 = arith.addf %523, %527 : vector<16x32xf32>
    %529 = arith.addf %528, %528 : vector<16x32xf32>
    %530 = arith.negf %529 : vector<16x32xf32>
    %531 = math.exp %530 : vector<16x32xf32>
    %cst_218 = arith.constant 1.000000e+00 : f32
    %532 = vector.broadcast %cst_218 : f32 to vector<16x32xf32>
    %533 = arith.addf %532, %531 : vector<16x32xf32>
    %534 = arith.divf %532, %533 : vector<16x32xf32>
    %535 = arith.addf %534, %534 : vector<16x32xf32>
    %cst_219 = arith.constant 1.000000e+00 : f32
    %536 = vector.broadcast %cst_219 : f32 to vector<16x32xf32>
    %537 = arith.subf %535, %536 : vector<16x32xf32>
    %538 = arith.mulf %520, %537 : vector<16x32xf32>
    %c4_220 = arith.constant 4 : index
    %c0_221 = arith.constant 0 : index
    %c0_222 = arith.constant 0 : index
    %539 = vector.load %arg10[%c4_220, %c0_221, %c0_222] : memref<8x8x128xf32, #tpu.memory_space<vmem>>, vector<1x8x128xf32>
    %540 = vector.shape_cast %539 : vector<1x8x128xf32> to vector<8x128xf32>
    %c3_223 = arith.constant 3 : index
    %c0_224 = arith.constant 0 : index
    %c0_225 = arith.constant 0 : index
    %541 = vector.load %arg11[%c3_223, %c0_224, %c0_225] : memref<8x8x128xf32, #tpu.memory_space<vmem>>, vector<1x8x128xf32>
    %542 = vector.shape_cast %541 : vector<1x8x128xf32> to vector<8x128xf32>
    %543 = tpu.concatenate %540, %542 in 0 : vector<8x128xf32>, vector<8x128xf32> -> vector<16x128xf32>
    %cst_226 = arith.constant dense<0.000000e+00> : vector<16x256xf32>
    %544 = tpu.matmul %538, %391, %cst_226 {dimension_numbers = #tpu.dot_dimension_numbers<[1], [0], [0], [1], [0, 0, 1, 1], [], []>} : vector<16x32xf32>, vector<32x256xf32>, vector<16x256xf32> -> vector<16x256xf32>
    %545 = vector.extract_strided_slice %544 {offsets = [0, 0], sizes = [16, 128], strides = [1, 1]} : vector<16x256xf32> to vector<16x128xf32>
    %546 = vector.extract_strided_slice %544 {offsets = [0, 128], sizes = [16, 128], strides = [1, 1]} : vector<16x256xf32> to vector<16x128xf32>
    %547 = arith.select %2, %545, %546 : vector<16x128xi1>, vector<16x128xf32>
    %548 = arith.addf %543, %547 : vector<16x128xf32>
    %549 = arith.negf %548 : vector<16x128xf32>
    %550 = math.exp %549 : vector<16x128xf32>
    %cst_227 = arith.constant 1.000000e+00 : f32
    %551 = vector.broadcast %cst_227 : f32 to vector<16x128xf32>
    %552 = arith.addf %551, %550 : vector<16x128xf32>
    %553 = arith.divf %551, %552 : vector<16x128xf32>
    %554 = vector.extract_strided_slice %553 {offsets = [0, 0], sizes = [16, 32], strides = [1, 1]} : vector<16x128xf32> to vector<16x32xf32>
    %555 = vector.extract_strided_slice %553 {offsets = [0, 32], sizes = [16, 32], strides = [1, 1]} : vector<16x128xf32> to vector<16x32xf32>
    %556 = vector.extract_strided_slice %553 {offsets = [0, 96], sizes = [16, 32], strides = [1, 1]} : vector<16x128xf32> to vector<16x32xf32>
    %c64_i32_228 = arith.constant 64 : i32
    %557 = tpu.dynamic_rotate %553 by %c64_i32_228 dim 1 : vector<16x128xf32>, i32 -> vector<16x128xf32>
    %558 = vector.extract_strided_slice %557 {offsets = [0, 0], sizes = [16, 32], strides = [1, 1]} : vector<16x128xf32> to vector<16x32xf32>
    %559 = arith.mulf %555, %528 : vector<16x32xf32>
    %560 = arith.addf %558, %558 : vector<16x32xf32>
    %cst_229 = arith.constant 1.000000e+00 : f32
    %561 = vector.broadcast %cst_229 : f32 to vector<16x32xf32>
    %562 = arith.subf %560, %561 : vector<16x32xf32>
    %563 = arith.mulf %554, %562 : vector<16x32xf32>
    %564 = arith.addf %559, %563 : vector<16x32xf32>
    %565 = arith.addf %564, %564 : vector<16x32xf32>
    %566 = arith.negf %565 : vector<16x32xf32>
    %567 = math.exp %566 : vector<16x32xf32>
    %cst_230 = arith.constant 1.000000e+00 : f32
    %568 = vector.broadcast %cst_230 : f32 to vector<16x32xf32>
    %569 = arith.addf %568, %567 : vector<16x32xf32>
    %570 = arith.divf %568, %569 : vector<16x32xf32>
    %571 = arith.addf %570, %570 : vector<16x32xf32>
    %cst_231 = arith.constant 1.000000e+00 : f32
    %572 = vector.broadcast %cst_231 : f32 to vector<16x32xf32>
    %573 = arith.subf %571, %572 : vector<16x32xf32>
    %574 = arith.mulf %556, %573 : vector<16x32xf32>
    %c5_232 = arith.constant 5 : index
    %c0_233 = arith.constant 0 : index
    %c0_234 = arith.constant 0 : index
    %575 = vector.load %arg10[%c5_232, %c0_233, %c0_234] : memref<8x8x128xf32, #tpu.memory_space<vmem>>, vector<1x8x128xf32>
    %576 = vector.shape_cast %575 : vector<1x8x128xf32> to vector<8x128xf32>
    %c2_235 = arith.constant 2 : index
    %c0_236 = arith.constant 0 : index
    %c0_237 = arith.constant 0 : index
    %577 = vector.load %arg11[%c2_235, %c0_236, %c0_237] : memref<8x8x128xf32, #tpu.memory_space<vmem>>, vector<1x8x128xf32>
    %578 = vector.shape_cast %577 : vector<1x8x128xf32> to vector<8x128xf32>
    %579 = tpu.concatenate %576, %578 in 0 : vector<8x128xf32>, vector<8x128xf32> -> vector<16x128xf32>
    %cst_238 = arith.constant dense<0.000000e+00> : vector<16x256xf32>
    %580 = tpu.matmul %574, %391, %cst_238 {dimension_numbers = #tpu.dot_dimension_numbers<[1], [0], [0], [1], [0, 0, 1, 1], [], []>} : vector<16x32xf32>, vector<32x256xf32>, vector<16x256xf32> -> vector<16x256xf32>
    %581 = vector.extract_strided_slice %580 {offsets = [0, 0], sizes = [16, 128], strides = [1, 1]} : vector<16x256xf32> to vector<16x128xf32>
    %582 = vector.extract_strided_slice %580 {offsets = [0, 128], sizes = [16, 128], strides = [1, 1]} : vector<16x256xf32> to vector<16x128xf32>
    %583 = arith.select %2, %581, %582 : vector<16x128xi1>, vector<16x128xf32>
    %584 = arith.addf %579, %583 : vector<16x128xf32>
    %585 = arith.negf %584 : vector<16x128xf32>
    %586 = math.exp %585 : vector<16x128xf32>
    %cst_239 = arith.constant 1.000000e+00 : f32
    %587 = vector.broadcast %cst_239 : f32 to vector<16x128xf32>
    %588 = arith.addf %587, %586 : vector<16x128xf32>
    %589 = arith.divf %587, %588 : vector<16x128xf32>
    %590 = vector.extract_strided_slice %589 {offsets = [0, 0], sizes = [16, 32], strides = [1, 1]} : vector<16x128xf32> to vector<16x32xf32>
    %591 = vector.extract_strided_slice %589 {offsets = [0, 32], sizes = [16, 32], strides = [1, 1]} : vector<16x128xf32> to vector<16x32xf32>
    %592 = vector.extract_strided_slice %589 {offsets = [0, 96], sizes = [16, 32], strides = [1, 1]} : vector<16x128xf32> to vector<16x32xf32>
    %c64_i32_240 = arith.constant 64 : i32
    %593 = tpu.dynamic_rotate %589 by %c64_i32_240 dim 1 : vector<16x128xf32>, i32 -> vector<16x128xf32>
    %594 = vector.extract_strided_slice %593 {offsets = [0, 0], sizes = [16, 32], strides = [1, 1]} : vector<16x128xf32> to vector<16x32xf32>
    %595 = arith.mulf %591, %564 : vector<16x32xf32>
    %596 = arith.addf %594, %594 : vector<16x32xf32>
    %cst_241 = arith.constant 1.000000e+00 : f32
    %597 = vector.broadcast %cst_241 : f32 to vector<16x32xf32>
    %598 = arith.subf %596, %597 : vector<16x32xf32>
    %599 = arith.mulf %590, %598 : vector<16x32xf32>
    %600 = arith.addf %595, %599 : vector<16x32xf32>
    %601 = arith.addf %600, %600 : vector<16x32xf32>
    %602 = arith.negf %601 : vector<16x32xf32>
    %603 = math.exp %602 : vector<16x32xf32>
    %cst_242 = arith.constant 1.000000e+00 : f32
    %604 = vector.broadcast %cst_242 : f32 to vector<16x32xf32>
    %605 = arith.addf %604, %603 : vector<16x32xf32>
    %606 = arith.divf %604, %605 : vector<16x32xf32>
    %607 = arith.addf %606, %606 : vector<16x32xf32>
    %cst_243 = arith.constant 1.000000e+00 : f32
    %608 = vector.broadcast %cst_243 : f32 to vector<16x32xf32>
    %609 = arith.subf %607, %608 : vector<16x32xf32>
    %610 = arith.mulf %592, %609 : vector<16x32xf32>
    %c6_244 = arith.constant 6 : index
    %c0_245 = arith.constant 0 : index
    %c0_246 = arith.constant 0 : index
    %611 = vector.load %arg10[%c6_244, %c0_245, %c0_246] : memref<8x8x128xf32, #tpu.memory_space<vmem>>, vector<1x8x128xf32>
    %612 = vector.shape_cast %611 : vector<1x8x128xf32> to vector<8x128xf32>
    %c1_247 = arith.constant 1 : index
    %c0_248 = arith.constant 0 : index
    %c0_249 = arith.constant 0 : index
    %613 = vector.load %arg11[%c1_247, %c0_248, %c0_249] : memref<8x8x128xf32, #tpu.memory_space<vmem>>, vector<1x8x128xf32>
    %614 = vector.shape_cast %613 : vector<1x8x128xf32> to vector<8x128xf32>
    %615 = tpu.concatenate %612, %614 in 0 : vector<8x128xf32>, vector<8x128xf32> -> vector<16x128xf32>
    %cst_250 = arith.constant dense<0.000000e+00> : vector<16x256xf32>
    %616 = tpu.matmul %610, %391, %cst_250 {dimension_numbers = #tpu.dot_dimension_numbers<[1], [0], [0], [1], [0, 0, 1, 1], [], []>} : vector<16x32xf32>, vector<32x256xf32>, vector<16x256xf32> -> vector<16x256xf32>
    %617 = vector.extract_strided_slice %616 {offsets = [0, 0], sizes = [16, 128], strides = [1, 1]} : vector<16x256xf32> to vector<16x128xf32>
    %618 = vector.extract_strided_slice %616 {offsets = [0, 128], sizes = [16, 128], strides = [1, 1]} : vector<16x256xf32> to vector<16x128xf32>
    %619 = arith.select %2, %617, %618 : vector<16x128xi1>, vector<16x128xf32>
    %620 = arith.addf %615, %619 : vector<16x128xf32>
    %621 = arith.negf %620 : vector<16x128xf32>
    %622 = math.exp %621 : vector<16x128xf32>
    %cst_251 = arith.constant 1.000000e+00 : f32
    %623 = vector.broadcast %cst_251 : f32 to vector<16x128xf32>
    %624 = arith.addf %623, %622 : vector<16x128xf32>
    %625 = arith.divf %623, %624 : vector<16x128xf32>
    %626 = vector.extract_strided_slice %625 {offsets = [0, 0], sizes = [16, 32], strides = [1, 1]} : vector<16x128xf32> to vector<16x32xf32>
    %627 = vector.extract_strided_slice %625 {offsets = [0, 32], sizes = [16, 32], strides = [1, 1]} : vector<16x128xf32> to vector<16x32xf32>
    %628 = vector.extract_strided_slice %625 {offsets = [0, 96], sizes = [16, 32], strides = [1, 1]} : vector<16x128xf32> to vector<16x32xf32>
    %c64_i32_252 = arith.constant 64 : i32
    %629 = tpu.dynamic_rotate %625 by %c64_i32_252 dim 1 : vector<16x128xf32>, i32 -> vector<16x128xf32>
    %630 = vector.extract_strided_slice %629 {offsets = [0, 0], sizes = [16, 32], strides = [1, 1]} : vector<16x128xf32> to vector<16x32xf32>
    %631 = arith.mulf %627, %600 : vector<16x32xf32>
    %632 = arith.addf %630, %630 : vector<16x32xf32>
    %cst_253 = arith.constant 1.000000e+00 : f32
    %633 = vector.broadcast %cst_253 : f32 to vector<16x32xf32>
    %634 = arith.subf %632, %633 : vector<16x32xf32>
    %635 = arith.mulf %626, %634 : vector<16x32xf32>
    %636 = arith.addf %631, %635 : vector<16x32xf32>
    %637 = arith.addf %636, %636 : vector<16x32xf32>
    %638 = arith.negf %637 : vector<16x32xf32>
    %639 = math.exp %638 : vector<16x32xf32>
    %cst_254 = arith.constant 1.000000e+00 : f32
    %640 = vector.broadcast %cst_254 : f32 to vector<16x32xf32>
    %641 = arith.addf %640, %639 : vector<16x32xf32>
    %642 = arith.divf %640, %641 : vector<16x32xf32>
    %643 = arith.addf %642, %642 : vector<16x32xf32>
    %cst_255 = arith.constant 1.000000e+00 : f32
    %644 = vector.broadcast %cst_255 : f32 to vector<16x32xf32>
    %645 = arith.subf %643, %644 : vector<16x32xf32>
    %646 = arith.mulf %628, %645 : vector<16x32xf32>
    %c7_256 = arith.constant 7 : index
    %c0_257 = arith.constant 0 : index
    %c0_258 = arith.constant 0 : index
    %647 = vector.load %arg10[%c7_256, %c0_257, %c0_258] : memref<8x8x128xf32, #tpu.memory_space<vmem>>, vector<1x8x128xf32>
    %648 = vector.shape_cast %647 : vector<1x8x128xf32> to vector<8x128xf32>
    %c0_259 = arith.constant 0 : index
    %c0_260 = arith.constant 0 : index
    %c0_261 = arith.constant 0 : index
    %649 = vector.load %arg11[%c0_259, %c0_260, %c0_261] : memref<8x8x128xf32, #tpu.memory_space<vmem>>, vector<1x8x128xf32>
    %650 = vector.shape_cast %649 : vector<1x8x128xf32> to vector<8x128xf32>
    %651 = tpu.concatenate %648, %650 in 0 : vector<8x128xf32>, vector<8x128xf32> -> vector<16x128xf32>
    %cst_262 = arith.constant dense<0.000000e+00> : vector<16x256xf32>
    %652 = tpu.matmul %646, %391, %cst_262 {dimension_numbers = #tpu.dot_dimension_numbers<[1], [0], [0], [1], [0, 0, 1, 1], [], []>} : vector<16x32xf32>, vector<32x256xf32>, vector<16x256xf32> -> vector<16x256xf32>
    %653 = vector.extract_strided_slice %652 {offsets = [0, 0], sizes = [16, 128], strides = [1, 1]} : vector<16x256xf32> to vector<16x128xf32>
    %654 = vector.extract_strided_slice %652 {offsets = [0, 128], sizes = [16, 128], strides = [1, 1]} : vector<16x256xf32> to vector<16x128xf32>
    %655 = arith.select %2, %653, %654 : vector<16x128xi1>, vector<16x128xf32>
    %656 = arith.addf %651, %655 : vector<16x128xf32>
    %657 = arith.negf %656 : vector<16x128xf32>
    %658 = math.exp %657 : vector<16x128xf32>
    %cst_263 = arith.constant 1.000000e+00 : f32
    %659 = vector.broadcast %cst_263 : f32 to vector<16x128xf32>
    %660 = arith.addf %659, %658 : vector<16x128xf32>
    %661 = arith.divf %659, %660 : vector<16x128xf32>
    %662 = vector.extract_strided_slice %661 {offsets = [0, 0], sizes = [16, 32], strides = [1, 1]} : vector<16x128xf32> to vector<16x32xf32>
    %663 = vector.extract_strided_slice %661 {offsets = [0, 32], sizes = [16, 32], strides = [1, 1]} : vector<16x128xf32> to vector<16x32xf32>
    %664 = vector.extract_strided_slice %661 {offsets = [0, 96], sizes = [16, 32], strides = [1, 1]} : vector<16x128xf32> to vector<16x32xf32>
    %c64_i32_264 = arith.constant 64 : i32
    %665 = tpu.dynamic_rotate %661 by %c64_i32_264 dim 1 : vector<16x128xf32>, i32 -> vector<16x128xf32>
    %666 = vector.extract_strided_slice %665 {offsets = [0, 0], sizes = [16, 32], strides = [1, 1]} : vector<16x128xf32> to vector<16x32xf32>
    %667 = arith.mulf %663, %636 : vector<16x32xf32>
    %668 = arith.addf %666, %666 : vector<16x32xf32>
    %cst_265 = arith.constant 1.000000e+00 : f32
    %669 = vector.broadcast %cst_265 : f32 to vector<16x32xf32>
    %670 = arith.subf %668, %669 : vector<16x32xf32>
    %671 = arith.mulf %662, %670 : vector<16x32xf32>
    %672 = arith.addf %667, %671 : vector<16x32xf32>
    %673 = arith.addf %672, %672 : vector<16x32xf32>
    %674 = arith.negf %673 : vector<16x32xf32>
    %675 = math.exp %674 : vector<16x32xf32>
    %cst_266 = arith.constant 1.000000e+00 : f32
    %676 = vector.broadcast %cst_266 : f32 to vector<16x32xf32>
    %677 = arith.addf %676, %675 : vector<16x32xf32>
    %678 = arith.divf %676, %677 : vector<16x32xf32>
    %679 = arith.addf %678, %678 : vector<16x32xf32>
    %cst_267 = arith.constant 1.000000e+00 : f32
    %680 = vector.broadcast %cst_267 : f32 to vector<16x32xf32>
    %681 = arith.subf %679, %680 : vector<16x32xf32>
    %682 = arith.mulf %664, %681 : vector<16x32xf32>
    %683 = vector.extract_strided_slice %682 {offsets = [0, 0], sizes = [8, 32], strides = [1, 1]} : vector<16x32xf32> to vector<8x32xf32>
    %684 = tpu.concatenate %683, %430 in 1 : vector<8x32xf32>, vector<8x32xf32> -> vector<8x64xf32>
    %c0_268 = arith.constant 0 : index
    %c0_269 = arith.constant 0 : index
    %685 = vector.load %arg7[%c0_268, %c0_269] : memref<64x1xf32, #tpu.memory_space<vmem>>, vector<64x1xf32>
    %cst_270 = arith.constant dense<0.000000e+00> : vector<8x1xf32>
    %686 = tpu.matmul %684, %685, %cst_270 {dimension_numbers = #tpu.dot_dimension_numbers<[1], [0], [0], [1], [0, 0, 1, 1], [], []>} : vector<8x64xf32>, vector<64x1xf32>, vector<8x1xf32> -> vector<8x1xf32>
    %c0_271 = arith.constant 0 : index
    %c0_272 = arith.constant 0 : index
    %687 = vector.load %arg8[%c0_271, %c0_272] : memref<1x1xf32, #tpu.memory_space<vmem>>, vector<1x1xf32>
    %688 = vector.broadcast %687 : vector<1x1xf32> to vector<8x1xf32>
    %689 = arith.addf %686, %688 : vector<8x1xf32>
    %c0_273 = arith.constant 0 : index
    %c0_274 = arith.constant 0 : index
    %690 = vector.load %arg9[%c0_273, %c0_274] : memref<8x1xf32, #tpu.memory_space<vmem>>, vector<8x1xf32>
    tpu.vector_store %arg9[%c0_273, %c0_274], %689 {strides = array<i32>} : memref<8x1xf32, #tpu.memory_space<vmem>>, vector<8x1xf32>,
    return
  }
}

</mosaic_0001>

<llo_original>
// kernel: tpu_custom_call.1
$region0: #{tpu_custom_call.1}
  #allocation0 [shape = 'u32[]', space=smem, size = 0x4, offset = 0x4, fixed_abs, tag = 'smem constant byte address 0x4 - core index']
  #allocation1 [shape = 'u32[144,128]{1,0:T(1,128)}', space=vmem, size = 0x12000, scoped, tag = 'internal scratch']
  #allocation2 [shape = 'f32[8,8,128]{2,1,0:T(8,128)}', space=vmem, size = 0x8000, scoped, tag = 'scratch operand']
  #allocation3 [shape = 'f32[8,8,128]{2,1,0:T(8,128)}', space=vmem, size = 0x8000, scoped, tag = 'scratch operand']
  #allocation4 [shape = 'f32[8,8,32]{2,1,0:T(8,128)}', space=vmem, size = 0x8000, scoped, tag = 'scratch operand']
  #allocation5 [shape = 'f32[8,8,32]{2,1,0:T(8,128)}', space=vmem, size = 0x8000, scoped, tag = 'scratch operand']
  #allocation6 [shape = 'f32[1,1]{1,0:T(1,128)S(1)}', space=vmem, size = 0x200, scoped, tag = 'scoped memory for tpu_custom_call.1']
  %s0 = inlined_call_operand.vmem [shape: f32[64,1], index: 0, kind: input, shape index: {}]
  %s1 = inlined_call_operand.vmem [shape: f32[1,256], index: 1, kind: input, shape index: {}]
  %s2 = inlined_call_operand.hbm [shape: f32[32,256], index: 2, kind: input, shape index: {}]
  %s3 = inlined_call_operand.vmem [shape: f32[1,256], index: 3, kind: input, shape index: {}]
  %s4 = inlined_call_operand.vmem [shape: f32[64,256], index: 4, kind: input, shape index: {}]
  %s5 = inlined_call_operand.hbm [shape: f32[32,256], index: 5, kind: input, shape index: {}]
  %s6 = inlined_call_operand.vmem [shape: f32[1,256], index: 6, kind: input, shape index: {}]
  %s7 = inlined_call_operand.vmem [shape: f32[64,1], index: 7, kind: input, shape index: {}]
  %s8 = inlined_call_operand.<no memory space> [shape: f32[1,1], index: 8, kind: input, shape index: {}]
  %s9 = inlined_call_operand.vmem [shape: f32[8,1], index: 9, kind: output, shape index: {}]
  %s10 = sld [smem:[#allocation0]]
  $region54: #{tpu_custom_call.1} parent=0
    _
  %s12 = ssub.s32 1, %s10
  %s13 = scalar_select 0, %s12, %s10
  %v14 = vstv %s8
  %15 = vst [vmem:[#allocation6] sm:$0x1] %v14
  $region1: #{tpu_custom_call.1} parent=0
    #allocation7 [shape = 'u8[32768]{0}', space=vmem, size = 0x8000, scoped, tag = 'input window, operand 2, single buffered']
    #allocation8 [shape = 's32[1]{0}', space=sflag, size = 0x4, scoped, tag = 'scoped memory for tpu_custom_call.1']
    #allocation9 [shape = 'u8[32768]{0}', space=vmem, size = 0x8000, scoped, tag = 'input window, operand 5, single buffered']
    #allocation10 [shape = 's32[1]{0}', space=sflag, size = 0x4, scoped, tag = 'scoped memory for tpu_custom_call.1']
    %16 = vsyncpa [#allocation8], 0
    %17 = vsyncpa [#allocation10], 0
    // Predicated region
    $region2: #{tpu_custom_call.1} parent=1 // pred_check
      _
    $region3: #{tpu_custom_call.1} parent=1 // pred_check_branch
      %19 = sbr.rel (0) target = $region5
    $region4: #{tpu_custom_call.1} parent=1 // pred_region
      _
    $region5: #{tpu_custom_call.1} parent=1 // pred_fallthru
      _
    // Predicated region
    $region6: #{tpu_custom_call.1} parent=1 // pred_check
      _
    $region7: #{tpu_custom_call.1} parent=1 // pred_check_branch
      %21 = sbr.rel (0) target = $region9
    $region8: #{tpu_custom_call.1} parent=1 // pred_region
      _
    $region9: #{tpu_custom_call.1} parent=1 // pred_fallthru
      _
    // Predicated region
    $region10: #{tpu_custom_call.1} parent=1 // pred_check
      _
    $region11: #{tpu_custom_call.1} parent=1 // pred_check_branch
      %23 = sbr.rel (0) target = $region13
    $region12: #{tpu_custom_call.1} parent=1 // pred_region
      %s25 = ssub.s32 1024, 1024
      %26 = vsyncadd [#allocation8], %s25
      %s27 = sshll.u32 [#allocation7], 4
      %s28 = int_to_ptr.vmem [resolvable:$true] %s27
      %33 = dma.hbm_to_vmem [thread:$0]  %s2, 1024, %s28, [#allocation8], 256, 256, 16
    $region13: #{tpu_custom_call.1} parent=1 // pred_fallthru
      _
    // Predicated region
    $region14: #{tpu_custom_call.1} parent=1 // pred_check
      _
    $region15: #{tpu_custom_call.1} parent=1 // pred_check_branch
      %35 = sbr.rel (0) target = $region17
    $region16: #{tpu_custom_call.1} parent=1 // pred_region
      _
    $region17: #{tpu_custom_call.1} parent=1 // pred_fallthru
      _
    // Predicated region
    $region18: #{tpu_custom_call.1} parent=1 // pred_check
      _
    $region19: #{tpu_custom_call.1} parent=1 // pred_check_branch
      %37 = sbr.rel (0) target = $region21
    $region20: #{tpu_custom_call.1} parent=1 // pred_region
      _
    $region21: #{tpu_custom_call.1} parent=1 // pred_fallthru
      _
    // Predicated region
    $region22: #{tpu_custom_call.1} parent=1 // pred_check
      _
    $region23: #{tpu_custom_call.1} parent=1 // pred_check_branch
      %39 = sbr.rel (0) target = $region25
    $region24: #{tpu_custom_call.1} parent=1 // pred_region
      %s41 = ssub.s32 1024, 1024
      %42 = vsyncadd [#allocation10], %s41
      %s43 = sshll.u32 [#allocation9], 4
      %s44 = int_to_ptr.vmem [resolvable:$true] %s43
      %49 = dma.hbm_to_vmem [thread:$0]  %s5, 1024, %s44, [#allocation10], 256, 256, 16
    $region25: #{tpu_custom_call.1} parent=1 // pred_fallthru
      _
    // Predicated region
    $region26: #{tpu_custom_call.1} parent=1 // pred_check
      _
    $region27: #{tpu_custom_call.1} parent=1 // pred_check_branch
      %51 = sbr.rel (0) target = $region29
    $region28: #{tpu_custom_call.1} parent=1 // pred_region
      _
    $region29: #{tpu_custom_call.1} parent=1 // pred_fallthru
      _
    // Predicated region
    $region30: #{tpu_custom_call.1} parent=1 // pred_check
      _
    $region31: #{tpu_custom_call.1} parent=1 // pred_check_branch
      %53 = sbr.rel (0) target = $region33
    $region32: #{tpu_custom_call.1} parent=1 // pred_region
      _
    $region33: #{tpu_custom_call.1} parent=1 // pred_fallthru
      _
    // Predicated region
    $region34: #{tpu_custom_call.1} parent=1 // pred_check
      _
    $region35: #{tpu_custom_call.1} parent=1 // pred_check_branch
      %55 = sbr.rel (0) target = $region37
    $region36: #{tpu_custom_call.1} parent=1 // pred_region
      _
    $region37: #{tpu_custom_call.1} parent=1 // pred_fallthru
      _
    // Predicated region
    $region38: #{tpu_custom_call.1} parent=1 // pred_check
      _
    $region39: #{tpu_custom_call.1} parent=1 // pred_check_branch
      %57 = sbr.rel (0) target = $region41
    $region40: #{tpu_custom_call.1} parent=1 // pred_region
      %58 = dma.done [#allocation8], 1024
    $region41: #{tpu_custom_call.1} parent=1 // pred_fallthru
      _
    // Predicated region
    $region42: #{tpu_custom_call.1} parent=1 // pred_check
      _
    $region43: #{tpu_custom_call.1} parent=1 // pred_check_branch
      %60 = sbr.rel (0) target = $region45
    $region44: #{tpu_custom_call.1} parent=1 // pred_region
      %61 = dma.done [#allocation10], 1024
    $region45: #{tpu_custom_call.1} parent=1 // pred_fallthru
      _
    %v62 = vlaneseq
    %v63 = vshrl.u32 %v62, 7
    %v64 = vadd.s32 %v63, 8
    %vm65 = vcmp.lt.s32.totalorder %v63, 8
    %vm66 = vcmp.lt.s32.totalorder %v64, 8
    %v67 = vld [vmem:[%s1] sm:$0x3]
    %v68 = vld [vmem:[%s3] sm:$0x3]
    %v69 = vld [vmem:[%s0] sm:$0xff]
    %v70 = vld [vmem:[%s0 + $0x8] sm:$0xff]
    %v71 = vld [vmem:[%s0 + $0x10] sm:$0xff]
    %v72 = vld [vmem:[%s0 + $0x18] sm:$0xff]
    %v73 = vld [vmem:[%s0 + $0x20] sm:$0xff]
    %v74 = vld [vmem:[%s0 + $0x28] sm:$0xff]
    %v75 = vld [vmem:[%s0 + $0x30] sm:$0xff]
    %v76 = vld [vmem:[%s0 + $0x38] sm:$0xff]
    %78 = vset.pattern.permute.xlu0 0
    %79 = vperm.xlu0 %78, %v69
    %v80 = vpop.permute.xlu0 %79
    %83 = vset.pattern.permute.xlu0 0
    %84 = vperm.xlu0 %83, %v70
    %v85 = vpop.permute.xlu0 %84
    %88 = vset.pattern.permute.xlu0 0
    %89 = vperm.xlu0 %88, %v71
    %v90 = vpop.permute.xlu0 %89
    %93 = vset.pattern.permute.xlu0 0
    %94 = vperm.xlu0 %93, %v72
    %v95 = vpop.permute.xlu0 %94
    %98 = vset.pattern.permute.xlu0 0
    %99 = vperm.xlu0 %98, %v73
    %v100 = vpop.permute.xlu0 %99
    %103 = vset.pattern.permute.xlu0 0
    %104 = vperm.xlu0 %103, %v74
    %v105 = vpop.permute.xlu0 %104
    %108 = vset.pattern.permute.xlu0 0
    %109 = vperm.xlu0 %108, %v75
    %v110 = vpop.permute.xlu0 %109
    %113 = vset.pattern.permute.xlu0 0
    %114 = vperm.xlu0 %113, %v76
    %v115 = vpop.permute.xlu0 %114
    %v118 = vlaneseq
    %v119 = vshrl.u32 %v118, 7
    %v120 = vsub.s32 0, %v119
    %v121 = vrot.slane %v67, %v120
    %v122 = vlaneseq
    %v123 = vshrl.u32 %v122, 7
    %v124 = vsub.s32 1, %v123
    %v125 = vrot.slane %v67, %v124
    %v128 = vmul.f32 %v80, %v121
    %v129 = vmul.f32 %v80, %v125
    %v130 = vmul.f32 %v85, %v121
    %v131 = vmul.f32 %v85, %v125
    %v132 = vmul.f32 %v90, %v121
    %v133 = vmul.f32 %v90, %v125
    %v134 = vmul.f32 %v95, %v121
    %v135 = vmul.f32 %v95, %v125
    %v136 = vmul.f32 %v100, %v121
    %v137 = vmul.f32 %v100, %v125
    %v138 = vmul.f32 %v105, %v121
    %v139 = vmul.f32 %v105, %v125
    %v140 = vmul.f32 %v110, %v121
    %v141 = vmul.f32 %v110, %v125
    %v142 = vmul.f32 %v115, %v121
    %v143 = vmul.f32 %v115, %v125
    %v145 = vlaneseq
    %v146 = vshrl.u32 %v145, 7
    %v147 = vsub.s32 0, %v146
    %v148 = vrot.slane %v68, %v147
    %v149 = vlaneseq
    %v150 = vshrl.u32 %v149, 7
    %v151 = vsub.s32 1, %v150
    %v152 = vrot.slane %v68, %v151
    %v155 = vadd.f32 %v128, %v148
    %v156 = vadd.f32 %v129, %v152
    %v157 = vadd.f32 %v130, %v148
    %v158 = vadd.f32 %v131, %v152
    %v159 = vadd.f32 %v132, %v148
    %v160 = vadd.f32 %v133, %v152
    %v161 = vadd.f32 %v134, %v148
    %v162 = vadd.f32 %v135, %v152
    %v163 = vadd.f32 %v136, %v148
    %v164 = vadd.f32 %v137, %v152
    %v165 = vadd.f32 %v138, %v148
    %v166 = vadd.f32 %v139, %v152
    %v167 = vadd.f32 %v140, %v148
    %v168 = vadd.f32 %v141, %v152
    %v169 = vadd.f32 %v142, %v148
    %v170 = vadd.f32 %v143, %v152
    %171 = vst [vmem:[#allocation2] sm:$0xff] %v155
    %172 = vst [vmem:[#allocation2 + $0x8] sm:$0xff] %v157
    %173 = vst [vmem:[#allocation2 + $0x10] sm:$0xff] %v159
    %174 = vst [vmem:[#allocation2 + $0x18] sm:$0xff] %v161
    %175 = vst [vmem:[#allocation2 + $0x20] sm:$0xff] %v163
    %176 = vst [vmem:[#allocation2 + $0x28] sm:$0xff] %v165
    %177 = vst [vmem:[#allocation2 + $0x30] sm:$0xff] %v167
    %178 = vst [vmem:[#allocation2 + $0x38] sm:$0xff] %v169
    %179 = vst [vmem:[#allocation3] sm:$0xff] %v156
    %180 = vst [vmem:[#allocation3 + $0x8] sm:$0xff] %v158
    %181 = vst [vmem:[#allocation3 + $0x10] sm:$0xff] %v160
    %182 = vst [vmem:[#allocation3 + $0x18] sm:$0xff] %v162
    %183 = vst [vmem:[#allocation3 + $0x20] sm:$0xff] %v164
    %184 = vst [vmem:[#allocation3 + $0x28] sm:$0xff] %v166
    %185 = vst [vmem:[#allocation3 + $0x30] sm:$0xff] %v168
    %186 = vst [vmem:[#allocation3 + $0x38] sm:$0xff] %v170
    %v187 = vld [vmem:[#allocation7] sm:$0xff]
    %v188 = vld [vmem:[#allocation7 + $0x8] sm:$0xff]
    %v189 = vld [vmem:[#allocation7 + $0x10] sm:$0xff]
    %v190 = vld [vmem:[#allocation7 + $0x18] sm:$0xff]
    %v191 = vld [vmem:[#allocation7 + $0x20] sm:$0xff]
    %v192 = vld [vmem:[#allocation7 + $0x28] sm:$0xff]
    %v193 = vld [vmem:[#allocation7 + $0x30] sm:$0xff]
    %v194 = vld [vmem:[#allocation7 + $0x38] sm:$0xff]
    %v195 = vld [vmem:[#allocation2] sm:$0xff]
    %s196 = scalar_lea.vmem [#allocation3], 56
    %v197 = vld [vmem:[%s196] sm:$0xff]
    %vm198 = vcmask 261120
    %v200 = vsel %vm198, 0.0, 0
    %202 = vmatprep.subr.mxu0 0.0
    %203 = vmatpush1.msra.mxu0 0.0
    %204 = vmatprep.subr.mxu0 0.0
    %205 = vmatpush1.msra.mxu0 0.0
    %206 = vmatprep.subr.mxu0 0.0
    %207 = vmatpush1.msra.mxu0 0.0
    %208 = vmatprep.subr.mxu0 0.0
    %209 = vmatpush1.msra.mxu0 0.0
    %210 = vmatprep.subr.mxu0 0.0
    %211 = vmatpush1.msra.mxu0 0.0
    %212 = vmatprep.subr.mxu0 0.0
    %213 = vmatpush1.msra.mxu0 0.0
    %214 = vmatprep.subr.mxu0 0.0
    %215 = vmatpush1.msra.mxu0 0.0
    %216 = vmatprep.subr.mxu0 0.0
    %217 = vmatpush1.msra.mxu0 0.0
    %218 = vmatprep.subr.mxu0 0.0
    %219 = vmatpush1.msra.mxu0 0.0
    %220 = vmatprep.subr.mxu0 0.0
    %221 = vmatpush1.msra.mxu0 0.0
    %222 = vmatprep.subr.mxu0 0.0
    %223 = vmatpush1.msra.mxu0 0.0
    %224 = vmatprep.subr.mxu0 0.0
    %225 = vmatpush1.msra.mxu0 0.0
    %226 = vmatprep.subr.mxu0 %v194
    %227 = vmatpush1.msra.mxu0 %v193
    %228 = vmatprep.subr.mxu0 %v192
    %229 = vmatpush1.msra.mxu0 %v191
    %230 = vmatprep.subr.mxu0 %v190
    %231 = vmatpush1.msra.mxu0 %v189
    %232 = vmatprep.subr.mxu0 %v188
    %233 = vmatpush1.msra.mxu0 %v187
    %234 = vmatprep.subr.mxu0 0.0
    %235 = vmatpush2.msra.mxu0 0.0
    %236 = vmatprep.subr.mxu0 0.0
    %237 = vmatpush2.msra.mxu0 0.0
    %238 = vmatprep.subr.mxu0 0.0
    %239 = vmatpush2.msra.mxu0 0.0
    %240 = vmatprep.subr.mxu0 0.0
    %241 = vmatpush2.msra.mxu0 0.0
    %242 = vmatprep.subr.mxu0 0.0
    %243 = vmatpush2.msra.mxu0 0.0
    %244 = vmatprep.subr.mxu0 0.0
    %245 = vmatpush2.msra.mxu0 0.0
    %246 = vmatprep.subr.mxu0 0.0
    %247 = vmatpush2.msra.mxu0 0.0
    %248 = vmatprep.subr.mxu0 0.0
    %249 = vmatpush2.msra.mxu0 0.0
    %250 = vmatprep.subr.mxu0 0.0
    %251 = vmatpush2.msra.mxu0 0.0
    %252 = vmatprep.subr.mxu0 0.0
    %253 = vmatpush2.msra.mxu0 0.0
    %254 = vmatprep.subr.mxu0 0.0
    %255 = vmatpush2.msra.mxu0 0.0
    %256 = vmatprep.subr.mxu0 0.0
    %257 = vmatpush2.msra.mxu0 0.0
    %258 = vmatprep.subr.mxu0 0.0
    %259 = vmatpush2.msra.mxu0 0.0
    %260 = vmatprep.subr.mxu0 0.0
    %261 = vmatpush2.msra.mxu0 0.0
    %262 = vmatprep.subr.mxu0 0.0
    %263 = vmatpush2.msra.mxu0 0.0
    %264 = vmatprep.subr.mxu0 0.0
    %265 = vmatpush2.msra.mxu0 0.0
    %266 = vmatprep.mubr.f32.mxu0 0.0
    %267 = vmatmul.mubr.f32.gmra.mxu0 %v200
    %v268 = vpop.f32.mrf.mxu0
    %v269 = vadd.f32 0.0, %v268
    %v270 = vpop.f32.mrf.mxu0
    %v271 = vadd.f32 0.0, %v270
    %272 = vmatprep.mubr.f32.mxu0 0.0
    %273 = vmatmul.mubr.f32.gmra.mxu0 %v200
    %v274 = vpop.f32.mrf.mxu0
    %v275 = vadd.f32 0.0, %v274
    %v276 = vpop.f32.mrf.mxu0
    %v277 = vadd.f32 0.0, %v276
    %278 = vdwg.mxu0
    %v279 = vsel %vm65, %v269, %v271
    %v280 = vsel %vm66, %v275, %v277
    %v281 = vadd.f32 %v195, %v279
    %v282 = vadd.f32 %v197, %v280
    %v283 = vxor.u32 %v281, 2147483648
    %v284 = vxor.u32 %v282, 2147483648
    %v285 = vmul.f32 %v283, 1.442695
    %v286 = vpow.pop %v285
    %v287 = vmul.f32 %v284, 1.442695
    %v288 = vpow.pop %v287
    %v289 = vadd.f32 %v286, 1.0
    %v290 = vadd.f32 %v288, 1.0
    %v291 = vrcp.pop %v289
    %v292 = vmul.f32 1.0, %v291
    %v293 = vrcp.pop %v290
    %v294 = vmul.f32 1.0, %v293
    %295 = vrot.lane.b32.xlu0 %v292, 64
    %v296 = vpop.permute.xlu0 %295
    %297 = vrot.lane.b32.xlu0 %v294, 64
    %v298 = vpop.permute.xlu0 %297
    %v299 = vmul.f32 %v292, 0.0
    %v300 = vmul.f32 %v294, 0.0
    %v301 = vadd.f32 %v296, %v296
    %v302 = vadd.f32 %v298, %v298
    %v303 = vsub.f32 %v301, 1.0
    %v304 = vsub.f32 %v302, 1.0
    %v305 = vmul.f32 %v292, %v303
    %v306 = vmul.f32 %v294, %v304
    %309 = vrot.lane.b32.xlu0 %v305, 32
    %v310 = vpop.permute.xlu0 %309
    %311 = vrot.lane.b32.xlu0 %v306, 32
    %v312 = vpop.permute.xlu0 %311
    %v315 = vadd.f32 %v299, %v310
    %v316 = vadd.f32 %v300, %v312
    %v317 = vadd.f32 %v315, %v315
    %v318 = vadd.f32 %v316, %v316
    %v319 = vxor.u32 %v317, 2147483648
    %v320 = vxor.u32 %v318, 2147483648
    %v321 = vmul.f32 %v319, 1.442695
    %v322 = vpow.pop %v321
    %v323 = vmul.f32 %v320, 1.442695
    %v324 = vpow.pop %v323
    %v325 = vadd.f32 %v322, 1.0
    %v326 = vadd.f32 %v324, 1.0
    %v327 = vrcp.pop %v325
    %v328 = vmul.f32 1.0, %v327
    %v329 = vrcp.pop %v326
    %v330 = vmul.f32 1.0, %v329
    %v331 = vadd.f32 %v328, %v328
    %v332 = vadd.f32 %v330, %v330
    %v333 = vsub.f32 %v331, 1.0
    %v334 = vsub.f32 %v332, 1.0
    %337 = vrot.lane.b32.xlu0 %v333, 64
    %v338 = vpop.permute.xlu0 %337
    %339 = vrot.lane.b32.xlu0 %v334, 64
    %v340 = vpop.permute.xlu0 %339
    %v343 = vmul.f32 %v292, %v338
    %v344 = vmul.f32 %v294, %v340
    %346 = vrot.lane.b32.xlu0 %v343, 32
    %v347 = vpop.permute.xlu0 %346
    %349 = vst.msk [vmem:[#allocation4] sm:$0xff] %vm198, %v347
    %351 = vrot.lane.b32.xlu0 %v344, 32
    %v352 = vpop.permute.xlu0 %351
    %s354 = scalar_lea.vmem [#allocation5], 56
    %355 = vst.msk [vmem:[%s354] sm:$0xff] %vm198, %v352
    %s356 = scalar_lea.vmem [#allocation2], 8
    %v357 = vld [vmem:[%s356] sm:$0xff]
    %s358 = scalar_lea.vmem [#allocation3], 48
    %v359 = vld [vmem:[%s358] sm:$0xff]
    %v360 = vsel %vm198, %v347, 0
    %v362 = vsel %vm198, %v352, 0
    %364 = vmatprep.subr.mxu0 0.0
    %365 = vmatpush1.msra.mxu0 0.0
    %366 = vmatprep.subr.mxu0 0.0
    %367 = vmatpush1.msra.mxu0 0.0
    %368 = vmatprep.subr.mxu0 0.0
    %369 = vmatpush1.msra.mxu0 0.0
    %370 = vmatprep.subr.mxu0 0.0
    %371 = vmatpush1.msra.mxu0 0.0
    %372 = vmatprep.subr.mxu0 0.0
    %373 = vmatpush1.msra.mxu0 0.0
    %374 = vmatprep.subr.mxu0 0.0
    %375 = vmatpush1.msra.mxu0 0.0
    %376 = vmatprep.subr.mxu0 0.0
    %377 = vmatpush1.msra.mxu0 0.0
    %378 = vmatprep.subr.mxu0 0.0
    %379 = vmatpush1.msra.mxu0 0.0
    %380 = vmatprep.subr.mxu0 0.0
    %381 = vmatpush1.msra.mxu0 0.0
    %382 = vmatprep.subr.mxu0 0.0
    %383 = vmatpush1.msra.mxu0 0.0
    %384 = vmatprep.subr.mxu0 0.0
    %385 = vmatpush1.msra.mxu0 0.0
    %386 = vmatprep.subr.mxu0 0.0
    %387 = vmatpush1.msra.mxu0 0.0
    %388 = vmatprep.subr.mxu0 %v194
    %389 = vmatpush1.msra.mxu0 %v193
    %390 = vmatprep.subr.mxu0 %v192
    %391 = vmatpush1.msra.mxu0 %v191
    %392 = vmatprep.subr.mxu0 %v190
    %393 = vmatpush1.msra.mxu0 %v189
    %394 = vmatprep.subr.mxu0 %v188
    %395 = vmatpush1.msra.mxu0 %v187
    %396 = vmatprep.subr.mxu0 0.0
    %397 = vmatpush2.msra.mxu0 0.0
    %398 = vmatprep.subr.mxu0 0.0
    %399 = vmatpush2.msra.mxu0 0.0
    %400 = vmatprep.subr.mxu0 0.0
    %401 = vmatpush2.msra.mxu0 0.0
    %402 = vmatprep.subr.mxu0 0.0
    %403 = vmatpush2.msra.mxu0 0.0
    %404 = vmatprep.subr.mxu0 0.0
    %405 = vmatpush2.msra.mxu0 0.0
    %406 = vmatprep.subr.mxu0 0.0
    %407 = vmatpush2.msra.mxu0 0.0
    %408 = vmatprep.subr.mxu0 0.0
    %409 = vmatpush2.msra.mxu0 0.0
    %410 = vmatprep.subr.mxu0 0.0
    %411 = vmatpush2.msra.mxu0 0.0
    %412 = vmatprep.subr.mxu0 0.0
    %413 = vmatpush2.msra.mxu0 0.0
    %414 = vmatprep.subr.mxu0 0.0
    %415 = vmatpush2.msra.mxu0 0.0
    %416 = vmatprep.subr.mxu0 0.0
    %417 = vmatpush2.msra.mxu0 0.0
    %418 = vmatprep.subr.mxu0 0.0
    %419 = vmatpush2.msra.mxu0 0.0
    %420 = vmatprep.subr.mxu0 0.0
    %421 = vmatpush2.msra.mxu0 0.0
    %422 = vmatprep.subr.mxu0 0.0
    %423 = vmatpush2.msra.mxu0 0.0
    %424 = vmatprep.subr.mxu0 0.0
    %425 = vmatpush2.msra.mxu0 0.0
    %426 = vmatprep.subr.mxu0 0.0
    %427 = vmatpush2.msra.mxu0 0.0
    %428 = vmatprep.mubr.f32.mxu0 0.0
    %429 = vmatmul.mubr.f32.gmra.mxu0 %v360
    %v430 = vpop.f32.mrf.mxu0
    %v431 = vadd.f32 0.0, %v430
    %v432 = vpop.f32.mrf.mxu0
    %v433 = vadd.f32 0.0, %v432
    %434 = vmatprep.mubr.f32.mxu0 0.0
    %435 = vmatmul.mubr.f32.gmra.mxu0 %v362
    %v436 = vpop.f32.mrf.mxu0
    %v437 = vadd.f32 0.0, %v436
    %v438 = vpop.f32.mrf.mxu0
    %v439 = vadd.f32 0.0, %v438
    %440 = vdwg.mxu0
    %v441 = vsel %vm65, %v431, %v433
    %v442 = vsel %vm66, %v437, %v439
    %v443 = vadd.f32 %v357, %v441
    %v444 = vadd.f32 %v359, %v442
    %v445 = vxor.u32 %v443, 2147483648
    %v446 = vxor.u32 %v444, 2147483648
    %v447 = vmul.f32 %v445, 1.442695
    %v448 = vpow.pop %v447
    %v449 = vmul.f32 %v446, 1.442695
    %v450 = vpow.pop %v449
    %v451 = vadd.f32 %v448, 1.0
    %v452 = vadd.f32 %v450, 1.0
    %v453 = vrcp.pop %v451
    %v454 = vmul.f32 1.0, %v453
    %v455 = vrcp.pop %v452
    %v456 = vmul.f32 1.0, %v455
    %457 = vrot.lane.b32.xlu0 %v454, 64
    %v458 = vpop.permute.xlu0 %457
    %459 = vrot.lane.b32.xlu0 %v456, 64
    %v460 = vpop.permute.xlu0 %459
    %v461 = vmul.f32 %v454, %v315
    %v462 = vmul.f32 %v456, %v316
    %v463 = vadd.f32 %v458, %v458
    %v464 = vadd.f32 %v460, %v460
    %v465 = vsub.f32 %v463, 1.0
    %v466 = vsub.f32 %v464, 1.0
    %v467 = vmul.f32 %v454, %v465
    %v468 = vmul.f32 %v456, %v466
    %471 = vrot.lane.b32.xlu0 %v467, 32
    %v472 = vpop.permute.xlu0 %471
    %473 = vrot.lane.b32.xlu0 %v468, 32
    %v474 = vpop.permute.xlu0 %473
    %v477 = vadd.f32 %v461, %v472
    %v478 = vadd.f32 %v462, %v474
    %v479 = vadd.f32 %v477, %v477
    %v480 = vadd.f32 %v478, %v478
    %v481 = vxor.u32 %v479, 2147483648
    %v482 = vxor.u32 %v480, 2147483648
    %v483 = vmul.f32 %v481, 1.442695
    %v484 = vpow.pop %v483
    %v485 = vmul.f32 %v482, 1.442695
    %v486 = vpow.pop %v485
    %v487 = vadd.f32 %v484, 1.0
    %v488 = vadd.f32 %v486, 1.0
    %v489 = vrcp.pop %v487
    %v490 = vmul.f32 1.0, %v489
    %v491 = vrcp.pop %v488
    %v492 = vmul.f32 1.0, %v491
    %v493 = vadd.f32 %v490, %v490
    %v494 = vadd.f32 %v492, %v492
    %v495 = vsub.f32 %v493, 1.0
    %v496 = vsub.f32 %v494, 1.0
    %499 = vrot.lane.b32.xlu0 %v495, 64
    %v500 = vpop.permute.xlu0 %499
    %501 = vrot.lane.b32.xlu0 %v496, 64
    %v502 = vpop.permute.xlu0 %501
    %v505 = vmul.f32 %v454, %v500
    %v506 = vmul.f32 %v456, %v502
    %508 = vrot.lane.b32.xlu0 %v505, 32
    %v509 = vpop.permute.xlu0 %508
    %s511 = scalar_lea.vmem [#allocation4], 8
    %512 = vst.msk [vmem:[%s511] sm:$0xff] %vm198, %v509
    %514 = vrot.lane.b32.xlu0 %v506, 32
    %v515 = vpop.permute.xlu0 %514
    %s517 = scalar_lea.vmem [#allocation5], 48
    %518 = vst.msk [vmem:[%s517] sm:$0xff] %vm198, %v515
    %s519 = scalar_lea.vmem [#allocation2], 16
    %v520 = vld [vmem:[%s519] sm:$0xff]
    %s521 = scalar_lea.vmem [#allocation3], 40
    %v522 = vld [vmem:[%s521] sm:$0xff]
    %v523 = vsel %vm198, %v509, 0
    %v525 = vsel %vm198, %v515, 0
    %527 = vmatprep.subr.mxu0 0.0
    %528 = vmatpush1.msra.mxu0 0.0
    %529 = vmatprep.subr.mxu0 0.0
    %530 = vmatpush1.msra.mxu0 0.0
    %531 = vmatprep.subr.mxu0 0.0
    %532 = vmatpush1.msra.mxu0 0.0
    %533 = vmatprep.subr.mxu0 0.0
    %534 = vmatpush1.msra.mxu0 0.0
    %535 = vmatprep.subr.mxu0 0.0
    %536 = vmatpush1.msra.mxu0 0.0
    %537 = vmatprep.subr.mxu0 0.0
    %538 = vmatpush1.msra.mxu0 0.0
    %539 = vmatprep.subr.mxu0 0.0
    %540 = vmatpush1.msra.mxu0 0.0
    %541 = vmatprep.subr.mxu0 0.0
    %542 = vmatpush1.msra.mxu0 0.0
    %543 = vmatprep.subr.mxu0 0.0
    %544 = vmatpush1.msra.mxu0 0.0
    %545 = vmatprep.subr.mxu0 0.0
    %546 = vmatpush1.msra.mxu0 0.0
    %547 = vmatprep.subr.mxu0 0.0
    %548 = vmatpush1.msra.mxu0 0.0
    %549 = vmatprep.subr.mxu0 0.0
    %550 = vmatpush1.msra.mxu0 0.0
    %551 = vmatprep.subr.mxu0 %v194
    %552 = vmatpush1.msra.mxu0 %v193
    %553 = vmatprep.subr.mxu0 %v192
    %554 = vmatpush1.msra.mxu0 %v191
    %555 = vmatprep.subr.mxu0 %v190
    %556 = vmatpush1.msra.mxu0 %v189
    %557 = vmatprep.subr.mxu0 %v188
    %558 = vmatpush1.msra.mxu0 %v187
    %559 = vmatprep.subr.mxu0 0.0
    %560 = vmatpush2.msra.mxu0 0.0
    %561 = vmatprep.subr.mxu0 0.0
    %562 = vmatpush2.msra.mxu0 0.0
    %563 = vmatprep.subr.mxu0 0.0
    %564 = vmatpush2.msra.mxu0 0.0
    %565 = vmatprep.subr.mxu0 0.0
    %566 = vmatpush2.msra.mxu0 0.0
    %567 = vmatprep.subr.mxu0 0.0
    %568 = vmatpush2.msra.mxu0 0.0
    %569 = vmatprep.subr.mxu0 0.0
    %570 = vmatpush2.msra.mxu0 0.0
    %571 = vmatprep.subr.mxu0 0.0
    %572 = vmatpush2.msra.mxu0 0.0
    %573 = vmatprep.subr.mxu0 0.0
    %574 = vmatpush2.msra.mxu0 0.0
    %575 = vmatprep.subr.mxu0 0.0
    %576 = vmatpush2.msra.mxu0 0.0
    %577 = vmatprep.subr.mxu0 0.0
    %578 = vmatpush2.msra.mxu0 0.0
    %579 = vmatprep.subr.mxu0 0.0
    %580 = vmatpush2.msra.mxu0 0.0
    %581 = vmatprep.subr.mxu0 0.0
    %582 = vmatpush2.msra.mxu0 0.0
    %583 = vmatprep.subr.mxu0 0.0
    %584 = vmatpush2.msra.mxu0 0.0
    %585 = vmatprep.subr.mxu0 0.0
    %586 = vmatpush2.msra.mxu0 0.0
    %587 = vmatprep.subr.mxu0 0.0
    %588 = vmatpush2.msra.mxu0 0.0
    %589 = vmatprep.subr.mxu0 0.0
    %590 = vmatpush2.msra.mxu0 0.0
    %591 = vmatprep.mubr.f32.mxu0 0.0
    %592 = vmatmul.mubr.f32.gmra.mxu0 %v523
    %v593 = vpop.f32.mrf.mxu0
    %v594 = vadd.f32 0.0, %v593
    %v595 = vpop.f32.mrf.mxu0
    %v596 = vadd.f32 0.0, %v595
    %597 = vmatprep.mubr.f32.mxu0 0.0
    %598 = vmatmul.mubr.f32.gmra.mxu0 %v525
    %v599 = vpop.f32.mrf.mxu0
    %v600 = vadd.f32 0.0, %v599
    %v601 = vpop.f32.mrf.mxu0
    %v602 = vadd.f32 0.0, %v601
    %603 = vdwg.mxu0
    %v604 = vsel %vm65, %v594, %v596
    %v605 = vsel %vm66, %v600, %v602
    %v606 = vadd.f32 %v520, %v604
    %v607 = vadd.f32 %v522, %v605
    %v608 = vxor.u32 %v606, 2147483648
    %v609 = vxor.u32 %v607, 2147483648
    %v610 = vmul.f32 %v608, 1.442695
    %v611 = vpow.pop %v610
    %v612 = vmul.f32 %v609, 1.442695
    %v613 = vpow.pop %v612
    %v614 = vadd.f32 %v611, 1.0
    %v615 = vadd.f32 %v613, 1.0
    %v616 = vrcp.pop %v614
    %v617 = vmul.f32 1.0, %v616
    %v618 = vrcp.pop %v615
    %v619 = vmul.f32 1.0, %v618
    %620 = vrot.lane.b32.xlu0 %v617, 64
    %v621 = vpop.permute.xlu0 %620
    %622 = vrot.lane.b32.xlu0 %v619, 64
    %v623 = vpop.permute.xlu0 %622
    %v624 = vmul.f32 %v617, %v477
    %v625 = vmul.f32 %v619, %v478
    %v626 = vadd.f32 %v621, %v621
    %v627 = vadd.f32 %v623, %v623
    %v628 = vsub.f32 %v626, 1.0
    %v629 = vsub.f32 %v627, 1.0
    %v630 = vmul.f32 %v617, %v628
    %v631 = vmul.f32 %v619, %v629
    %634 = vrot.lane.b32.xlu0 %v630, 32
    %v635 = vpop.permute.xlu0 %634
    %636 = vrot.lane.b32.xlu0 %v631, 32
    %v637 = vpop.permute.xlu0 %636
    %v640 = vadd.f32 %v624, %v635
    %v641 = vadd.f32 %v625, %v637
    %v642 = vadd.f32 %v640, %v640
    %v643 = vadd.f32 %v641, %v641
    %v644 = vxor.u32 %v642, 2147483648
    %v645 = vxor.u32 %v643, 2147483648
    %v646 = vmul.f32 %v644, 1.442695
    %v647 = vpow.pop %v646
    %v648 = vmul.f32 %v645, 1.442695
    %v649 = vpow.pop %v648
    %v650 = vadd.f32 %v647, 1.0
    %v651 = vadd.f32 %v649, 1.0
    %v652 = vrcp.pop %v650
    %v653 = vmul.f32 1.0, %v652
    %v654 = vrcp.pop %v651
    %v655 = vmul.f32 1.0, %v654
    %v656 = vadd.f32 %v653, %v653
    %v657 = vadd.f32 %v655, %v655
    %v658 = vsub.f32 %v656, 1.0
    %v659 = vsub.f32 %v657, 1.0
    %662 = vrot.lane.b32.xlu0 %v658, 64
    %v663 = vpop.permute.xlu0 %662
    %664 = vrot.lane.b32.xlu0 %v659, 64
    %v665 = vpop.permute.xlu0 %664
    %v668 = vmul.f32 %v617, %v663
    %v669 = vmul.f32 %v619, %v665
    %671 = vrot.lane.b32.xlu0 %v668, 32
    %v672 = vpop.permute.xlu0 %671
    %s674 = scalar_lea.vmem [#allocation4], 16
    %675 = vst.msk [vmem:[%s674] sm:$0xff] %vm198, %v672
    %677 = vrot.lane.b32.xlu0 %v669, 32
    %v678 = vpop.permute.xlu0 %677
    %s680 = scalar_lea.vmem [#allocation5], 40
    %681 = vst.msk [vmem:[%s680] sm:$0xff] %vm198, %v678
    %s682 = scalar_lea.vmem [#allocation2], 24
    %v683 = vld [vmem:[%s682] sm:$0xff]
    %s684 = scalar_lea.vmem [#allocation3], 32
    %v685 = vld [vmem:[%s684] sm:$0xff]
    %v686 = vsel %vm198, %v672, 0
    %v688 = vsel %vm198, %v678, 0
    %690 = vmatprep.subr.mxu0 0.0
    %691 = vmatpush1.msra.mxu0 0.0
    %692 = vmatprep.subr.mxu0 0.0
    %693 = vmatpush1.msra.mxu0 0.0
    %694 = vmatprep.subr.mxu0 0.0
    %695 = vmatpush1.msra.mxu0 0.0
    %696 = vmatprep.subr.mxu0 0.0
    %697 = vmatpush1.msra.mxu0 0.0
    %698 = vmatprep.subr.mxu0 0.0
    %699 = vmatpush1.msra.mxu0 0.0
    %700 = vmatprep.subr.mxu0 0.0
    %701 = vmatpush1.msra.mxu0 0.0
    %702 = vmatprep.subr.mxu0 0.0
    %703 = vmatpush1.msra.mxu0 0.0
    %704 = vmatprep.subr.mxu0 0.0
    %705 = vmatpush1.msra.mxu0 0.0
    %706 = vmatprep.subr.mxu0 0.0
    %707 = vmatpush1.msra.mxu0 0.0
    %708 = vmatprep.subr.mxu0 0.0
    %709 = vmatpush1.msra.mxu0 0.0
    %710 = vmatprep.subr.mxu0 0.0
    %711 = vmatpush1.msra.mxu0 0.0
    %712 = vmatprep.subr.mxu0 0.0
    %713 = vmatpush1.msra.mxu0 0.0
    %714 = vmatprep.subr.mxu0 %v194
    %715 = vmatpush1.msra.mxu0 %v193
    %716 = vmatprep.subr.mxu0 %v192
    %717 = vmatpush1.msra.mxu0 %v191
    %718 = vmatprep.subr.mxu0 %v190
    %719 = vmatpush1.msra.mxu0 %v189
    %720 = vmatprep.subr.mxu0 %v188
    %721 = vmatpush1.msra.mxu0 %v187
    %722 = vmatprep.subr.mxu0 0.0
    %723 = vmatpush2.msra.mxu0 0.0
    %724 = vmatprep.subr.mxu0 0.0
    %725 = vmatpush2.msra.mxu0 0.0
    %726 = vmatprep.subr.mxu0 0.0
    %727 = vmatpush2.msra.mxu0 0.0
    %728 = vmatprep.subr.mxu0 0.0
    %729 = vmatpush2.msra.mxu0 0.0
    %730 = vmatprep.subr.mxu0 0.0
    %731 = vmatpush2.msra.mxu0 0.0
    %732 = vmatprep.subr.mxu0 0.0
    %733 = vmatpush2.msra.mxu0 0.0
    %734 = vmatprep.subr.mxu0 0.0
    %735 = vmatpush2.msra.mxu0 0.0
    %736 = vmatprep.subr.mxu0 0.0
    %737 = vmatpush2.msra.mxu0 0.0
    %738 = vmatprep.subr.mxu0 0.0
    %739 = vmatpush2.msra.mxu0 0.0
    %740 = vmatprep.subr.mxu0 0.0
    %741 = vmatpush2.msra.mxu0 0.0
    %742 = vmatprep.subr.mxu0 0.0
    %743 = vmatpush2.msra.mxu0 0.0
    %744 = vmatprep.subr.mxu0 0.0
    %745 = vmatpush2.msra.mxu0 0.0
    %746 = vmatprep.subr.mxu0 0.0
    %747 = vmatpush2.msra.mxu0 0.0
    %748 = vmatprep.subr.mxu0 0.0
    %749 = vmatpush2.msra.mxu0 0.0
    %750 = vmatprep.subr.mxu0 0.0
    %751 = vmatpush2.msra.mxu0 0.0
    %752 = vmatprep.subr.mxu0 0.0
    %753 = vmatpush2.msra.mxu0 0.0
    %754 = vmatprep.mubr.f32.mxu0 0.0
    %755 = vmatmul.mubr.f32.gmra.mxu0 %v686
    %v756 = vpop.f32.mrf.mxu0
    %v757 = vadd.f32 0.0, %v756
    %v758 = vpop.f32.mrf.mxu0
    %v759 = vadd.f32 0.0, %v758
    %760 = vmatprep.mubr.f32.mxu0 0.0
    %761 = vmatmul.mubr.f32.gmra.mxu0 %v688
    %v762 = vpop.f32.mrf.mxu0
    %v763 = vadd.f32 0.0, %v762
    %v764 = vpop.f32.mrf.mxu0
    %v765 = vadd.f32 0.0, %v764
    %766 = vdwg.mxu0
    %v767 = vsel %vm65, %v757, %v759
    %v768 = vsel %vm66, %v763, %v765
    %v769 = vadd.f32 %v683, %v767
    %v770 = vadd.f32 %v685, %v768
    %v771 = vxor.u32 %v769, 2147483648
    %v772 = vxor.u32 %v770, 2147483648
    %v773 = vmul.f32 %v771, 1.442695
    %v774 = vpow.pop %v773
    %v775 = vmul.f32 %v772, 1.442695
    %v776 = vpow.pop %v775
    %v777 = vadd.f32 %v774, 1.0
    %v778 = vadd.f32 %v776, 1.0
    %v779 = vrcp.pop %v777
    %v780 = vmul.f32 1.0, %v779
    %v781 = vrcp.pop %v778
    %v782 = vmul.f32 1.0, %v781
    %783 = vrot.lane.b32.xlu0 %v780, 64
    %v784 = vpop.permute.xlu0 %783
    %785 = vrot.lane.b32.xlu0 %v782, 64
    %v786 = vpop.permute.xlu0 %785
    %v787 = vmul.f32 %v780, %v640
    %v788 = vmul.f32 %v782, %v641
    %v789 = vadd.f32 %v784, %v784
    %v790 = vadd.f32 %v786, %v786
    %v791 = vsub.f32 %v789, 1.0
    %v792 = vsub.f32 %v790, 1.0
    %v793 = vmul.f32 %v780, %v791
    %v794 = vmul.f32 %v782, %v792
    %797 = vrot.lane.b32.xlu0 %v793, 32
    %v798 = vpop.permute.xlu0 %797
    %799 = vrot.lane.b32.xlu0 %v794, 32
    %v800 = vpop.permute.xlu0 %799
    %v803 = vadd.f32 %v787, %v798
    %v804 = vadd.f32 %v788, %v800
    %v805 = vadd.f32 %v803, %v803
    %v806 = vadd.f32 %v804, %v804
    %v807 = vxor.u32 %v805, 2147483648
    %v808 = vxor.u32 %v806, 2147483648
    %v809 = vmul.f32 %v807, 1.442695
    %v810 = vpow.pop %v809
    %v811 = vmul.f32 %v808, 1.442695
    %v812 = vpow.pop %v811
    %v813 = vadd.f32 %v810, 1.0
    %v814 = vadd.f32 %v812, 1.0
    %v815 = vrcp.pop %v813
    %v816 = vmul.f32 1.0, %v815
    %v817 = vrcp.pop %v814
    %v818 = vmul.f32 1.0, %v817
    %v819 = vadd.f32 %v816, %v816
    %v820 = vadd.f32 %v818, %v818
    %v821 = vsub.f32 %v819, 1.0
    %v822 = vsub.f32 %v820, 1.0
    %825 = vrot.lane.b32.xlu0 %v821, 64
    %v826 = vpop.permute.xlu0 %825
    %827 = vrot.lane.b32.xlu0 %v822, 64
    %v828 = vpop.permute.xlu0 %827
    %v831 = vmul.f32 %v780, %v826
    %v832 = vmul.f32 %v782, %v828
    %834 = vrot.lane.b32.xlu0 %v831, 32
    %v835 = vpop.permute.xlu0 %834
    %s837 = scalar_lea.vmem [#allocation4], 24
    %838 = vst.msk [vmem:[%s837] sm:$0xff] %vm198, %v835
    %840 = vrot.lane.b32.xlu0 %v832, 32
    %v841 = vpop.permute.xlu0 %840
    %s843 = scalar_lea.vmem [#allocation5], 32
    %844 = vst.msk [vmem:[%s843] sm:$0xff] %vm198, %v841
    %s845 = scalar_lea.vmem [#allocation2], 32
    %v846 = vld [vmem:[%s845] sm:$0xff]
    %s847 = scalar_lea.vmem [#allocation3], 24
    %v848 = vld [vmem:[%s847] sm:$0xff]
    %v849 = vsel %vm198, %v835, 0
    %v851 = vsel %vm198, %v841, 0
    %853 = vmatprep.subr.mxu0 0.0
    %854 = vmatpush1.msra.mxu0 0.0
    %855 = vmatprep.subr.mxu0 0.0
    %856 = vmatpush1.msra.mxu0 0.0
    %857 = vmatprep.subr.mxu0 0.0
    %858 = vmatpush1.msra.mxu0 0.0
    %859 = vmatprep.subr.mxu0 0.0
    %860 = vmatpush1.msra.mxu0 0.0
    %861 = vmatprep.subr.mxu0 0.0
    %862 = vmatpush1.msra.mxu0 0.0
    %863 = vmatprep.subr.mxu0 0.0
    %864 = vmatpush1.msra.mxu0 0.0
    %865 = vmatprep.subr.mxu0 0.0
    %866 = vmatpush1.msra.mxu0 0.0
    %867 = vmatprep.subr.mxu0 0.0
    %868 = vmatpush1.msra.mxu0 0.0
    %869 = vmatprep.subr.mxu0 0.0
    %870 = vmatpush1.msra.mxu0 0.0
    %871 = vmatprep.subr.mxu0 0.0
    %872 = vmatpush1.msra.mxu0 0.0
    %873 = vmatprep.subr.mxu0 0.0
    %874 = vmatpush1.msra.mxu0 0.0
    %875 = vmatprep.subr.mxu0 0.0
    %876 = vmatpush1.msra.mxu0 0.0
    %877 = vmatprep.subr.mxu0 %v194
    %878 = vmatpush1.msra.mxu0 %v193
    %879 = vmatprep.subr.mxu0 %v192
    %880 = vmatpush1.msra.mxu0 %v191
    %881 = vmatprep.subr.mxu0 %v190
    %882 = vmatpush1.msra.mxu0 %v189
    %883 = vmatprep.subr.mxu0 %v188
    %884 = vmatpush1.msra.mxu0 %v187
    %885 = vmatprep.subr.mxu0 0.0
    %886 = vmatpush2.msra.mxu0 0.0
    %887 = vmatprep.subr.mxu0 0.0
    %888 = vmatpush2.msra.mxu0 0.0
    %889 = vmatprep.subr.mxu0 0.0
    %890 = vmatpush2.msra.mxu0 0.0
    %891 = vmatprep.subr.mxu0 0.0
    %892 = vmatpush2.msra.mxu0 0.0
    %893 = vmatprep.subr.mxu0 0.0
    %894 = vmatpush2.msra.mxu0 0.0
    %895 = vmatprep.subr.mxu0 0.0
    %896 = vmatpush2.msra.mxu0 0.0
    %897 = vmatprep.subr.mxu0 0.0
    %898 = vmatpush2.msra.mxu0 0.0
    %899 = vmatprep.subr.mxu0 0.0
    %900 = vmatpush2.msra.mxu0 0.0
    %901 = vmatprep.subr.mxu0 0.0
    %902 = vmatpush2.msra.mxu0 0.0
    %903 = vmatprep.subr.mxu0 0.0
    %904 = vmatpush2.msra.mxu0 0.0
    %905 = vmatprep.subr.mxu0 0.0
    %906 = vmatpush2.msra.mxu0 0.0
    %907 = vmatprep.subr.mxu0 0.0
    %908 = vmatpush2.msra.mxu0 0.0
    %909 = vmatprep.subr.mxu0 0.0
    %910 = vmatpush2.msra.mxu0 0.0
    %911 = vmatprep.subr.mxu0 0.0
    %912 = vmatpush2.msra.mxu0 0.0
    %913 = vmatprep.subr.mxu0 0.0
    %914 = vmatpush2.msra.mxu0 0.0
    %915 = vmatprep.subr.mxu0 0.0
    %916 = vmatpush2.msra.mxu0 0.0
    %917 = vmatprep.mubr.f32.mxu0 0.0
    %918 = vmatmul.mubr.f32.gmra.mxu0 %v849
    %v919 = vpop.f32.mrf.mxu0
    %v920 = vadd.f32 0.0, %v919
    %v921 = vpop.f32.mrf.mxu0
    %v922 = vadd.f32 0.0, %v921
    %923 = vmatprep.mubr.f32.mxu0 0.0
    %924 = vmatmul.mubr.f32.gmra.mxu0 %v851
    %v925 = vpop.f32.mrf.mxu0
    %v926 = vadd.f32 0.0, %v925
    %v927 = vpop.f32.mrf.mxu0
    %v928 = vadd.f32 0.0, %v927
    %929 = vdwg.mxu0
    %v930 = vsel %vm65, %v920, %v922
    %v931 = vsel %vm66, %v926, %v928
    %v932 = vadd.f32 %v846, %v930
    %v933 = vadd.f32 %v848, %v931
    %v934 = vxor.u32 %v932, 2147483648
    %v935 = vxor.u32 %v933, 2147483648
    %v936 = vmul.f32 %v934, 1.442695
    %v937 = vpow.pop %v936
    %v938 = vmul.f32 %v935, 1.442695
    %v939 = vpow.pop %v938
    %v940 = vadd.f32 %v937, 1.0
    %v941 = vadd.f32 %v939, 1.0
    %v942 = vrcp.pop %v940
    %v943 = vmul.f32 1.0, %v942
    %v944 = vrcp.pop %v941
    %v945 = vmul.f32 1.0, %v944
    %946 = vrot.lane.b32.xlu0 %v943, 64
    %v947 = vpop.permute.xlu0 %946
    %948 = vrot.lane.b32.xlu0 %v945, 64
    %v949 = vpop.permute.xlu0 %948
    %v950 = vmul.f32 %v943, %v803
    %v951 = vmul.f32 %v945, %v804
    %v952 = vadd.f32 %v947, %v947
    %v953 = vadd.f32 %v949, %v949
    %v954 = vsub.f32 %v952, 1.0
    %v955 = vsub.f32 %v953, 1.0
    %v956 = vmul.f32 %v943, %v954
    %v957 = vmul.f32 %v945, %v955
    %960 = vrot.lane.b32.xlu0 %v956, 32
    %v961 = vpop.permute.xlu0 %960
    %962 = vrot.lane.b32.xlu0 %v957, 32
    %v963 = vpop.permute.xlu0 %962
    %v966 = vadd.f32 %v950, %v961
    %v967 = vadd.f32 %v951, %v963
    %v968 = vadd.f32 %v966, %v966
    %v969 = vadd.f32 %v967, %v967
    %v970 = vxor.u32 %v968, 2147483648
    %v971 = vxor.u32 %v969, 2147483648
    %v972 = vmul.f32 %v970, 1.442695
    %v973 = vpow.pop %v972
    %v974 = vmul.f32 %v971, 1.442695
    %v975 = vpow.pop %v974
    %v976 = vadd.f32 %v973, 1.0
    %v977 = vadd.f32 %v975, 1.0
    %v978 = vrcp.pop %v976
    %v979 = vmul.f32 1.0, %v978
    %v980 = vrcp.pop %v977
    %v981 = vmul.f32 1.0, %v980
    %v982 = vadd.f32 %v979, %v979
    %v983 = vadd.f32 %v981, %v981
    %v984 = vsub.f32 %v982, 1.0
    %v985 = vsub.f32 %v983, 1.0
    %988 = vrot.lane.b32.xlu0 %v984, 64
    %v989 = vpop.permute.xlu0 %988
    %990 = vrot.lane.b32.xlu0 %v985, 64
    %v991 = vpop.permute.xlu0 %990
    %v994 = vmul.f32 %v943, %v989
    %v995 = vmul.f32 %v945, %v991
    %997 = vrot.lane.b32.xlu0 %v994, 32
    %v998 = vpop.permute.xlu0 %997
    %s1000 = scalar_lea.vmem [#allocation4], 32
    %1001 = vst.msk [vmem:[%s1000] sm:$0xff] %vm198, %v998
    %1003 = vrot.lane.b32.xlu0 %v995, 32
    %v1004 = vpop.permute.xlu0 %1003
    %s1006 = scalar_lea.vmem [#allocation5], 24
    %1007 = vst.msk [vmem:[%s1006] sm:$0xff] %vm198, %v1004
    %s1008 = scalar_lea.vmem [#allocation2], 40
    %v1009 = vld [vmem:[%s1008] sm:$0xff]
    %s1010 = scalar_lea.vmem [#allocation3], 16
    %v1011 = vld [vmem:[%s1010] sm:$0xff]
    %v1012 = vsel %vm198, %v998, 0
    %v1014 = vsel %vm198, %v1004, 0
    %1016 = vmatprep.subr.mxu0 0.0
    %1017 = vmatpush1.msra.mxu0 0.0
    %1018 = vmatprep.subr.mxu0 0.0
    %1019 = vmatpush1.msra.mxu0 0.0
    %1020 = vmatprep.subr.mxu0 0.0
    %1021 = vmatpush1.msra.mxu0 0.0
    %1022 = vmatprep.subr.mxu0 0.0
    %1023 = vmatpush1.msra.mxu0 0.0
    %1024 = vmatprep.subr.mxu0 0.0
    %1025 = vmatpush1.msra.mxu0 0.0
    %1026 = vmatprep.subr.mxu0 0.0
    %1027 = vmatpush1.msra.mxu0 0.0
    %1028 = vmatprep.subr.mxu0 0.0
    %1029 = vmatpush1.msra.mxu0 0.0
    %1030 = vmatprep.subr.mxu0 0.0
    %1031 = vmatpush1.msra.mxu0 0.0
    %1032 = vmatprep.subr.mxu0 0.0
    %1033 = vmatpush1.msra.mxu0 0.0
    %1034 = vmatprep.subr.mxu0 0.0
    %1035 = vmatpush1.msra.mxu0 0.0
    %1036 = vmatprep.subr.mxu0 0.0
    %1037 = vmatpush1.msra.mxu0 0.0
    %1038 = vmatprep.subr.mxu0 0.0
    %1039 = vmatpush1.msra.mxu0 0.0
    %1040 = vmatprep.subr.mxu0 %v194
    %1041 = vmatpush1.msra.mxu0 %v193
    %1042 = vmatprep.subr.mxu0 %v192
    %1043 = vmatpush1.msra.mxu0 %v191
    %1044 = vmatprep.subr.mxu0 %v190
    %1045 = vmatpush1.msra.mxu0 %v189
    %1046 = vmatprep.subr.mxu0 %v188
    %1047 = vmatpush1.msra.mxu0 %v187
    %1048 = vmatprep.subr.mxu0 0.0
    %1049 = vmatpush2.msra.mxu0 0.0
    %1050 = vmatprep.subr.mxu0 0.0
    %1051 = vmatpush2.msra.mxu0 0.0
    %1052 = vmatprep.subr.mxu0 0.0
    %1053 = vmatpush2.msra.mxu0 0.0
    %1054 = vmatprep.subr.mxu0 0.0
    %1055 = vmatpush2.msra.mxu0 0.0
    %1056 = vmatprep.subr.mxu0 0.0
    %1057 = vmatpush2.msra.mxu0 0.0
    %1058 = vmatprep.subr.mxu0 0.0
    %1059 = vmatpush2.msra.mxu0 0.0
    %1060 = vmatprep.subr.mxu0 0.0
    %1061 = vmatpush2.msra.mxu0 0.0
    %1062 = vmatprep.subr.mxu0 0.0
    %1063 = vmatpush2.msra.mxu0 0.0
    %1064 = vmatprep.subr.mxu0 0.0
    %1065 = vmatpush2.msra.mxu0 0.0
    %1066 = vmatprep.subr.mxu0 0.0
    %1067 = vmatpush2.msra.mxu0 0.0
    %1068 = vmatprep.subr.mxu0 0.0
    %1069 = vmatpush2.msra.mxu0 0.0
    %1070 = vmatprep.subr.mxu0 0.0
    %1071 = vmatpush2.msra.mxu0 0.0
    %1072 = vmatprep.subr.mxu0 0.0
    %1073 = vmatpush2.msra.mxu0 0.0
    %1074 = vmatprep.subr.mxu0 0.0
    %1075 = vmatpush2.msra.mxu0 0.0
    %1076 = vmatprep.subr.mxu0 0.0
    %1077 = vmatpush2.msra.mxu0 0.0
    %1078 = vmatprep.subr.mxu0 0.0
    %1079 = vmatpush2.msra.mxu0 0.0
    %1080 = vmatprep.mubr.f32.mxu0 0.0
    %1081 = vmatmul.mubr.f32.gmra.mxu0 %v1012
    %v1082 = vpop.f32.mrf.mxu0
    %v1083 = vadd.f32 0.0, %v1082
    %v1084 = vpop.f32.mrf.mxu0
    %v1085 = vadd.f32 0.0, %v1084
    %1086 = vmatprep.mubr.f32.mxu0 0.0
    %1087 = vmatmul.mubr.f32.gmra.mxu0 %v1014
    %v1088 = vpop.f32.mrf.mxu0
    %v1089 = vadd.f32 0.0, %v1088
    %v1090 = vpop.f32.mrf.mxu0
    %v1091 = vadd.f32 0.0, %v1090
    %1092 = vdwg.mxu0
    %v1093 = vsel %vm65, %v1083, %v1085
    %v1094 = vsel %vm66, %v1089, %v1091
    %v1095 = vadd.f32 %v1009, %v1093
    %v1096 = vadd.f32 %v1011, %v1094
    %v1097 = vxor.u32 %v1095, 2147483648
    %v1098 = vxor.u32 %v1096, 2147483648
    %v1099 = vmul.f32 %v1097, 1.442695
    %v1100 = vpow.pop %v1099
    %v1101 = vmul.f32 %v1098, 1.442695
    %v1102 = vpow.pop %v1101
    %v1103 = vadd.f32 %v1100, 1.0
    %v1104 = vadd.f32 %v1102, 1.0
    %v1105 = vrcp.pop %v1103
    %v1106 = vmul.f32 1.0, %v1105
    %v1107 = vrcp.pop %v1104
    %v1108 = vmul.f32 1.0, %v1107
    %1109 = vrot.lane.b32.xlu0 %v1106, 64
    %v1110 = vpop.permute.xlu0 %1109
    %1111 = vrot.lane.b32.xlu0 %v1108, 64
    %v1112 = vpop.permute.xlu0 %1111
    %v1113 = vmul.f32 %v1106, %v966
    %v1114 = vmul.f32 %v1108, %v967
    %v1115 = vadd.f32 %v1110, %v1110
    %v1116 = vadd.f32 %v1112, %v1112
    %v1117 = vsub.f32 %v1115, 1.0
    %v1118 = vsub.f32 %v1116, 1.0
    %v1119 = vmul.f32 %v1106, %v1117
    %v1120 = vmul.f32 %v1108, %v1118
    %1123 = vrot.lane.b32.xlu0 %v1119, 32
    %v1124 = vpop.permute.xlu0 %1123
    %1125 = vrot.lane.b32.xlu0 %v1120, 32
    %v1126 = vpop.permute.xlu0 %1125
    %v1129 = vadd.f32 %v1113, %v1124
    %v1130 = vadd.f32 %v1114, %v1126
    %v1131 = vadd.f32 %v1129, %v1129
    %v1132 = vadd.f32 %v1130, %v1130
    %v1133 = vxor.u32 %v1131, 2147483648
    %v1134 = vxor.u32 %v1132, 2147483648
    %v1135 = vmul.f32 %v1133, 1.442695
    %v1136 = vpow.pop %v1135
    %v1137 = vmul.f32 %v1134, 1.442695
    %v1138 = vpow.pop %v1137
    %v1139 = vadd.f32 %v1136, 1.0
    %v1140 = vadd.f32 %v1138, 1.0
    %v1141 = vrcp.pop %v1139
    %v1142 = vmul.f32 1.0, %v1141
    %v1143 = vrcp.pop %v1140
    %v1144 = vmul.f32 1.0, %v1143
    %v1145 = vadd.f32 %v1142, %v1142
    %v1146 = vadd.f32 %v1144, %v1144
    %v1147 = vsub.f32 %v1145, 1.0
    %v1148 = vsub.f32 %v1146, 1.0
    %1151 = vrot.lane.b32.xlu0 %v1147, 64
    %v1152 = vpop.permute.xlu0 %1151
    %1153 = vrot.lane.b32.xlu0 %v1148, 64
    %v1154 = vpop.permute.xlu0 %1153
    %v1157 = vmul.f32 %v1106, %v1152
    %v1158 = vmul.f32 %v1108, %v1154
    %1160 = vrot.lane.b32.xlu0 %v1157, 32
    %v1161 = vpop.permute.xlu0 %1160
    %s1163 = scalar_lea.vmem [#allocation4], 40
    %1164 = vst.msk [vmem:[%s1163] sm:$0xff] %vm198, %v1161
    %1166 = vrot.lane.b32.xlu0 %v1158, 32
    %v1167 = vpop.permute.xlu0 %1166
    %s1169 = scalar_lea.vmem [#allocation5], 16
    %1170 = vst.msk [vmem:[%s1169] sm:$0xff] %vm198, %v1167
    %s1171 = scalar_lea.vmem [#allocation2], 48
    %v1172 = vld [vmem:[%s1171] sm:$0xff]
    %s1173 = scalar_lea.vmem [#allocation3], 8
    %v1174 = vld [vmem:[%s1173] sm:$0xff]
    %v1175 = vsel %vm198, %v1161, 0
    %v1177 = vsel %vm198, %v1167, 0
    %1179 = vmatprep.subr.mxu0 0.0
    %1180 = vmatpush1.msra.mxu0 0.0
    %1181 = vmatprep.subr.mxu0 0.0
    %1182 = vmatpush1.msra.mxu0 0.0
    %1183 = vmatprep.subr.mxu0 0.0
    %1184 = vmatpush1.msra.mxu0 0.0
    %1185 = vmatprep.subr.mxu0 0.0
    %1186 = vmatpush1.msra.mxu0 0.0
    %1187 = vmatprep.subr.mxu0 0.0
    %1188 = vmatpush1.msra.mxu0 0.0
    %1189 = vmatprep.subr.mxu0 0.0
    %1190 = vmatpush1.msra.mxu0 0.0
    %1191 = vmatprep.subr.mxu0 0.0
    %1192 = vmatpush1.msra.mxu0 0.0
    %1193 = vmatprep.subr.mxu0 0.0
    %1194 = vmatpush1.msra.mxu0 0.0
    %1195 = vmatprep.subr.mxu0 0.0
    %1196 = vmatpush1.msra.mxu0 0.0
    %1197 = vmatprep.subr.mxu0 0.0
    %1198 = vmatpush1.msra.mxu0 0.0
    %1199 = vmatprep.subr.mxu0 0.0
    %1200 = vmatpush1.msra.mxu0 0.0
    %1201 = vmatprep.subr.mxu0 0.0
    %1202 = vmatpush1.msra.mxu0 0.0
    %1203 = vmatprep.subr.mxu0 %v194
    %1204 = vmatpush1.msra.mxu0 %v193
    %1205 = vmatprep.subr.mxu0 %v192
    %1206 = vmatpush1.msra.mxu0 %v191
    %1207 = vmatprep.subr.mxu0 %v190
    %1208 = vmatpush1.msra.mxu0 %v189
    %1209 = vmatprep.subr.mxu0 %v188
    %1210 = vmatpush1.msra.mxu0 %v187
    %1211 = vmatprep.subr.mxu0 0.0
    %1212 = vmatpush2.msra.mxu0 0.0
    %1213 = vmatprep.subr.mxu0 0.0
    %1214 = vmatpush2.msra.mxu0 0.0
    %1215 = vmatprep.subr.mxu0 0.0
    %1216 = vmatpush2.msra.mxu0 0.0
    %1217 = vmatprep.subr.mxu0 0.0
    %1218 = vmatpush2.msra.mxu0 0.0
    %1219 = vmatprep.subr.mxu0 0.0
    %1220 = vmatpush2.msra.mxu0 0.0
    %1221 = vmatprep.subr.mxu0 0.0
    %1222 = vmatpush2.msra.mxu0 0.0
    %1223 = vmatprep.subr.mxu0 0.0
    %1224 = vmatpush2.msra.mxu0 0.0
    %1225 = vmatprep.subr.mxu0 0.0
    %1226 = vmatpush2.msra.mxu0 0.0
    %1227 = vmatprep.subr.mxu0 0.0
    %1228 = vmatpush2.msra.mxu0 0.0
    %1229 = vmatprep.subr.mxu0 0.0
    %1230 = vmatpush2.msra.mxu0 0.0
    %1231 = vmatprep.subr.mxu0 0.0
    %1232 = vmatpush2.msra.mxu0 0.0
    %1233 = vmatprep.subr.mxu0 0.0
    %1234 = vmatpush2.msra.mxu0 0.0
    %1235 = vmatprep.subr.mxu0 0.0
    %1236 = vmatpush2.msra.mxu0 0.0
    %1237 = vmatprep.subr.mxu0 0.0
    %1238 = vmatpush2.msra.mxu0 0.0
    %1239 = vmatprep.subr.mxu0 0.0
    %1240 = vmatpush2.msra.mxu0 0.0
    %1241 = vmatprep.subr.mxu0 0.0
    %1242 = vmatpush2.msra.mxu0 0.0
    %1243 = vmatprep.mubr.f32.mxu0 0.0
    %1244 = vmatmul.mubr.f32.gmra.mxu0 %v1175
    %v1245 = vpop.f32.mrf.mxu0
    %v1246 = vadd.f32 0.0, %v1245
    %v1247 = vpop.f32.mrf.mxu0
    %v1248 = vadd.f32 0.0, %v1247
    %1249 = vmatprep.mubr.f32.mxu0 0.0
    %1250 = vmatmul.mubr.f32.gmra.mxu0 %v1177
    %v1251 = vpop.f32.mrf.mxu0
    %v1252 = vadd.f32 0.0, %v1251
    %v1253 = vpop.f32.mrf.mxu0
    %v1254 = vadd.f32 0.0, %v1253
    %1255 = vdwg.mxu0
    %v1256 = vsel %vm65, %v1246, %v1248
    %v1257 = vsel %vm66, %v1252, %v1254
    %v1258 = vadd.f32 %v1172, %v1256
    %v1259 = vadd.f32 %v1174, %v1257
    %v1260 = vxor.u32 %v1258, 2147483648
    %v1261 = vxor.u32 %v1259, 2147483648
    %v1262 = vmul.f32 %v1260, 1.442695
    %v1263 = vpow.pop %v1262
    %v1264 = vmul.f32 %v1261, 1.442695
    %v1265 = vpow.pop %v1264
    %v1266 = vadd.f32 %v1263, 1.0
    %v1267 = vadd.f32 %v1265, 1.0
    %v1268 = vrcp.pop %v1266
    %v1269 = vmul.f32 1.0, %v1268
    %v1270 = vrcp.pop %v1267
    %v1271 = vmul.f32 1.0, %v1270
    %1272 = vrot.lane.b32.xlu0 %v1269, 64
    %v1273 = vpop.permute.xlu0 %1272
    %1274 = vrot.lane.b32.xlu0 %v1271, 64
    %v1275 = vpop.permute.xlu0 %1274
    %v1276 = vmul.f32 %v1269, %v1129
    %v1277 = vmul.f32 %v1271, %v1130
    %v1278 = vadd.f32 %v1273, %v1273
    %v1279 = vadd.f32 %v1275, %v1275
    %v1280 = vsub.f32 %v1278, 1.0
    %v1281 = vsub.f32 %v1279, 1.0
    %v1282 = vmul.f32 %v1269, %v1280
    %v1283 = vmul.f32 %v1271, %v1281
    %1286 = vrot.lane.b32.xlu0 %v1282, 32
    %v1287 = vpop.permute.xlu0 %1286
    %1288 = vrot.lane.b32.xlu0 %v1283, 32
    %v1289 = vpop.permute.xlu0 %1288
    %v1292 = vadd.f32 %v1276, %v1287
    %v1293 = vadd.f32 %v1277, %v1289
    %v1294 = vadd.f32 %v1292, %v1292
    %v1295 = vadd.f32 %v1293, %v1293
    %v1296 = vxor.u32 %v1294, 2147483648
    %v1297 = vxor.u32 %v1295, 2147483648
    %v1298 = vmul.f32 %v1296, 1.442695
    %v1299 = vpow.pop %v1298
    %v1300 = vmul.f32 %v1297, 1.442695
    %v1301 = vpow.pop %v1300
    %v1302 = vadd.f32 %v1299, 1.0
    %v1303 = vadd.f32 %v1301, 1.0
    %v1304 = vrcp.pop %v1302
    %v1305 = vmul.f32 1.0, %v1304
    %v1306 = vrcp.pop %v1303
    %v1307 = vmul.f32 1.0, %v1306
    %v1308 = vadd.f32 %v1305, %v1305
    %v1309 = vadd.f32 %v1307, %v1307
    %v1310 = vsub.f32 %v1308, 1.0
    %v1311 = vsub.f32 %v1309, 1.0
    %1314 = vrot.lane.b32.xlu0 %v1310, 64
    %v1315 = vpop.permute.xlu0 %1314
    %1316 = vrot.lane.b32.xlu0 %v1311, 64
    %v1317 = vpop.permute.xlu0 %1316
    %v1320 = vmul.f32 %v1269, %v1315
    %v1321 = vmul.f32 %v1271, %v1317
    %1323 = vrot.lane.b32.xlu0 %v1320, 32
    %v1324 = vpop.permute.xlu0 %1323
    %s1326 = scalar_lea.vmem [#allocation4], 48
    %1327 = vst.msk [vmem:[%s1326] sm:$0xff] %vm198, %v1324
    %1329 = vrot.lane.b32.xlu0 %v1321, 32
    %v1330 = vpop.permute.xlu0 %1329
    %s1332 = scalar_lea.vmem [#allocation5], 8
    %1333 = vst.msk [vmem:[%s1332] sm:$0xff] %vm198, %v1330
    %s1334 = scalar_lea.vmem [#allocation2], 56
    %v1335 = vld [vmem:[%s1334] sm:$0xff]
    %v1336 = vld [vmem:[#allocation3] sm:$0xff]
    %v1337 = vsel %vm198, %v1324, 0
    %v1339 = vsel %vm198, %v1330, 0
    %1341 = vmatprep.subr.mxu0 0.0
    %1342 = vmatpush1.msra.mxu0 0.0
    %1343 = vmatprep.subr.mxu0 0.0
    %1344 = vmatpush1.msra.mxu0 0.0
    %1345 = vmatprep.subr.mxu0 0.0
    %1346 = vmatpush1.msra.mxu0 0.0
    %1347 = vmatprep.subr.mxu0 0.0
    %1348 = vmatpush1.msra.mxu0 0.0
    %1349 = vmatprep.subr.mxu0 0.0
    %1350 = vmatpush1.msra.mxu0 0.0
    %1351 = vmatprep.subr.mxu0 0.0
    %1352 = vmatpush1.msra.mxu0 0.0
    %1353 = vmatprep.subr.mxu0 0.0
    %1354 = vmatpush1.msra.mxu0 0.0
    %1355 = vmatprep.subr.mxu0 0.0
    %1356 = vmatpush1.msra.mxu0 0.0
    %1357 = vmatprep.subr.mxu0 0.0
    %1358 = vmatpush1.msra.mxu0 0.0
    %1359 = vmatprep.subr.mxu0 0.0
    %1360 = vmatpush1.msra.mxu0 0.0
    %1361 = vmatprep.subr.mxu0 0.0
    %1362 = vmatpush1.msra.mxu0 0.0
    %1363 = vmatprep.subr.mxu0 0.0
    %1364 = vmatpush1.msra.mxu0 0.0
    %1365 = vmatprep.subr.mxu0 %v194
    %1366 = vmatpush1.msra.mxu0 %v193
    %1367 = vmatprep.subr.mxu0 %v192
    %1368 = vmatpush1.msra.mxu0 %v191
    %1369 = vmatprep.subr.mxu0 %v190
    %1370 = vmatpush1.msra.mxu0 %v189
    %1371 = vmatprep.subr.mxu0 %v188
    %1372 = vmatpush1.msra.mxu0 %v187
    %1373 = vmatprep.subr.mxu0 0.0
    %1374 = vmatpush2.msra.mxu0 0.0
    %1375 = vmatprep.subr.mxu0 0.0
    %1376 = vmatpush2.msra.mxu0 0.0
    %1377 = vmatprep.subr.mxu0 0.0
    %1378 = vmatpush2.msra.mxu0 0.0
    %1379 = vmatprep.subr.mxu0 0.0
    %1380 = vmatpush2.msra.mxu0 0.0
    %1381 = vmatprep.subr.mxu0 0.0
    %1382 = vmatpush2.msra.mxu0 0.0
    %1383 = vmatprep.subr.mxu0 0.0
    %1384 = vmatpush2.msra.mxu0 0.0
    %1385 = vmatprep.subr.mxu0 0.0
    %1386 = vmatpush2.msra.mxu0 0.0
    %1387 = vmatprep.subr.mxu0 0.0
    %1388 = vmatpush2.msra.mxu0 0.0
    %1389 = vmatprep.subr.mxu0 0.0
    %1390 = vmatpush2.msra.mxu0 0.0
    %1391 = vmatprep.subr.mxu0 0.0
    %1392 = vmatpush2.msra.mxu0 0.0
    %1393 = vmatprep.subr.mxu0 0.0
    %1394 = vmatpush2.msra.mxu0 0.0
    %1395 = vmatprep.subr.mxu0 0.0
    %1396 = vmatpush2.msra.mxu0 0.0
    %1397 = vmatprep.subr.mxu0 0.0
    %1398 = vmatpush2.msra.mxu0 0.0
    %1399 = vmatprep.subr.mxu0 0.0
    %1400 = vmatpush2.msra.mxu0 0.0
    %1401 = vmatprep.subr.mxu0 0.0
    %1402 = vmatpush2.msra.mxu0 0.0
    %1403 = vmatprep.subr.mxu0 0.0
    %1404 = vmatpush2.msra.mxu0 0.0
    %1405 = vmatprep.mubr.f32.mxu0 0.0
    %1406 = vmatmul.mubr.f32.gmra.mxu0 %v1337
    %v1407 = vpop.f32.mrf.mxu0
    %v1408 = vadd.f32 0.0, %v1407
    %v1409 = vpop.f32.mrf.mxu0
    %v1410 = vadd.f32 0.0, %v1409
    %1411 = vmatprep.mubr.f32.mxu0 0.0
    %1412 = vmatmul.mubr.f32.gmra.mxu0 %v1339
    %v1413 = vpop.f32.mrf.mxu0
    %v1414 = vadd.f32 0.0, %v1413
    %v1415 = vpop.f32.mrf.mxu0
    %v1416 = vadd.f32 0.0, %v1415
    %1417 = vdwg.mxu0
    %v1418 = vsel %vm65, %v1408, %v1410
    %v1419 = vsel %vm66, %v1414, %v1416
    %v1420 = vadd.f32 %v1335, %v1418
    %v1421 = vadd.f32 %v1336, %v1419
    %v1422 = vxor.u32 %v1420, 2147483648
    %v1423 = vxor.u32 %v1421, 2147483648
    %v1424 = vmul.f32 %v1422, 1.442695
    %v1425 = vpow.pop %v1424
    %v1426 = vmul.f32 %v1423, 1.442695
    %v1427 = vpow.pop %v1426
    %v1428 = vadd.f32 %v1425, 1.0
    %v1429 = vadd.f32 %v1427, 1.0
    %v1430 = vrcp.pop %v1428
    %v1431 = vmul.f32 1.0, %v1430
    %v1432 = vrcp.pop %v1429
    %v1433 = vmul.f32 1.0, %v1432
    %1434 = vrot.lane.b32.xlu0 %v1431, 64
    %v1435 = vpop.permute.xlu0 %1434
    %1436 = vrot.lane.b32.xlu0 %v1433, 64
    %v1437 = vpop.permute.xlu0 %1436
    %v1438 = vmul.f32 %v1431, %v1292
    %v1439 = vmul.f32 %v1433, %v1293
    %v1440 = vadd.f32 %v1435, %v1435
    %v1441 = vadd.f32 %v1437, %v1437
    %v1442 = vsub.f32 %v1440, 1.0
    %v1443 = vsub.f32 %v1441, 1.0
    %v1444 = vmul.f32 %v1431, %v1442
    %v1445 = vmul.f32 %v1433, %v1443
    %1448 = vrot.lane.b32.xlu0 %v1444, 32
    %v1449 = vpop.permute.xlu0 %1448
    %1450 = vrot.lane.b32.xlu0 %v1445, 32
    %v1451 = vpop.permute.xlu0 %1450
    %v1454 = vadd.f32 %v1438, %v1449
    %v1455 = vadd.f32 %v1439, %v1451
    %v1456 = vadd.f32 %v1454, %v1454
    %v1457 = vadd.f32 %v1455, %v1455
    %v1458 = vxor.u32 %v1456, 2147483648
    %v1459 = vxor.u32 %v1457, 2147483648
    %v1460 = vmul.f32 %v1458, 1.442695
    %v1461 = vpow.pop %v1460
    %v1462 = vmul.f32 %v1459, 1.442695
    %v1463 = vpow.pop %v1462
    %v1464 = vadd.f32 %v1461, 1.0
    %v1465 = vadd.f32 %v1463, 1.0
    %v1466 = vrcp.pop %v1464
    %v1467 = vmul.f32 1.0, %v1466
    %v1468 = vrcp.pop %v1465
    %v1469 = vmul.f32 1.0, %v1468
    %v1470 = vadd.f32 %v1467, %v1467
    %v1471 = vadd.f32 %v1469, %v1469
    %v1472 = vsub.f32 %v1470, 1.0
    %v1473 = vsub.f32 %v1471, 1.0
    %1476 = vrot.lane.b32.xlu0 %v1472, 64
    %v1477 = vpop.permute.xlu0 %1476
    %1478 = vrot.lane.b32.xlu0 %v1473, 64
    %v1479 = vpop.permute.xlu0 %1478
    %v1482 = vmul.f32 %v1431, %v1477
    %v1483 = vmul.f32 %v1433, %v1479
    %1485 = vrot.lane.b32.xlu0 %v1482, 32
    %v1486 = vpop.permute.xlu0 %1485
    %s1488 = scalar_lea.vmem [#allocation4], 56
    %1489 = vst.msk [vmem:[%s1488] sm:$0xff] %vm198, %v1486
    %1491 = vrot.lane.b32.xlu0 %v1483, 32
    %v1492 = vpop.permute.xlu0 %1491
    %1494 = vst.msk [vmem:[#allocation5] sm:$0xff] %vm198, %v1492
    %v1495 = vld [vmem:[%s4] sm:$0xff]
    %v1496 = vld [vmem:[%s4 + $0x8] sm:$0xff]
    %v1497 = vld [vmem:[%s4 + $0x10] sm:$0xff]
    %v1498 = vld [vmem:[%s4 + $0x18] sm:$0xff]
    %v1499 = vld [vmem:[%s4 + $0x20] sm:$0xff]
    %v1500 = vld [vmem:[%s4 + $0x28] sm:$0xff]
    %v1501 = vld [vmem:[%s4 + $0x30] sm:$0xff]
    %v1502 = vld [vmem:[%s4 + $0x38] sm:$0xff]
    %v1503 = vld [vmem:[%s4 + $0x40] sm:$0xff]
    %v1504 = vld [vmem:[%s4 + $0x48] sm:$0xff]
    %v1505 = vld [vmem:[%s4 + $0x50] sm:$0xff]
    %v1506 = vld [vmem:[%s4 + $0x58] sm:$0xff]
    %v1507 = vld [vmem:[%s4 + $0x60] sm:$0xff]
    %v1508 = vld [vmem:[%s4 + $0x68] sm:$0xff]
    %v1509 = vld [vmem:[%s4 + $0x70] sm:$0xff]
    %v1510 = vld [vmem:[%s4 + $0x78] sm:$0xff]
    %v1511 = vld [vmem:[%s6] sm:$0x3]
    %v1512 = vld [vmem:[#allocation4] sm:$0xff]
    %v1513 = vld [vmem:[#allocation4 + $0x8] sm:$0xff]
    %v1514 = vld [vmem:[#allocation4 + $0x10] sm:$0xff]
    %v1515 = vld [vmem:[#allocation4 + $0x18] sm:$0xff]
    %v1516 = vld [vmem:[#allocation4 + $0x20] sm:$0xff]
    %v1517 = vld [vmem:[#allocation4 + $0x28] sm:$0xff]
    %v1518 = vld [vmem:[#allocation4 + $0x30] sm:$0xff]
    %v1519 = vld [vmem:[#allocation4 + $0x38] sm:$0xff]
    %v1520 = vld [vmem:[#allocation5] sm:$0xff]
    %v1521 = vld [vmem:[#allocation5 + $0x8] sm:$0xff]
    %v1522 = vld [vmem:[#allocation5 + $0x10] sm:$0xff]
    %v1523 = vld [vmem:[#allocation5 + $0x18] sm:$0xff]
    %v1524 = vld [vmem:[#allocation5 + $0x20] sm:$0xff]
    %v1525 = vld [vmem:[#allocation5 + $0x28] sm:$0xff]
    %v1526 = vld [vmem:[#allocation5 + $0x30] sm:$0xff]
    %v1527 = vld [vmem:[#allocation5 + $0x38] sm:$0xff]
    %v1529 = vsel %vm198, %v1520, 0
    %v1532 = vsel %vm198, %v1521, 0
    %v1535 = vsel %vm198, %v1522, 0
    %v1538 = vsel %vm198, %v1523, 0
    %v1541 = vsel %vm198, %v1524, 0
    %v1544 = vsel %vm198, %v1525, 0
    %v1547 = vsel %vm198, %v1526, 0
    %v1550 = vsel %vm198, %v1527, 0
    %1552 = vmatprep.subr.mxu0 0.0
    %1553 = vmatpush1.msra.mxu0 0.0
    %1554 = vmatprep.subr.mxu0 0.0
    %1555 = vmatpush1.msra.mxu0 0.0
    %1556 = vmatprep.subr.mxu0 0.0
    %1557 = vmatpush1.msra.mxu0 0.0
    %1558 = vmatprep.subr.mxu0 0.0
    %1559 = vmatpush1.msra.mxu0 0.0
    %1560 = vmatprep.subr.mxu0 0.0
    %1561 = vmatpush1.msra.mxu0 0.0
    %1562 = vmatprep.subr.mxu0 0.0
    %1563 = vmatpush1.msra.mxu0 0.0
    %1564 = vmatprep.subr.mxu0 0.0
    %1565 = vmatpush1.msra.mxu0 0.0
    %1566 = vmatprep.subr.mxu0 0.0
    %1567 = vmatpush1.msra.mxu0 0.0
    %1568 = vmatprep.subr.mxu0 0.0
    %1569 = vmatpush1.msra.mxu0 0.0
    %1570 = vmatprep.subr.mxu0 0.0
    %1571 = vmatpush1.msra.mxu0 0.0
    %1572 = vmatprep.subr.mxu0 0.0
    %1573 = vmatpush1.msra.mxu0 0.0
    %1574 = vmatprep.subr.mxu0 0.0
    %1575 = vmatpush1.msra.mxu0 0.0
    %1576 = vmatprep.subr.mxu0 %v1510
    %1577 = vmatpush1.msra.mxu0 %v1509
    %1578 = vmatprep.subr.mxu0 %v1508
    %1579 = vmatpush1.msra.mxu0 %v1507
    %1580 = vmatprep.subr.mxu0 %v1506
    %1581 = vmatpush1.msra.mxu0 %v1505
    %1582 = vmatprep.subr.mxu0 %v1504
    %1583 = vmatpush1.msra.mxu0 %v1503
    %1584 = vmatprep.subr.mxu0 0.0
    %1585 = vmatpush2.msra.mxu0 0.0
    %1586 = vmatprep.subr.mxu0 0.0
    %1587 = vmatpush2.msra.mxu0 0.0
    %1588 = vmatprep.subr.mxu0 0.0
    %1589 = vmatpush2.msra.mxu0 0.0
    %1590 = vmatprep.subr.mxu0 0.0
    %1591 = vmatpush2.msra.mxu0 0.0
    %1592 = vmatprep.subr.mxu0 0.0
    %1593 = vmatpush2.msra.mxu0 0.0
    %1594 = vmatprep.subr.mxu0 0.0
    %1595 = vmatpush2.msra.mxu0 0.0
    %1596 = vmatprep.subr.mxu0 0.0
    %1597 = vmatpush2.msra.mxu0 0.0
    %1598 = vmatprep.subr.mxu0 0.0
    %1599 = vmatpush2.msra.mxu0 0.0
    %1600 = vmatprep.subr.mxu0 0.0
    %1601 = vmatpush2.msra.mxu0 0.0
    %1602 = vmatprep.subr.mxu0 0.0
    %1603 = vmatpush2.msra.mxu0 0.0
    %1604 = vmatprep.subr.mxu0 0.0
    %1605 = vmatpush2.msra.mxu0 0.0
    %1606 = vmatprep.subr.mxu0 0.0
    %1607 = vmatpush2.msra.mxu0 0.0
    %1608 = vmatprep.subr.mxu0 0.0
    %1609 = vmatpush2.msra.mxu0 0.0
    %1610 = vmatprep.subr.mxu0 0.0
    %1611 = vmatpush2.msra.mxu0 0.0
    %1612 = vmatprep.subr.mxu0 0.0
    %1613 = vmatpush2.msra.mxu0 0.0
    %1614 = vmatprep.subr.mxu0 0.0
    %1615 = vmatpush2.msra.mxu0 0.0
    %1616 = vmatprep.mubr.f32.mxu0 0.0
    %1617 = vmatmul.mubr.f32.gmra.mxu0 %v1529
    %v1618 = vpop.f32.mrf.mxu0
    %v1619 = vadd.f32 0.0, %v1618
    %v1620 = vpop.f32.mrf.mxu0
    %v1621 = vadd.f32 0.0, %v1620
    %1622 = vmatprep.mubr.f32.mxu0 0.0
    %1623 = vmatmul.mubr.f32.gmra.mxu0 %v1532
    %v1624 = vpop.f32.mrf.mxu0
    %v1625 = vadd.f32 0.0, %v1624
    %v1626 = vpop.f32.mrf.mxu0
    %v1627 = vadd.f32 0.0, %v1626
    %1628 = vmatprep.mubr.f32.mxu0 0.0
    %1629 = vmatmul.mubr.f32.gmra.mxu0 %v1535
    %v1630 = vpop.f32.mrf.mxu0
    %v1631 = vadd.f32 0.0, %v1630
    %v1632 = vpop.f32.mrf.mxu0
    %v1633 = vadd.f32 0.0, %v1632
    %1634 = vmatprep.mubr.f32.mxu0 0.0
    %1635 = vmatmul.mubr.f32.gmra.mxu0 %v1538
    %v1636 = vpop.f32.mrf.mxu0
    %v1637 = vadd.f32 0.0, %v1636
    %v1638 = vpop.f32.mrf.mxu0
    %v1639 = vadd.f32 0.0, %v1638
    %1640 = vmatprep.mubr.f32.mxu0 0.0
    %1641 = vmatmul.mubr.f32.gmra.mxu0 %v1541
    %v1642 = vpop.f32.mrf.mxu0
    %v1643 = vadd.f32 0.0, %v1642
    %v1644 = vpop.f32.mrf.mxu0
    %v1645 = vadd.f32 0.0, %v1644
    %1646 = vmatprep.mubr.f32.mxu0 0.0
    %1647 = vmatmul.mubr.f32.gmra.mxu0 %v1544
    %v1648 = vpop.f32.mrf.mxu0
    %v1649 = vadd.f32 0.0, %v1648
    %v1650 = vpop.f32.mrf.mxu0
    %v1651 = vadd.f32 0.0, %v1650
    %1652 = vmatprep.mubr.f32.mxu0 0.0
    %1653 = vmatmul.mubr.f32.gmra.mxu0 %v1547
    %v1654 = vpop.f32.mrf.mxu0
    %v1655 = vadd.f32 0.0, %v1654
    %v1656 = vpop.f32.mrf.mxu0
    %v1657 = vadd.f32 0.0, %v1656
    %1658 = vmatprep.mubr.f32.mxu0 0.0
    %1659 = vmatmul.mubr.f32.gmra.mxu0 %v1550
    %v1660 = vpop.f32.mrf.mxu0
    %v1661 = vadd.f32 0.0, %v1660
    %v1662 = vpop.f32.mrf.mxu0
    %v1663 = vadd.f32 0.0, %v1662
    %1664 = vdwg.mxu0
    %v1666 = vsel %vm198, %v1512, 0
    %v1669 = vsel %vm198, %v1513, 0
    %v1672 = vsel %vm198, %v1514, 0
    %v1675 = vsel %vm198, %v1515, 0
    %v1678 = vsel %vm198, %v1516, 0
    %v1681 = vsel %vm198, %v1517, 0
    %v1684 = vsel %vm198, %v1518, 0
    %v1687 = vsel %vm198, %v1519, 0
    %1689 = vmatprep.subr.mxu0 0.0
    %1690 = vmatpush1.msra.mxu0 0.0
    %1691 = vmatprep.subr.mxu0 0.0
    %1692 = vmatpush1.msra.mxu0 0.0
    %1693 = vmatprep.subr.mxu0 0.0
    %1694 = vmatpush1.msra.mxu0 0.0
    %1695 = vmatprep.subr.mxu0 0.0
    %1696 = vmatpush1.msra.mxu0 0.0
    %1697 = vmatprep.subr.mxu0 0.0
    %1698 = vmatpush1.msra.mxu0 0.0
    %1699 = vmatprep.subr.mxu0 0.0
    %1700 = vmatpush1.msra.mxu0 0.0
    %1701 = vmatprep.subr.mxu0 0.0
    %1702 = vmatpush1.msra.mxu0 0.0
    %1703 = vmatprep.subr.mxu0 0.0
    %1704 = vmatpush1.msra.mxu0 0.0
    %1705 = vmatprep.subr.mxu0 0.0
    %1706 = vmatpush1.msra.mxu0 0.0
    %1707 = vmatprep.subr.mxu0 0.0
    %1708 = vmatpush1.msra.mxu0 0.0
    %1709 = vmatprep.subr.mxu0 0.0
    %1710 = vmatpush1.msra.mxu0 0.0
    %1711 = vmatprep.subr.mxu0 0.0
    %1712 = vmatpush1.msra.mxu0 0.0
    %1713 = vmatprep.subr.mxu0 %v1502
    %1714 = vmatpush1.msra.mxu0 %v1501
    %1715 = vmatprep.subr.mxu0 %v1500
    %1716 = vmatpush1.msra.mxu0 %v1499
    %1717 = vmatprep.subr.mxu0 %v1498
    %1718 = vmatpush1.msra.mxu0 %v1497
    %1719 = vmatprep.subr.mxu0 %v1496
    %1720 = vmatpush1.msra.mxu0 %v1495
    %1721 = vmatprep.subr.mxu0 0.0
    %1722 = vmatpush2.msra.mxu0 0.0
    %1723 = vmatprep.subr.mxu0 0.0
    %1724 = vmatpush2.msra.mxu0 0.0
    %1725 = vmatprep.subr.mxu0 0.0
    %1726 = vmatpush2.msra.mxu0 0.0
    %1727 = vmatprep.subr.mxu0 0.0
    %1728 = vmatpush2.msra.mxu0 0.0
    %1729 = vmatprep.subr.mxu0 0.0
    %1730 = vmatpush2.msra.mxu0 0.0
    %1731 = vmatprep.subr.mxu0 0.0
    %1732 = vmatpush2.msra.mxu0 0.0
    %1733 = vmatprep.subr.mxu0 0.0
    %1734 = vmatpush2.msra.mxu0 0.0
    %1735 = vmatprep.subr.mxu0 0.0
    %1736 = vmatpush2.msra.mxu0 0.0
    %1737 = vmatprep.subr.mxu0 0.0
    %1738 = vmatpush2.msra.mxu0 0.0
    %1739 = vmatprep.subr.mxu0 0.0
    %1740 = vmatpush2.msra.mxu0 0.0
    %1741 = vmatprep.subr.mxu0 0.0
    %1742 = vmatpush2.msra.mxu0 0.0
    %1743 = vmatprep.subr.mxu0 0.0
    %1744 = vmatpush2.msra.mxu0 0.0
    %1745 = vmatprep.subr.mxu0 0.0
    %1746 = vmatpush2.msra.mxu0 0.0
    %1747 = vmatprep.subr.mxu0 0.0
    %1748 = vmatpush2.msra.mxu0 0.0
    %1749 = vmatprep.subr.mxu0 0.0
    %1750 = vmatpush2.msra.mxu0 0.0
    %1751 = vmatprep.subr.mxu0 0.0
    %1752 = vmatpush2.msra.mxu0 0.0
    %1753 = vmatprep.mubr.f32.mxu0 0.0
    %1754 = vmatmul.mubr.f32.gmra.mxu0 %v1666
    %v1755 = vpop.f32.mrf.mxu0
    %v1756 = vadd.f32 %v1619, %v1755
    %v1757 = vpop.f32.mrf.mxu0
    %v1758 = vadd.f32 %v1621, %v1757
    %1759 = vmatprep.mubr.f32.mxu0 0.0
    %1760 = vmatmul.mubr.f32.gmra.mxu0 %v1669
    %v1761 = vpop.f32.mrf.mxu0
    %v1762 = vadd.f32 %v1625, %v1761
    %v1763 = vpop.f32.mrf.mxu0
    %v1764 = vadd.f32 %v1627, %v1763
    %1765 = vmatprep.mubr.f32.mxu0 0.0
    %1766 = vmatmul.mubr.f32.gmra.mxu0 %v1672
    %v1767 = vpop.f32.mrf.mxu0
    %v1768 = vadd.f32 %v1631, %v1767
    %v1769 = vpop.f32.mrf.mxu0
    %v1770 = vadd.f32 %v1633, %v1769
    %1771 = vmatprep.mubr.f32.mxu0 0.0
    %1772 = vmatmul.mubr.f32.gmra.mxu0 %v1675
    %v1773 = vpop.f32.mrf.mxu0
    %v1774 = vadd.f32 %v1637, %v1773
    %v1775 = vpop.f32.mrf.mxu0
    %v1776 = vadd.f32 %v1639, %v1775
    %1777 = vmatprep.mubr.f32.mxu0 0.0
    %1778 = vmatmul.mubr.f32.gmra.mxu0 %v1678
    %v1779 = vpop.f32.mrf.mxu0
    %v1780 = vadd.f32 %v1643, %v1779
    %v1781 = vpop.f32.mrf.mxu0
    %v1782 = vadd.f32 %v1645, %v1781
    %1783 = vmatprep.mubr.f32.mxu0 0.0
    %1784 = vmatmul.mubr.f32.gmra.mxu0 %v1681
    %v1785 = vpop.f32.mrf.mxu0
    %v1786 = vadd.f32 %v1649, %v1785
    %v1787 = vpop.f32.mrf.mxu0
    %v1788 = vadd.f32 %v1651, %v1787
    %1789 = vmatprep.mubr.f32.mxu0 0.0
    %1790 = vmatmul.mubr.f32.gmra.mxu0 %v1684
    %v1791 = vpop.f32.mrf.mxu0
    %v1792 = vadd.f32 %v1655, %v1791
    %v1793 = vpop.f32.mrf.mxu0
    %v1794 = vadd.f32 %v1657, %v1793
    %1795 = vmatprep.mubr.f32.mxu0 0.0
    %1796 = vmatmul.mubr.f32.gmra.mxu0 %v1687
    %v1797 = vpop.f32.mrf.mxu0
    %v1798 = vadd.f32 %v1661, %v1797
    %v1799 = vpop.f32.mrf.mxu0
    %v1800 = vadd.f32 %v1663, %v1799
    %1801 = vdwg.mxu0
    %v1803 = vlaneseq
    %v1804 = vshrl.u32 %v1803, 7
    %v1805 = vsub.s32 0, %v1804
    %v1806 = vrot.slane %v1511, %v1805
    %v1807 = vlaneseq
    %v1808 = vshrl.u32 %v1807, 7
    %v1809 = vsub.s32 1, %v1808
    %v1810 = vrot.slane %v1511, %v1809
    %v1813 = vadd.f32 %v1756, %v1806
    %v1814 = vadd.f32 %v1758, %v1810
    %v1815 = vadd.f32 %v1762, %v1806
    %v1816 = vadd.f32 %v1764, %v1810
    %v1817 = vadd.f32 %v1768, %v1806
    %v1818 = vadd.f32 %v1770, %v1810
    %v1819 = vadd.f32 %v1774, %v1806
    %v1820 = vadd.f32 %v1776, %v1810
    %v1821 = vadd.f32 %v1780, %v1806
    %v1822 = vadd.f32 %v1782, %v1810
    %v1823 = vadd.f32 %v1786, %v1806
    %v1824 = vadd.f32 %v1788, %v1810
    %v1825 = vadd.f32 %v1792, %v1806
    %v1826 = vadd.f32 %v1794, %v1810
    %v1827 = vadd.f32 %v1798, %v1806
    %v1828 = vadd.f32 %v1800, %v1810
    %1829 = vst [vmem:[#allocation2] sm:$0xff] %v1813
    %1830 = vst [vmem:[#allocation2 + $0x8] sm:$0xff] %v1815
    %1831 = vst [vmem:[#allocation2 + $0x10] sm:$0xff] %v1817
    %1832 = vst [vmem:[#allocation2 + $0x18] sm:$0xff] %v1819
    %1833 = vst [vmem:[#allocation2 + $0x20] sm:$0xff] %v1821
    %1834 = vst [vmem:[#allocation2 + $0x28] sm:$0xff] %v1823
    %1835 = vst [vmem:[#allocation2 + $0x30] sm:$0xff] %v1825
    %1836 = vst [vmem:[#allocation2 + $0x38] sm:$0xff] %v1827
    %1837 = vst [vmem:[#allocation3] sm:$0xff] %v1814
    %1838 = vst [vmem:[#allocation3 + $0x8] sm:$0xff] %v1816
    %1839 = vst [vmem:[#allocation3 + $0x10] sm:$0xff] %v1818
    %1840 = vst [vmem:[#allocation3 + $0x18] sm:$0xff] %v1820
    %1841 = vst [vmem:[#allocation3 + $0x20] sm:$0xff] %v1822
    %1842 = vst [vmem:[#allocation3 + $0x28] sm:$0xff] %v1824
    %1843 = vst [vmem:[#allocation3 + $0x30] sm:$0xff] %v1826
    %1844 = vst [vmem:[#allocation3 + $0x38] sm:$0xff] %v1828
    %v1845 = vld [vmem:[#allocation9] sm:$0xff]
    %v1846 = vld [vmem:[#allocation9 + $0x8] sm:$0xff]
    %v1847 = vld [vmem:[#allocation9 + $0x10] sm:$0xff]
    %v1848 = vld [vmem:[#allocation9 + $0x18] sm:$0xff]
    %v1849 = vld [vmem:[#allocation9 + $0x20] sm:$0xff]
    %v1850 = vld [vmem:[#allocation9 + $0x28] sm:$0xff]
    %v1851 = vld [vmem:[#allocation9 + $0x30] sm:$0xff]
    %v1852 = vld [vmem:[#allocation9 + $0x38] sm:$0xff]
    %v1853 = vld [vmem:[#allocation2] sm:$0xff]
    %v1854 = vld [vmem:[%s196] sm:$0xff]
    %1855 = vmatprep.subr.mxu0 0.0
    %1856 = vmatpush1.msra.mxu0 0.0
    %1857 = vmatprep.subr.mxu0 0.0
    %1858 = vmatpush1.msra.mxu0 0.0
    %1859 = vmatprep.subr.mxu0 0.0
    %1860 = vmatpush1.msra.mxu0 0.0
    %1861 = vmatprep.subr.mxu0 0.0
    %1862 = vmatpush1.msra.mxu0 0.0
    %1863 = vmatprep.subr.mxu0 0.0
    %1864 = vmatpush1.msra.mxu0 0.0
    %1865 = vmatprep.subr.mxu0 0.0
    %1866 = vmatpush1.msra.mxu0 0.0
    %1867 = vmatprep.subr.mxu0 0.0
    %1868 = vmatpush1.msra.mxu0 0.0
    %1869 = vmatprep.subr.mxu0 0.0
    %1870 = vmatpush1.msra.mxu0 0.0
    %1871 = vmatprep.subr.mxu0 0.0
    %1872 = vmatpush1.msra.mxu0 0.0
    %1873 = vmatprep.subr.mxu0 0.0
    %1874 = vmatpush1.msra.mxu0 0.0
    %1875 = vmatprep.subr.mxu0 0.0
    %1876 = vmatpush1.msra.mxu0 0.0
    %1877 = vmatprep.subr.mxu0 0.0
    %1878 = vmatpush1.msra.mxu0 0.0
    %1879 = vmatprep.subr.mxu0 %v1852
    %1880 = vmatpush1.msra.mxu0 %v1851
    %1881 = vmatprep.subr.mxu0 %v1850
    %1882 = vmatpush1.msra.mxu0 %v1849
    %1883 = vmatprep.subr.mxu0 %v1848
    %1884 = vmatpush1.msra.mxu0 %v1847
    %1885 = vmatprep.subr.mxu0 %v1846
    %1886 = vmatpush1.msra.mxu0 %v1845
    %1887 = vmatprep.subr.mxu0 0.0
    %1888 = vmatpush2.msra.mxu0 0.0
    %1889 = vmatprep.subr.mxu0 0.0
    %1890 = vmatpush2.msra.mxu0 0.0
    %1891 = vmatprep.subr.mxu0 0.0
    %1892 = vmatpush2.msra.mxu0 0.0
    %1893 = vmatprep.subr.mxu0 0.0
    %1894 = vmatpush2.msra.mxu0 0.0
    %1895 = vmatprep.subr.mxu0 0.0
    %1896 = vmatpush2.msra.mxu0 0.0
    %1897 = vmatprep.subr.mxu0 0.0
    %1898 = vmatpush2.msra.mxu0 0.0
    %1899 = vmatprep.subr.mxu0 0.0
    %1900 = vmatpush2.msra.mxu0 0.0
    %1901 = vmatprep.subr.mxu0 0.0
    %1902 = vmatpush2.msra.mxu0 0.0
    %1903 = vmatprep.subr.mxu0 0.0
    %1904 = vmatpush2.msra.mxu0 0.0
    %1905 = vmatprep.subr.mxu0 0.0
    %1906 = vmatpush2.msra.mxu0 0.0
    %1907 = vmatprep.subr.mxu0 0.0
    %1908 = vmatpush2.msra.mxu0 0.0
    %1909 = vmatprep.subr.mxu0 0.0
    %1910 = vmatpush2.msra.mxu0 0.0
    %1911 = vmatprep.subr.mxu0 0.0
    %1912 = vmatpush2.msra.mxu0 0.0
    %1913 = vmatprep.subr.mxu0 0.0
    %1914 = vmatpush2.msra.mxu0 0.0
    %1915 = vmatprep.subr.mxu0 0.0
    %1916 = vmatpush2.msra.mxu0 0.0
    %1917 = vmatprep.subr.mxu0 0.0
    %1918 = vmatpush2.msra.mxu0 0.0
    %1919 = vmatprep.mubr.f32.mxu0 0.0
    %1920 = vmatmul.mubr.f32.gmra.mxu0 %v200
    %v1921 = vpop.f32.mrf.mxu0
    %v1922 = vadd.f32 0.0, %v1921
    %v1923 = vpop.f32.mrf.mxu0
    %v1924 = vadd.f32 0.0, %v1923
    %1925 = vmatprep.mubr.f32.mxu0 0.0
    %1926 = vmatmul.mubr.f32.gmra.mxu0 %v200
    %v1927 = vpop.f32.mrf.mxu0
    %v1928 = vadd.f32 0.0, %v1927
    %v1929 = vpop.f32.mrf.mxu0
    %v1930 = vadd.f32 0.0, %v1929
    %1931 = vdwg.mxu0
    %v1932 = vsel %vm65, %v1922, %v1924
    %v1933 = vsel %vm66, %v1928, %v1930
    %v1934 = vadd.f32 %v1853, %v1932
    %v1935 = vadd.f32 %v1854, %v1933
    %v1936 = vxor.u32 %v1934, 2147483648
    %v1937 = vxor.u32 %v1935, 2147483648
    %v1938 = vmul.f32 %v1936, 1.442695
    %v1939 = vpow.pop %v1938
    %v1940 = vmul.f32 %v1937, 1.442695
    %v1941 = vpow.pop %v1940
    %v1942 = vadd.f32 %v1939, 1.0
    %v1943 = vadd.f32 %v1941, 1.0
    %v1944 = vrcp.pop %v1942
    %v1945 = vmul.f32 1.0, %v1944
    %v1946 = vrcp.pop %v1943
    %v1947 = vmul.f32 1.0, %v1946
    %1948 = vrot.lane.b32.xlu0 %v1945, 64
    %v1949 = vpop.permute.xlu0 %1948
    %1950 = vrot.lane.b32.xlu0 %v1947, 64
    %v1951 = vpop.permute.xlu0 %1950
    %v1952 = vmul.f32 %v1945, 0.0
    %v1953 = vmul.f32 %v1947, 0.0
    %v1954 = vadd.f32 %v1949, %v1949
    %v1955 = vadd.f32 %v1951, %v1951
    %v1956 = vsub.f32 %v1954, 1.0
    %v1957 = vsub.f32 %v1955, 1.0
    %v1958 = vmul.f32 %v1945, %v1956
    %v1959 = vmul.f32 %v1947, %v1957
    %1962 = vrot.lane.b32.xlu0 %v1958, 32
    %v1963 = vpop.permute.xlu0 %1962
    %1964 = vrot.lane.b32.xlu0 %v1959, 32
    %v1965 = vpop.permute.xlu0 %1964
    %v1968 = vadd.f32 %v1952, %v1963
    %v1969 = vadd.f32 %v1953, %v1965
    %v1970 = vadd.f32 %v1968, %v1968
    %v1971 = vadd.f32 %v1969, %v1969
    %v1972 = vxor.u32 %v1970, 2147483648
    %v1973 = vxor.u32 %v1971, 2147483648
    %v1974 = vmul.f32 %v1972, 1.442695
    %v1975 = vpow.pop %v1974
    %v1976 = vmul.f32 %v1973, 1.442695
    %v1977 = vpow.pop %v1976
    %v1978 = vadd.f32 %v1975, 1.0
    %v1979 = vadd.f32 %v1977, 1.0
    %v1980 = vrcp.pop %v1978
    %v1981 = vmul.f32 1.0, %v1980
    %v1982 = vrcp.pop %v1979
    %v1983 = vmul.f32 1.0, %v1982
    %v1984 = vadd.f32 %v1981, %v1981
    %v1985 = vadd.f32 %v1983, %v1983
    %v1986 = vsub.f32 %v1984, 1.0
    %v1987 = vsub.f32 %v1985, 1.0
    %1990 = vrot.lane.b32.xlu0 %v1986, 64
    %v1991 = vpop.permute.xlu0 %1990
    %1992 = vrot.lane.b32.xlu0 %v1987, 64
    %v1993 = vpop.permute.xlu0 %1992
    %v1996 = vmul.f32 %v1945, %v1991
    %v1997 = vmul.f32 %v1947, %v1993
    %v1998 = vld [vmem:[%s356] sm:$0xff]
    %v1999 = vld [vmem:[%s358] sm:$0xff]
    %2002 = vrot.lane.b32.xlu0 %v1996, 32
    %v2003 = vpop.permute.xlu0 %2002
    %2004 = vrot.lane.b32.xlu0 %v1997, 32
    %v2005 = vpop.permute.xlu0 %2004
    %v2006 = vsel %vm198, %v2003, 0
    %v2008 = vsel %vm198, %v2005, 0
    %2010 = vmatprep.subr.mxu0 0.0
    %2011 = vmatpush1.msra.mxu0 0.0
    %2012 = vmatprep.subr.mxu0 0.0
    %2013 = vmatpush1.msra.mxu0 0.0
    %2014 = vmatprep.subr.mxu0 0.0
    %2015 = vmatpush1.msra.mxu0 0.0
    %2016 = vmatprep.subr.mxu0 0.0
    %2017 = vmatpush1.msra.mxu0 0.0
    %2018 = vmatprep.subr.mxu0 0.0
    %2019 = vmatpush1.msra.mxu0 0.0
    %2020 = vmatprep.subr.mxu0 0.0
    %2021 = vmatpush1.msra.mxu0 0.0
    %2022 = vmatprep.subr.mxu0 0.0
    %2023 = vmatpush1.msra.mxu0 0.0
    %2024 = vmatprep.subr.mxu0 0.0
    %2025 = vmatpush1.msra.mxu0 0.0
    %2026 = vmatprep.subr.mxu0 0.0
    %2027 = vmatpush1.msra.mxu0 0.0
    %2028 = vmatprep.subr.mxu0 0.0
    %2029 = vmatpush1.msra.mxu0 0.0
    %2030 = vmatprep.subr.mxu0 0.0
    %2031 = vmatpush1.msra.mxu0 0.0
    %2032 = vmatprep.subr.mxu0 0.0
    %2033 = vmatpush1.msra.mxu0 0.0
    %2034 = vmatprep.subr.mxu0 %v1852
    %2035 = vmatpush1.msra.mxu0 %v1851
    %2036 = vmatprep.subr.mxu0 %v1850
    %2037 = vmatpush1.msra.mxu0 %v1849
    %2038 = vmatprep.subr.mxu0 %v1848
    %2039 = vmatpush1.msra.mxu0 %v1847
    %2040 = vmatprep.subr.mxu0 %v1846
    %2041 = vmatpush1.msra.mxu0 %v1845
    %2042 = vmatprep.subr.mxu0 0.0
    %2043 = vmatpush2.msra.mxu0 0.0
    %2044 = vmatprep.subr.mxu0 0.0
    %2045 = vmatpush2.msra.mxu0 0.0
    %2046 = vmatprep.subr.mxu0 0.0
    %2047 = vmatpush2.msra.mxu0 0.0
    %2048 = vmatprep.subr.mxu0 0.0
    %2049 = vmatpush2.msra.mxu0 0.0
    %2050 = vmatprep.subr.mxu0 0.0
    %2051 = vmatpush2.msra.mxu0 0.0
    %2052 = vmatprep.subr.mxu0 0.0
    %2053 = vmatpush2.msra.mxu0 0.0
    %2054 = vmatprep.subr.mxu0 0.0
    %2055 = vmatpush2.msra.mxu0 0.0
    %2056 = vmatprep.subr.mxu0 0.0
    %2057 = vmatpush2.msra.mxu0 0.0
    %2058 = vmatprep.subr.mxu0 0.0
    %2059 = vmatpush2.msra.mxu0 0.0
    %2060 = vmatprep.subr.mxu0 0.0
    %2061 = vmatpush2.msra.mxu0 0.0
    %2062 = vmatprep.subr.mxu0 0.0
    %2063 = vmatpush2.msra.mxu0 0.0
    %2064 = vmatprep.subr.mxu0 0.0
    %2065 = vmatpush2.msra.mxu0 0.0
    %2066 = vmatprep.subr.mxu0 0.0
    %2067 = vmatpush2.msra.mxu0 0.0
    %2068 = vmatprep.subr.mxu0 0.0
    %2069 = vmatpush2.msra.mxu0 0.0
    %2070 = vmatprep.subr.mxu0 0.0
    %2071 = vmatpush2.msra.mxu0 0.0
    %2072 = vmatprep.subr.mxu0 0.0
    %2073 = vmatpush2.msra.mxu0 0.0
    %2074 = vmatprep.mubr.f32.mxu0 0.0
    %2075 = vmatmul.mubr.f32.gmra.mxu0 %v2006
    %v2076 = vpop.f32.mrf.mxu0
    %v2077 = vadd.f32 0.0, %v2076
    %v2078 = vpop.f32.mrf.mxu0
    %v2079 = vadd.f32 0.0, %v2078
    %2080 = vmatprep.mubr.f32.mxu0 0.0
    %2081 = vmatmul.mubr.f32.gmra.mxu0 %v2008
    %v2082 = vpop.f32.mrf.mxu0
    %v2083 = vadd.f32 0.0, %v2082
    %v2084 = vpop.f32.mrf.mxu0
    %v2085 = vadd.f32 0.0, %v2084
    %2086 = vdwg.mxu0
    %v2087 = vsel %vm65, %v2077, %v2079
    %v2088 = vsel %vm66, %v2083, %v2085
    %v2089 = vadd.f32 %v1998, %v2087
    %v2090 = vadd.f32 %v1999, %v2088
    %v2091 = vxor.u32 %v2089, 2147483648
    %v2092 = vxor.u32 %v2090, 2147483648
    %v2093 = vmul.f32 %v2091, 1.442695
    %v2094 = vpow.pop %v2093
    %v2095 = vmul.f32 %v2092, 1.442695
    %v2096 = vpow.pop %v2095
    %v2097 = vadd.f32 %v2094, 1.0
    %v2098 = vadd.f32 %v2096, 1.0
    %v2099 = vrcp.pop %v2097
    %v2100 = vmul.f32 1.0, %v2099
    %v2101 = vrcp.pop %v2098
    %v2102 = vmul.f32 1.0, %v2101
    %2103 = vrot.lane.b32.xlu0 %v2100, 64
    %v2104 = vpop.permute.xlu0 %2103
    %2105 = vrot.lane.b32.xlu0 %v2102, 64
    %v2106 = vpop.permute.xlu0 %2105
    %v2107 = vmul.f32 %v2100, %v1968
    %v2108 = vmul.f32 %v2102, %v1969
    %v2109 = vadd.f32 %v2104, %v2104
    %v2110 = vadd.f32 %v2106, %v2106
    %v2111 = vsub.f32 %v2109, 1.0
    %v2112 = vsub.f32 %v2110, 1.0
    %v2113 = vmul.f32 %v2100, %v2111
    %v2114 = vmul.f32 %v2102, %v2112
    %2117 = vrot.lane.b32.xlu0 %v2113, 32
    %v2118 = vpop.permute.xlu0 %2117
    %2119 = vrot.lane.b32.xlu0 %v2114, 32
    %v2120 = vpop.permute.xlu0 %2119
    %v2123 = vadd.f32 %v2107, %v2118
    %v2124 = vadd.f32 %v2108, %v2120
    %v2125 = vadd.f32 %v2123, %v2123
    %v2126 = vadd.f32 %v2124, %v2124
    %v2127 = vxor.u32 %v2125, 2147483648
    %v2128 = vxor.u32 %v2126, 2147483648
    %v2129 = vmul.f32 %v2127, 1.442695
    %v2130 = vpow.pop %v2129
    %v2131 = vmul.f32 %v2128, 1.442695
    %v2132 = vpow.pop %v2131
    %v2133 = vadd.f32 %v2130, 1.0
    %v2134 = vadd.f32 %v2132, 1.0
    %v2135 = vrcp.pop %v2133
    %v2136 = vmul.f32 1.0, %v2135
    %v2137 = vrcp.pop %v2134
    %v2138 = vmul.f32 1.0, %v2137
    %v2139 = vadd.f32 %v2136, %v2136
    %v2140 = vadd.f32 %v2138, %v2138
    %v2141 = vsub.f32 %v2139, 1.0
    %v2142 = vsub.f32 %v2140, 1.0
    %2145 = vrot.lane.b32.xlu0 %v2141, 64
    %v2146 = vpop.permute.xlu0 %2145
    %2147 = vrot.lane.b32.xlu0 %v2142, 64
    %v2148 = vpop.permute.xlu0 %2147
    %v2151 = vmul.f32 %v2100, %v2146
    %v2152 = vmul.f32 %v2102, %v2148
    %v2153 = vld [vmem:[%s519] sm:$0xff]
    %v2154 = vld [vmem:[%s521] sm:$0xff]
    %2157 = vrot.lane.b32.xlu0 %v2151, 32
    %v2158 = vpop.permute.xlu0 %2157
    %2159 = vrot.lane.b32.xlu0 %v2152, 32
    %v2160 = vpop.permute.xlu0 %2159
    %v2161 = vsel %vm198, %v2158, 0
    %v2163 = vsel %vm198, %v2160, 0
    %2165 = vmatprep.subr.mxu0 0.0
    %2166 = vmatpush1.msra.mxu0 0.0
    %2167 = vmatprep.subr.mxu0 0.0
    %2168 = vmatpush1.msra.mxu0 0.0
    %2169 = vmatprep.subr.mxu0 0.0
    %2170 = vmatpush1.msra.mxu0 0.0
    %2171 = vmatprep.subr.mxu0 0.0
    %2172 = vmatpush1.msra.mxu0 0.0
    %2173 = vmatprep.subr.mxu0 0.0
    %2174 = vmatpush1.msra.mxu0 0.0
    %2175 = vmatprep.subr.mxu0 0.0
    %2176 = vmatpush1.msra.mxu0 0.0
    %2177 = vmatprep.subr.mxu0 0.0
    %2178 = vmatpush1.msra.mxu0 0.0
    %2179 = vmatprep.subr.mxu0 0.0
    %2180 = vmatpush1.msra.mxu0 0.0
    %2181 = vmatprep.subr.mxu0 0.0
    %2182 = vmatpush1.msra.mxu0 0.0
    %2183 = vmatprep.subr.mxu0 0.0
    %2184 = vmatpush1.msra.mxu0 0.0
    %2185 = vmatprep.subr.mxu0 0.0
    %2186 = vmatpush1.msra.mxu0 0.0
    %2187 = vmatprep.subr.mxu0 0.0
    %2188 = vmatpush1.msra.mxu0 0.0
    %2189 = vmatprep.subr.mxu0 %v1852
    %2190 = vmatpush1.msra.mxu0 %v1851
    %2191 = vmatprep.subr.mxu0 %v1850
    %2192 = vmatpush1.msra.mxu0 %v1849
    %2193 = vmatprep.subr.mxu0 %v1848
    %2194 = vmatpush1.msra.mxu0 %v1847
    %2195 = vmatprep.subr.mxu0 %v1846
    %2196 = vmatpush1.msra.mxu0 %v1845
    %2197 = vmatprep.subr.mxu0 0.0
    %2198 = vmatpush2.msra.mxu0 0.0
    %2199 = vmatprep.subr.mxu0 0.0
    %2200 = vmatpush2.msra.mxu0 0.0
    %2201 = vmatprep.subr.mxu0 0.0
    %2202 = vmatpush2.msra.mxu0 0.0
    %2203 = vmatprep.subr.mxu0 0.0
    %2204 = vmatpush2.msra.mxu0 0.0
    %2205 = vmatprep.subr.mxu0 0.0
    %2206 = vmatpush2.msra.mxu0 0.0
    %2207 = vmatprep.subr.mxu0 0.0
    %2208 = vmatpush2.msra.mxu0 0.0
    %2209 = vmatprep.subr.mxu0 0.0
    %2210 = vmatpush2.msra.mxu0 0.0
    %2211 = vmatprep.subr.mxu0 0.0
    %2212 = vmatpush2.msra.mxu0 0.0
    %2213 = vmatprep.subr.mxu0 0.0
    %2214 = vmatpush2.msra.mxu0 0.0
    %2215 = vmatprep.subr.mxu0 0.0
    %2216 = vmatpush2.msra.mxu0 0.0
    %2217 = vmatprep.subr.mxu0 0.0
    %2218 = vmatpush2.msra.mxu0 0.0
    %2219 = vmatprep.subr.mxu0 0.0
    %2220 = vmatpush2.msra.mxu0 0.0
    %2221 = vmatprep.subr.mxu0 0.0
    %2222 = vmatpush2.msra.mxu0 0.0
    %2223 = vmatprep.subr.mxu0 0.0
    %2224 = vmatpush2.msra.mxu0 0.0
    %2225 = vmatprep.subr.mxu0 0.0
    %2226 = vmatpush2.msra.mxu0 0.0
    %2227 = vmatprep.subr.mxu0 0.0
    %2228 = vmatpush2.msra.mxu0 0.0
    %2229 = vmatprep.mubr.f32.mxu0 0.0
    %2230 = vmatmul.mubr.f32.gmra.mxu0 %v2161
    %v2231 = vpop.f32.mrf.mxu0
    %v2232 = vadd.f32 0.0, %v2231
    %v2233 = vpop.f32.mrf.mxu0
    %v2234 = vadd.f32 0.0, %v2233
    %2235 = vmatprep.mubr.f32.mxu0 0.0
    %2236 = vmatmul.mubr.f32.gmra.mxu0 %v2163
    %v2237 = vpop.f32.mrf.mxu0
    %v2238 = vadd.f32 0.0, %v2237
    %v2239 = vpop.f32.mrf.mxu0
    %v2240 = vadd.f32 0.0, %v2239
    %2241 = vdwg.mxu0
    %v2242 = vsel %vm65, %v2232, %v2234
    %v2243 = vsel %vm66, %v2238, %v2240
    %v2244 = vadd.f32 %v2153, %v2242
    %v2245 = vadd.f32 %v2154, %v2243
    %v2246 = vxor.u32 %v2244, 2147483648
    %v2247 = vxor.u32 %v2245, 2147483648
    %v2248 = vmul.f32 %v2246, 1.442695
    %v2249 = vpow.pop %v2248
    %v2250 = vmul.f32 %v2247, 1.442695
    %v2251 = vpow.pop %v2250
    %v2252 = vadd.f32 %v2249, 1.0
    %v2253 = vadd.f32 %v2251, 1.0
    %v2254 = vrcp.pop %v2252
    %v2255 = vmul.f32 1.0, %v2254
    %v2256 = vrcp.pop %v2253
    %v2257 = vmul.f32 1.0, %v2256
    %2258 = vrot.lane.b32.xlu0 %v2255, 64
    %v2259 = vpop.permute.xlu0 %2258
    %2260 = vrot.lane.b32.xlu0 %v2257, 64
    %v2261 = vpop.permute.xlu0 %2260
    %v2262 = vmul.f32 %v2255, %v2123
    %v2263 = vmul.f32 %v2257, %v2124
    %v2264 = vadd.f32 %v2259, %v2259
    %v2265 = vadd.f32 %v2261, %v2261
    %v2266 = vsub.f32 %v2264, 1.0
    %v2267 = vsub.f32 %v2265, 1.0
    %v2268 = vmul.f32 %v2255, %v2266
    %v2269 = vmul.f32 %v2257, %v2267
    %2272 = vrot.lane.b32.xlu0 %v2268, 32
    %v2273 = vpop.permute.xlu0 %2272
    %2274 = vrot.lane.b32.xlu0 %v2269, 32
    %v2275 = vpop.permute.xlu0 %2274
    %v2278 = vadd.f32 %v2262, %v2273
    %v2279 = vadd.f32 %v2263, %v2275
    %v2280 = vadd.f32 %v2278, %v2278
    %v2281 = vadd.f32 %v2279, %v2279
    %v2282 = vxor.u32 %v2280, 2147483648
    %v2283 = vxor.u32 %v2281, 2147483648
    %v2284 = vmul.f32 %v2282, 1.442695
    %v2285 = vpow.pop %v2284
    %v2286 = vmul.f32 %v2283, 1.442695
    %v2287 = vpow.pop %v2286
    %v2288 = vadd.f32 %v2285, 1.0
    %v2289 = vadd.f32 %v2287, 1.0
    %v2290 = vrcp.pop %v2288
    %v2291 = vmul.f32 1.0, %v2290
    %v2292 = vrcp.pop %v2289
    %v2293 = vmul.f32 1.0, %v2292
    %v2294 = vadd.f32 %v2291, %v2291
    %v2295 = vadd.f32 %v2293, %v2293
    %v2296 = vsub.f32 %v2294, 1.0
    %v2297 = vsub.f32 %v2295, 1.0
    %2300 = vrot.lane.b32.xlu0 %v2296, 64
    %v2301 = vpop.permute.xlu0 %2300
    %2302 = vrot.lane.b32.xlu0 %v2297, 64
    %v2303 = vpop.permute.xlu0 %2302
    %v2306 = vmul.f32 %v2255, %v2301
    %v2307 = vmul.f32 %v2257, %v2303
    %v2308 = vld [vmem:[%s682] sm:$0xff]
    %v2309 = vld [vmem:[%s684] sm:$0xff]
    %2312 = vrot.lane.b32.xlu0 %v2306, 32
    %v2313 = vpop.permute.xlu0 %2312
    %2314 = vrot.lane.b32.xlu0 %v2307, 32
    %v2315 = vpop.permute.xlu0 %2314
    %v2316 = vsel %vm198, %v2313, 0
    %v2318 = vsel %vm198, %v2315, 0
    %2320 = vmatprep.subr.mxu0 0.0
    %2321 = vmatpush1.msra.mxu0 0.0
    %2322 = vmatprep.subr.mxu0 0.0
    %2323 = vmatpush1.msra.mxu0 0.0
    %2324 = vmatprep.subr.mxu0 0.0
    %2325 = vmatpush1.msra.mxu0 0.0
    %2326 = vmatprep.subr.mxu0 0.0
    %2327 = vmatpush1.msra.mxu0 0.0
    %2328 = vmatprep.subr.mxu0 0.0
    %2329 = vmatpush1.msra.mxu0 0.0
    %2330 = vmatprep.subr.mxu0 0.0
    %2331 = vmatpush1.msra.mxu0 0.0
    %2332 = vmatprep.subr.mxu0 0.0
    %2333 = vmatpush1.msra.mxu0 0.0
    %2334 = vmatprep.subr.mxu0 0.0
    %2335 = vmatpush1.msra.mxu0 0.0
    %2336 = vmatprep.subr.mxu0 0.0
    %2337 = vmatpush1.msra.mxu0 0.0
    %2338 = vmatprep.subr.mxu0 0.0
    %2339 = vmatpush1.msra.mxu0 0.0
    %2340 = vmatprep.subr.mxu0 0.0
    %2341 = vmatpush1.msra.mxu0 0.0
    %2342 = vmatprep.subr.mxu0 0.0
    %2343 = vmatpush1.msra.mxu0 0.0
    %2344 = vmatprep.subr.mxu0 %v1852
    %2345 = vmatpush1.msra.mxu0 %v1851
    %2346 = vmatprep.subr.mxu0 %v1850
    %2347 = vmatpush1.msra.mxu0 %v1849
    %2348 = vmatprep.subr.mxu0 %v1848
    %2349 = vmatpush1.msra.mxu0 %v1847
    %2350 = vmatprep.subr.mxu0 %v1846
    %2351 = vmatpush1.msra.mxu0 %v1845
    %2352 = vmatprep.subr.mxu0 0.0
    %2353 = vmatpush2.msra.mxu0 0.0
    %2354 = vmatprep.subr.mxu0 0.0
    %2355 = vmatpush2.msra.mxu0 0.0
    %2356 = vmatprep.subr.mxu0 0.0
    %2357 = vmatpush2.msra.mxu0 0.0
    %2358 = vmatprep.subr.mxu0 0.0
    %2359 = vmatpush2.msra.mxu0 0.0
    %2360 = vmatprep.subr.mxu0 0.0
    %2361 = vmatpush2.msra.mxu0 0.0
    %2362 = vmatprep.subr.mxu0 0.0
    %2363 = vmatpush2.msra.mxu0 0.0
    %2364 = vmatprep.subr.mxu0 0.0
    %2365 = vmatpush2.msra.mxu0 0.0
    %2366 = vmatprep.subr.mxu0 0.0
    %2367 = vmatpush2.msra.mxu0 0.0
    %2368 = vmatprep.subr.mxu0 0.0
    %2369 = vmatpush2.msra.mxu0 0.0
    %2370 = vmatprep.subr.mxu0 0.0
    %2371 = vmatpush2.msra.mxu0 0.0
    %2372 = vmatprep.subr.mxu0 0.0
    %2373 = vmatpush2.msra.mxu0 0.0
    %2374 = vmatprep.subr.mxu0 0.0
    %2375 = vmatpush2.msra.mxu0 0.0
    %2376 = vmatprep.subr.mxu0 0.0
    %2377 = vmatpush2.msra.mxu0 0.0
    %2378 = vmatprep.subr.mxu0 0.0
    %2379 = vmatpush2.msra.mxu0 0.0
    %2380 = vmatprep.subr.mxu0 0.0
    %2381 = vmatpush2.msra.mxu0 0.0
    %2382 = vmatprep.subr.mxu0 0.0
    %2383 = vmatpush2.msra.mxu0 0.0
    %2384 = vmatprep.mubr.f32.mxu0 0.0
    %2385 = vmatmul.mubr.f32.gmra.mxu0 %v2316
    %v2386 = vpop.f32.mrf.mxu0
    %v2387 = vadd.f32 0.0, %v2386
    %v2388 = vpop.f32.mrf.mxu0
    %v2389 = vadd.f32 0.0, %v2388
    %2390 = vmatprep.mubr.f32.mxu0 0.0
    %2391 = vmatmul.mubr.f32.gmra.mxu0 %v2318
    %v2392 = vpop.f32.mrf.mxu0
    %v2393 = vadd.f32 0.0, %v2392
    %v2394 = vpop.f32.mrf.mxu0
    %v2395 = vadd.f32 0.0, %v2394
    %2396 = vdwg.mxu0
    %v2397 = vsel %vm65, %v2387, %v2389
    %v2398 = vsel %vm66, %v2393, %v2395
    %v2399 = vadd.f32 %v2308, %v2397
    %v2400 = vadd.f32 %v2309, %v2398
    %v2401 = vxor.u32 %v2399, 2147483648
    %v2402 = vxor.u32 %v2400, 2147483648
    %v2403 = vmul.f32 %v2401, 1.442695
    %v2404 = vpow.pop %v2403
    %v2405 = vmul.f32 %v2402, 1.442695
    %v2406 = vpow.pop %v2405
    %v2407 = vadd.f32 %v2404, 1.0
    %v2408 = vadd.f32 %v2406, 1.0
    %v2409 = vrcp.pop %v2407
    %v2410 = vmul.f32 1.0, %v2409
    %v2411 = vrcp.pop %v2408
    %v2412 = vmul.f32 1.0, %v2411
    %2413 = vrot.lane.b32.xlu0 %v2410, 64
    %v2414 = vpop.permute.xlu0 %2413
    %2415 = vrot.lane.b32.xlu0 %v2412, 64
    %v2416 = vpop.permute.xlu0 %2415
    %v2417 = vmul.f32 %v2410, %v2278
    %v2418 = vmul.f32 %v2412, %v2279
    %v2419 = vadd.f32 %v2414, %v2414
    %v2420 = vadd.f32 %v2416, %v2416
    %v2421 = vsub.f32 %v2419, 1.0
    %v2422 = vsub.f32 %v2420, 1.0
    %v2423 = vmul.f32 %v2410, %v2421
    %v2424 = vmul.f32 %v2412, %v2422
    %2427 = vrot.lane.b32.xlu0 %v2423, 32
    %v2428 = vpop.permute.xlu0 %2427
    %2429 = vrot.lane.b32.xlu0 %v2424, 32
    %v2430 = vpop.permute.xlu0 %2429
    %v2433 = vadd.f32 %v2417, %v2428
    %v2434 = vadd.f32 %v2418, %v2430
    %v2435 = vadd.f32 %v2433, %v2433
    %v2436 = vadd.f32 %v2434, %v2434
    %v2437 = vxor.u32 %v2435, 2147483648
    %v2438 = vxor.u32 %v2436, 2147483648
    %v2439 = vmul.f32 %v2437, 1.442695
    %v2440 = vpow.pop %v2439
    %v2441 = vmul.f32 %v2438, 1.442695
    %v2442 = vpow.pop %v2441
    %v2443 = vadd.f32 %v2440, 1.0
    %v2444 = vadd.f32 %v2442, 1.0
    %v2445 = vrcp.pop %v2443
    %v2446 = vmul.f32 1.0, %v2445
    %v2447 = vrcp.pop %v2444
    %v2448 = vmul.f32 1.0, %v2447
    %v2449 = vadd.f32 %v2446, %v2446
    %v2450 = vadd.f32 %v2448, %v2448
    %v2451 = vsub.f32 %v2449, 1.0
    %v2452 = vsub.f32 %v2450, 1.0
    %2455 = vrot.lane.b32.xlu0 %v2451, 64
    %v2456 = vpop.permute.xlu0 %2455
    %2457 = vrot.lane.b32.xlu0 %v2452, 64
    %v2458 = vpop.permute.xlu0 %2457
    %v2461 = vmul.f32 %v2410, %v2456
    %v2462 = vmul.f32 %v2412, %v2458
    %v2463 = vld [vmem:[%s845] sm:$0xff]
    %v2464 = vld [vmem:[%s847] sm:$0xff]
    %2467 = vrot.lane.b32.xlu0 %v2461, 32
    %v2468 = vpop.permute.xlu0 %2467
    %2469 = vrot.lane.b32.xlu0 %v2462, 32
    %v2470 = vpop.permute.xlu0 %2469
    %v2471 = vsel %vm198, %v2468, 0
    %v2473 = vsel %vm198, %v2470, 0
    %2475 = vmatprep.subr.mxu0 0.0
    %2476 = vmatpush1.msra.mxu0 0.0
    %2477 = vmatprep.subr.mxu0 0.0
    %2478 = vmatpush1.msra.mxu0 0.0
    %2479 = vmatprep.subr.mxu0 0.0
    %2480 = vmatpush1.msra.mxu0 0.0
    %2481 = vmatprep.subr.mxu0 0.0
    %2482 = vmatpush1.msra.mxu0 0.0
    %2483 = vmatprep.subr.mxu0 0.0
    %2484 = vmatpush1.msra.mxu0 0.0
    %2485 = vmatprep.subr.mxu0 0.0
    %2486 = vmatpush1.msra.mxu0 0.0
    %2487 = vmatprep.subr.mxu0 0.0
    %2488 = vmatpush1.msra.mxu0 0.0
    %2489 = vmatprep.subr.mxu0 0.0
    %2490 = vmatpush1.msra.mxu0 0.0
    %2491 = vmatprep.subr.mxu0 0.0
    %2492 = vmatpush1.msra.mxu0 0.0
    %2493 = vmatprep.subr.mxu0 0.0
    %2494 = vmatpush1.msra.mxu0 0.0
    %2495 = vmatprep.subr.mxu0 0.0
    %2496 = vmatpush1.msra.mxu0 0.0
    %2497 = vmatprep.subr.mxu0 0.0
    %2498 = vmatpush1.msra.mxu0 0.0
    %2499 = vmatprep.subr.mxu0 %v1852
    %2500 = vmatpush1.msra.mxu0 %v1851
    %2501 = vmatprep.subr.mxu0 %v1850
    %2502 = vmatpush1.msra.mxu0 %v1849
    %2503 = vmatprep.subr.mxu0 %v1848
    %2504 = vmatpush1.msra.mxu0 %v1847
    %2505 = vmatprep.subr.mxu0 %v1846
    %2506 = vmatpush1.msra.mxu0 %v1845
    %2507 = vmatprep.subr.mxu0 0.0
    %2508 = vmatpush2.msra.mxu0 0.0
    %2509 = vmatprep.subr.mxu0 0.0
    %2510 = vmatpush2.msra.mxu0 0.0
    %2511 = vmatprep.subr.mxu0 0.0
    %2512 = vmatpush2.msra.mxu0 0.0
    %2513 = vmatprep.subr.mxu0 0.0
    %2514 = vmatpush2.msra.mxu0 0.0
    %2515 = vmatprep.subr.mxu0 0.0
    %2516 = vmatpush2.msra.mxu0 0.0
    %2517 = vmatprep.subr.mxu0 0.0
    %2518 = vmatpush2.msra.mxu0 0.0
    %2519 = vmatprep.subr.mxu0 0.0
    %2520 = vmatpush2.msra.mxu0 0.0
    %2521 = vmatprep.subr.mxu0 0.0
    %2522 = vmatpush2.msra.mxu0 0.0
    %2523 = vmatprep.subr.mxu0 0.0
    %2524 = vmatpush2.msra.mxu0 0.0
    %2525 = vmatprep.subr.mxu0 0.0
    %2526 = vmatpush2.msra.mxu0 0.0
    %2527 = vmatprep.subr.mxu0 0.0
    %2528 = vmatpush2.msra.mxu0 0.0
    %2529 = vmatprep.subr.mxu0 0.0
    %2530 = vmatpush2.msra.mxu0 0.0
    %2531 = vmatprep.subr.mxu0 0.0
    %2532 = vmatpush2.msra.mxu0 0.0
    %2533 = vmatprep.subr.mxu0 0.0
    %2534 = vmatpush2.msra.mxu0 0.0
    %2535 = vmatprep.subr.mxu0 0.0
    %2536 = vmatpush2.msra.mxu0 0.0
    %2537 = vmatprep.subr.mxu0 0.0
    %2538 = vmatpush2.msra.mxu0 0.0
    %2539 = vmatprep.mubr.f32.mxu0 0.0
    %2540 = vmatmul.mubr.f32.gmra.mxu0 %v2471
    %v2541 = vpop.f32.mrf.mxu0
    %v2542 = vadd.f32 0.0, %v2541
    %v2543 = vpop.f32.mrf.mxu0
    %v2544 = vadd.f32 0.0, %v2543
    %2545 = vmatprep.mubr.f32.mxu0 0.0
    %2546 = vmatmul.mubr.f32.gmra.mxu0 %v2473
    %v2547 = vpop.f32.mrf.mxu0
    %v2548 = vadd.f32 0.0, %v2547
    %v2549 = vpop.f32.mrf.mxu0
    %v2550 = vadd.f32 0.0, %v2549
    %2551 = vdwg.mxu0
    %v2552 = vsel %vm65, %v2542, %v2544
    %v2553 = vsel %vm66, %v2548, %v2550
    %v2554 = vadd.f32 %v2463, %v2552
    %v2555 = vadd.f32 %v2464, %v2553
    %v2556 = vxor.u32 %v2554, 2147483648
    %v2557 = vxor.u32 %v2555, 2147483648
    %v2558 = vmul.f32 %v2556, 1.442695
    %v2559 = vpow.pop %v2558
    %v2560 = vmul.f32 %v2557, 1.442695
    %v2561 = vpow.pop %v2560
    %v2562 = vadd.f32 %v2559, 1.0
    %v2563 = vadd.f32 %v2561, 1.0
    %v2564 = vrcp.pop %v2562
    %v2565 = vmul.f32 1.0, %v2564
    %v2566 = vrcp.pop %v2563
    %v2567 = vmul.f32 1.0, %v2566
    %2568 = vrot.lane.b32.xlu0 %v2565, 64
    %v2569 = vpop.permute.xlu0 %2568
    %2570 = vrot.lane.b32.xlu0 %v2567, 64
    %v2571 = vpop.permute.xlu0 %2570
    %v2572 = vmul.f32 %v2565, %v2433
    %v2573 = vmul.f32 %v2567, %v2434
    %v2574 = vadd.f32 %v2569, %v2569
    %v2575 = vadd.f32 %v2571, %v2571
    %v2576 = vsub.f32 %v2574, 1.0
    %v2577 = vsub.f32 %v2575, 1.0
    %v2578 = vmul.f32 %v2565, %v2576
    %v2579 = vmul.f32 %v2567, %v2577
    %2582 = vrot.lane.b32.xlu0 %v2578, 32
    %v2583 = vpop.permute.xlu0 %2582
    %2584 = vrot.lane.b32.xlu0 %v2579, 32
    %v2585 = vpop.permute.xlu0 %2584
    %v2588 = vadd.f32 %v2572, %v2583
    %v2589 = vadd.f32 %v2573, %v2585
    %v2590 = vadd.f32 %v2588, %v2588
    %v2591 = vadd.f32 %v2589, %v2589
    %v2592 = vxor.u32 %v2590, 2147483648
    %v2593 = vxor.u32 %v2591, 2147483648
    %v2594 = vmul.f32 %v2592, 1.442695
    %v2595 = vpow.pop %v2594
    %v2596 = vmul.f32 %v2593, 1.442695
    %v2597 = vpow.pop %v2596
    %v2598 = vadd.f32 %v2595, 1.0
    %v2599 = vadd.f32 %v2597, 1.0
    %v2600 = vrcp.pop %v2598
    %v2601 = vmul.f32 1.0, %v2600
    %v2602 = vrcp.pop %v2599
    %v2603 = vmul.f32 1.0, %v2602
    %v2604 = vadd.f32 %v2601, %v2601
    %v2605 = vadd.f32 %v2603, %v2603
    %v2606 = vsub.f32 %v2604, 1.0
    %v2607 = vsub.f32 %v2605, 1.0
    %2610 = vrot.lane.b32.xlu0 %v2606, 64
    %v2611 = vpop.permute.xlu0 %2610
    %2612 = vrot.lane.b32.xlu0 %v2607, 64
    %v2613 = vpop.permute.xlu0 %2612
    %v2616 = vmul.f32 %v2565, %v2611
    %v2617 = vmul.f32 %v2567, %v2613
    %v2618 = vld [vmem:[%s1008] sm:$0xff]
    %v2619 = vld [vmem:[%s1010] sm:$0xff]
    %2622 = vrot.lane.b32.xlu0 %v2616, 32
    %v2623 = vpop.permute.xlu0 %2622
    %2624 = vrot.lane.b32.xlu0 %v2617, 32
    %v2625 = vpop.permute.xlu0 %2624
    %v2626 = vsel %vm198, %v2623, 0
    %v2628 = vsel %vm198, %v2625, 0
    %2630 = vmatprep.subr.mxu0 0.0
    %2631 = vmatpush1.msra.mxu0 0.0
    %2632 = vmatprep.subr.mxu0 0.0
    %2633 = vmatpush1.msra.mxu0 0.0
    %2634 = vmatprep.subr.mxu0 0.0
    %2635 = vmatpush1.msra.mxu0 0.0
    %2636 = vmatprep.subr.mxu0 0.0
    %2637 = vmatpush1.msra.mxu0 0.0
    %2638 = vmatprep.subr.mxu0 0.0
    %2639 = vmatpush1.msra.mxu0 0.0
    %2640 = vmatprep.subr.mxu0 0.0
    %2641 = vmatpush1.msra.mxu0 0.0
    %2642 = vmatprep.subr.mxu0 0.0
    %2643 = vmatpush1.msra.mxu0 0.0
    %2644 = vmatprep.subr.mxu0 0.0
    %2645 = vmatpush1.msra.mxu0 0.0
    %2646 = vmatprep.subr.mxu0 0.0
    %2647 = vmatpush1.msra.mxu0 0.0
    %2648 = vmatprep.subr.mxu0 0.0
    %2649 = vmatpush1.msra.mxu0 0.0
    %2650 = vmatprep.subr.mxu0 0.0
    %2651 = vmatpush1.msra.mxu0 0.0
    %2652 = vmatprep.subr.mxu0 0.0
    %2653 = vmatpush1.msra.mxu0 0.0
    %2654 = vmatprep.subr.mxu0 %v1852
    %2655 = vmatpush1.msra.mxu0 %v1851
    %2656 = vmatprep.subr.mxu0 %v1850
    %2657 = vmatpush1.msra.mxu0 %v1849
    %2658 = vmatprep.subr.mxu0 %v1848
    %2659 = vmatpush1.msra.mxu0 %v1847
    %2660 = vmatprep.subr.mxu0 %v1846
    %2661 = vmatpush1.msra.mxu0 %v1845
    %2662 = vmatprep.subr.mxu0 0.0
    %2663 = vmatpush2.msra.mxu0 0.0
    %2664 = vmatprep.subr.mxu0 0.0
    %2665 = vmatpush2.msra.mxu0 0.0
    %2666 = vmatprep.subr.mxu0 0.0
    %2667 = vmatpush2.msra.mxu0 0.0
    %2668 = vmatprep.subr.mxu0 0.0
    %2669 = vmatpush2.msra.mxu0 0.0
    %2670 = vmatprep.subr.mxu0 0.0
    %2671 = vmatpush2.msra.mxu0 0.0
    %2672 = vmatprep.subr.mxu0 0.0
    %2673 = vmatpush2.msra.mxu0 0.0
    %2674 = vmatprep.subr.mxu0 0.0
    %2675 = vmatpush2.msra.mxu0 0.0
    %2676 = vmatprep.subr.mxu0 0.0
    %2677 = vmatpush2.msra.mxu0 0.0
    %2678 = vmatprep.subr.mxu0 0.0
    %2679 = vmatpush2.msra.mxu0 0.0
    %2680 = vmatprep.subr.mxu0 0.0
    %2681 = vmatpush2.msra.mxu0 0.0
    %2682 = vmatprep.subr.mxu0 0.0
    %2683 = vmatpush2.msra.mxu0 0.0
    %2684 = vmatprep.subr.mxu0 0.0
    %2685 = vmatpush2.msra.mxu0 0.0
    %2686 = vmatprep.subr.mxu0 0.0
    %2687 = vmatpush2.msra.mxu0 0.0
    %2688 = vmatprep.subr.mxu0 0.0
    %2689 = vmatpush2.msra.mxu0 0.0
    %2690 = vmatprep.subr.mxu0 0.0
    %2691 = vmatpush2.msra.mxu0 0.0
    %2692 = vmatprep.subr.mxu0 0.0
    %2693 = vmatpush2.msra.mxu0 0.0
    %2694 = vmatprep.mubr.f32.mxu0 0.0
    %2695 = vmatmul.mubr.f32.gmra.mxu0 %v2626
    %v2696 = vpop.f32.mrf.mxu0
    %v2697 = vadd.f32 0.0, %v2696
    %v2698 = vpop.f32.mrf.mxu0
    %v2699 = vadd.f32 0.0, %v2698
    %2700 = vmatprep.mubr.f32.mxu0 0.0
    %2701 = vmatmul.mubr.f32.gmra.mxu0 %v2628
    %v2702 = vpop.f32.mrf.mxu0
    %v2703 = vadd.f32 0.0, %v2702
    %v2704 = vpop.f32.mrf.mxu0
    %v2705 = vadd.f32 0.0, %v2704
    %2706 = vdwg.mxu0
    %v2707 = vsel %vm65, %v2697, %v2699
    %v2708 = vsel %vm66, %v2703, %v2705
    %v2709 = vadd.f32 %v2618, %v2707
    %v2710 = vadd.f32 %v2619, %v2708
    %v2711 = vxor.u32 %v2709, 2147483648
    %v2712 = vxor.u32 %v2710, 2147483648
    %v2713 = vmul.f32 %v2711, 1.442695
    %v2714 = vpow.pop %v2713
    %v2715 = vmul.f32 %v2712, 1.442695
    %v2716 = vpow.pop %v2715
    %v2717 = vadd.f32 %v2714, 1.0
    %v2718 = vadd.f32 %v2716, 1.0
    %v2719 = vrcp.pop %v2717
    %v2720 = vmul.f32 1.0, %v2719
    %v2721 = vrcp.pop %v2718
    %v2722 = vmul.f32 1.0, %v2721
    %2723 = vrot.lane.b32.xlu0 %v2720, 64
    %v2724 = vpop.permute.xlu0 %2723
    %2725 = vrot.lane.b32.xlu0 %v2722, 64
    %v2726 = vpop.permute.xlu0 %2725
    %v2727 = vmul.f32 %v2720, %v2588
    %v2728 = vmul.f32 %v2722, %v2589
    %v2729 = vadd.f32 %v2724, %v2724
    %v2730 = vadd.f32 %v2726, %v2726
    %v2731 = vsub.f32 %v2729, 1.0
    %v2732 = vsub.f32 %v2730, 1.0
    %v2733 = vmul.f32 %v2720, %v2731
    %v2734 = vmul.f32 %v2722, %v2732
    %2737 = vrot.lane.b32.xlu0 %v2733, 32
    %v2738 = vpop.permute.xlu0 %2737
    %2739 = vrot.lane.b32.xlu0 %v2734, 32
    %v2740 = vpop.permute.xlu0 %2739
    %v2743 = vadd.f32 %v2727, %v2738
    %v2744 = vadd.f32 %v2728, %v2740
    %v2745 = vadd.f32 %v2743, %v2743
    %v2746 = vadd.f32 %v2744, %v2744
    %v2747 = vxor.u32 %v2745, 2147483648
    %v2748 = vxor.u32 %v2746, 2147483648
    %v2749 = vmul.f32 %v2747, 1.442695
    %v2750 = vpow.pop %v2749
    %v2751 = vmul.f32 %v2748, 1.442695
    %v2752 = vpow.pop %v2751
    %v2753 = vadd.f32 %v2750, 1.0
    %v2754 = vadd.f32 %v2752, 1.0
    %v2755 = vrcp.pop %v2753
    %v2756 = vmul.f32 1.0, %v2755
    %v2757 = vrcp.pop %v2754
    %v2758 = vmul.f32 1.0, %v2757
    %v2759 = vadd.f32 %v2756, %v2756
    %v2760 = vadd.f32 %v2758, %v2758
    %v2761 = vsub.f32 %v2759, 1.0
    %v2762 = vsub.f32 %v2760, 1.0
    %2765 = vrot.lane.b32.xlu0 %v2761, 64
    %v2766 = vpop.permute.xlu0 %2765
    %2767 = vrot.lane.b32.xlu0 %v2762, 64
    %v2768 = vpop.permute.xlu0 %2767
    %v2771 = vmul.f32 %v2720, %v2766
    %v2772 = vmul.f32 %v2722, %v2768
    %v2773 = vld [vmem:[%s1171] sm:$0xff]
    %v2774 = vld [vmem:[%s1173] sm:$0xff]
    %2777 = vrot.lane.b32.xlu0 %v2771, 32
    %v2778 = vpop.permute.xlu0 %2777
    %2779 = vrot.lane.b32.xlu0 %v2772, 32
    %v2780 = vpop.permute.xlu0 %2779
    %v2781 = vsel %vm198, %v2778, 0
    %v2783 = vsel %vm198, %v2780, 0
    %2785 = vmatprep.subr.mxu0 0.0
    %2786 = vmatpush1.msra.mxu0 0.0
    %2787 = vmatprep.subr.mxu0 0.0
    %2788 = vmatpush1.msra.mxu0 0.0
    %2789 = vmatprep.subr.mxu0 0.0
    %2790 = vmatpush1.msra.mxu0 0.0
    %2791 = vmatprep.subr.mxu0 0.0
    %2792 = vmatpush1.msra.mxu0 0.0
    %2793 = vmatprep.subr.mxu0 0.0
    %2794 = vmatpush1.msra.mxu0 0.0
    %2795 = vmatprep.subr.mxu0 0.0
    %2796 = vmatpush1.msra.mxu0 0.0
    %2797 = vmatprep.subr.mxu0 0.0
    %2798 = vmatpush1.msra.mxu0 0.0
    %2799 = vmatprep.subr.mxu0 0.0
    %2800 = vmatpush1.msra.mxu0 0.0
    %2801 = vmatprep.subr.mxu0 0.0
    %2802 = vmatpush1.msra.mxu0 0.0
    %2803 = vmatprep.subr.mxu0 0.0
    %2804 = vmatpush1.msra.mxu0 0.0
    %2805 = vmatprep.subr.mxu0 0.0
    %2806 = vmatpush1.msra.mxu0 0.0
    %2807 = vmatprep.subr.mxu0 0.0
    %2808 = vmatpush1.msra.mxu0 0.0
    %2809 = vmatprep.subr.mxu0 %v1852
    %2810 = vmatpush1.msra.mxu0 %v1851
    %2811 = vmatprep.subr.mxu0 %v1850
    %2812 = vmatpush1.msra.mxu0 %v1849
    %2813 = vmatprep.subr.mxu0 %v1848
    %2814 = vmatpush1.msra.mxu0 %v1847
    %2815 = vmatprep.subr.mxu0 %v1846
    %2816 = vmatpush1.msra.mxu0 %v1845
    %2817 = vmatprep.subr.mxu0 0.0
    %2818 = vmatpush2.msra.mxu0 0.0
    %2819 = vmatprep.subr.mxu0 0.0
    %2820 = vmatpush2.msra.mxu0 0.0
    %2821 = vmatprep.subr.mxu0 0.0
    %2822 = vmatpush2.msra.mxu0 0.0
    %2823 = vmatprep.subr.mxu0 0.0
    %2824 = vmatpush2.msra.mxu0 0.0
    %2825 = vmatprep.subr.mxu0 0.0
    %2826 = vmatpush2.msra.mxu0 0.0
    %2827 = vmatprep.subr.mxu0 0.0
    %2828 = vmatpush2.msra.mxu0 0.0
    %2829 = vmatprep.subr.mxu0 0.0
    %2830 = vmatpush2.msra.mxu0 0.0
    %2831 = vmatprep.subr.mxu0 0.0
    %2832 = vmatpush2.msra.mxu0 0.0
    %2833 = vmatprep.subr.mxu0 0.0
    %2834 = vmatpush2.msra.mxu0 0.0
    %2835 = vmatprep.subr.mxu0 0.0
    %2836 = vmatpush2.msra.mxu0 0.0
    %2837 = vmatprep.subr.mxu0 0.0
    %2838 = vmatpush2.msra.mxu0 0.0
    %2839 = vmatprep.subr.mxu0 0.0
    %2840 = vmatpush2.msra.mxu0 0.0
    %2841 = vmatprep.subr.mxu0 0.0
    %2842 = vmatpush2.msra.mxu0 0.0
    %2843 = vmatprep.subr.mxu0 0.0
    %2844 = vmatpush2.msra.mxu0 0.0
    %2845 = vmatprep.subr.mxu0 0.0
    %2846 = vmatpush2.msra.mxu0 0.0
    %2847 = vmatprep.subr.mxu0 0.0
    %2848 = vmatpush2.msra.mxu0 0.0
    %2849 = vmatprep.mubr.f32.mxu0 0.0
    %2850 = vmatmul.mubr.f32.gmra.mxu0 %v2781
    %v2851 = vpop.f32.mrf.mxu0
    %v2852 = vadd.f32 0.0, %v2851
    %v2853 = vpop.f32.mrf.mxu0
    %v2854 = vadd.f32 0.0, %v2853
    %2855 = vmatprep.mubr.f32.mxu0 0.0
    %2856 = vmatmul.mubr.f32.gmra.mxu0 %v2783
    %v2857 = vpop.f32.mrf.mxu0
    %v2858 = vadd.f32 0.0, %v2857
    %v2859 = vpop.f32.mrf.mxu0
    %v2860 = vadd.f32 0.0, %v2859
    %2861 = vdwg.mxu0
    %v2862 = vsel %vm65, %v2852, %v2854
    %v2863 = vsel %vm66, %v2858, %v2860
    %v2864 = vadd.f32 %v2773, %v2862
    %v2865 = vadd.f32 %v2774, %v2863
    %v2866 = vxor.u32 %v2864, 2147483648
    %v2867 = vxor.u32 %v2865, 2147483648
    %v2868 = vmul.f32 %v2866, 1.442695
    %v2869 = vpow.pop %v2868
    %v2870 = vmul.f32 %v2867, 1.442695
    %v2871 = vpow.pop %v2870
    %v2872 = vadd.f32 %v2869, 1.0
    %v2873 = vadd.f32 %v2871, 1.0
    %v2874 = vrcp.pop %v2872
    %v2875 = vmul.f32 1.0, %v2874
    %v2876 = vrcp.pop %v2873
    %v2877 = vmul.f32 1.0, %v2876
    %2878 = vrot.lane.b32.xlu0 %v2875, 64
    %v2879 = vpop.permute.xlu0 %2878
    %2880 = vrot.lane.b32.xlu0 %v2877, 64
    %v2881 = vpop.permute.xlu0 %2880
    %v2882 = vmul.f32 %v2875, %v2743
    %v2883 = vmul.f32 %v2877, %v2744
    %v2884 = vadd.f32 %v2879, %v2879
    %v2885 = vadd.f32 %v2881, %v2881
    %v2886 = vsub.f32 %v2884, 1.0
    %v2887 = vsub.f32 %v2885, 1.0
    %v2888 = vmul.f32 %v2875, %v2886
    %v2889 = vmul.f32 %v2877, %v2887
    %2892 = vrot.lane.b32.xlu0 %v2888, 32
    %v2893 = vpop.permute.xlu0 %2892
    %2894 = vrot.lane.b32.xlu0 %v2889, 32
    %v2895 = vpop.permute.xlu0 %2894
    %v2898 = vadd.f32 %v2882, %v2893
    %v2899 = vadd.f32 %v2883, %v2895
    %v2900 = vadd.f32 %v2898, %v2898
    %v2901 = vadd.f32 %v2899, %v2899
    %v2902 = vxor.u32 %v2900, 2147483648
    %v2903 = vxor.u32 %v2901, 2147483648
    %v2904 = vmul.f32 %v2902, 1.442695
    %v2905 = vpow.pop %v2904
    %v2906 = vmul.f32 %v2903, 1.442695
    %v2907 = vpow.pop %v2906
    %v2908 = vadd.f32 %v2905, 1.0
    %v2909 = vadd.f32 %v2907, 1.0
    %v2910 = vrcp.pop %v2908
    %v2911 = vmul.f32 1.0, %v2910
    %v2912 = vrcp.pop %v2909
    %v2913 = vmul.f32 1.0, %v2912
    %v2914 = vadd.f32 %v2911, %v2911
    %v2915 = vadd.f32 %v2913, %v2913
    %v2916 = vsub.f32 %v2914, 1.0
    %v2917 = vsub.f32 %v2915, 1.0
    %2920 = vrot.lane.b32.xlu0 %v2916, 64
    %v2921 = vpop.permute.xlu0 %2920
    %2922 = vrot.lane.b32.xlu0 %v2917, 64
    %v2923 = vpop.permute.xlu0 %2922
    %v2926 = vmul.f32 %v2875, %v2921
    %v2927 = vmul.f32 %v2877, %v2923
    %v2928 = vld [vmem:[%s1334] sm:$0xff]
    %2931 = vrot.lane.b32.xlu0 %v2926, 32
    %v2932 = vpop.permute.xlu0 %2931
    %2933 = vrot.lane.b32.xlu0 %v2927, 32
    %v2934 = vpop.permute.xlu0 %2933
    %v2935 = vsel %vm198, %v2932, 0
    %v2937 = vsel %vm198, %v2934, 0
    %2939 = vmatprep.subr.mxu0 0.0
    %2940 = vmatpush1.msra.mxu0 0.0
    %2941 = vmatprep.subr.mxu0 0.0
    %2942 = vmatpush1.msra.mxu0 0.0
    %2943 = vmatprep.subr.mxu0 0.0
    %2944 = vmatpush1.msra.mxu0 0.0
    %2945 = vmatprep.subr.mxu0 0.0
    %2946 = vmatpush1.msra.mxu0 0.0
    %2947 = vmatprep.subr.mxu0 0.0
    %2948 = vmatpush1.msra.mxu0 0.0
    %2949 = vmatprep.subr.mxu0 0.0
    %2950 = vmatpush1.msra.mxu0 0.0
    %2951 = vmatprep.subr.mxu0 0.0
    %2952 = vmatpush1.msra.mxu0 0.0
    %2953 = vmatprep.subr.mxu0 0.0
    %2954 = vmatpush1.msra.mxu0 0.0
    %2955 = vmatprep.subr.mxu0 0.0
    %2956 = vmatpush1.msra.mxu0 0.0
    %2957 = vmatprep.subr.mxu0 0.0
    %2958 = vmatpush1.msra.mxu0 0.0
    %2959 = vmatprep.subr.mxu0 0.0
    %2960 = vmatpush1.msra.mxu0 0.0
    %2961 = vmatprep.subr.mxu0 0.0
    %2962 = vmatpush1.msra.mxu0 0.0
    %2963 = vmatprep.subr.mxu0 %v1852
    %2964 = vmatpush1.msra.mxu0 %v1851
    %2965 = vmatprep.subr.mxu0 %v1850
    %2966 = vmatpush1.msra.mxu0 %v1849
    %2967 = vmatprep.subr.mxu0 %v1848
    %2968 = vmatpush1.msra.mxu0 %v1847
    %2969 = vmatprep.subr.mxu0 %v1846
    %2970 = vmatpush1.msra.mxu0 %v1845
    %2971 = vmatprep.subr.mxu0 0.0
    %2972 = vmatpush2.msra.mxu0 0.0
    %2973 = vmatprep.subr.mxu0 0.0
    %2974 = vmatpush2.msra.mxu0 0.0
    %2975 = vmatprep.subr.mxu0 0.0
    %2976 = vmatpush2.msra.mxu0 0.0
    %2977 = vmatprep.subr.mxu0 0.0
    %2978 = vmatpush2.msra.mxu0 0.0
    %2979 = vmatprep.subr.mxu0 0.0
    %2980 = vmatpush2.msra.mxu0 0.0
    %2981 = vmatprep.subr.mxu0 0.0
    %2982 = vmatpush2.msra.mxu0 0.0
    %2983 = vmatprep.subr.mxu0 0.0
    %2984 = vmatpush2.msra.mxu0 0.0
    %2985 = vmatprep.subr.mxu0 0.0
    %2986 = vmatpush2.msra.mxu0 0.0
    %2987 = vmatprep.subr.mxu0 0.0
    %2988 = vmatpush2.msra.mxu0 0.0
    %2989 = vmatprep.subr.mxu0 0.0
    %2990 = vmatpush2.msra.mxu0 0.0
    %2991 = vmatprep.subr.mxu0 0.0
    %2992 = vmatpush2.msra.mxu0 0.0
    %2993 = vmatprep.subr.mxu0 0.0
    %2994 = vmatpush2.msra.mxu0 0.0
    %2995 = vmatprep.subr.mxu0 0.0
    %2996 = vmatpush2.msra.mxu0 0.0
    %2997 = vmatprep.subr.mxu0 0.0
    %2998 = vmatpush2.msra.mxu0 0.0
    %2999 = vmatprep.subr.mxu0 0.0
    %3000 = vmatpush2.msra.mxu0 0.0
    %3001 = vmatprep.subr.mxu0 0.0
    %3002 = vmatpush2.msra.mxu0 0.0
    %3003 = vmatprep.mubr.f32.mxu0 0.0
    %3004 = vmatmul.mubr.f32.gmra.mxu0 %v2935
    %v3005 = vpop.f32.mrf.mxu0
    %v3006 = vadd.f32 0.0, %v3005
    %v3007 = vpop.f32.mrf.mxu0
    %v3008 = vadd.f32 0.0, %v3007
    %3009 = vmatprep.mubr.f32.mxu0 0.0
    %3010 = vmatmul.mubr.f32.gmra.mxu0 %v2937
    %v3011 = vpop.f32.mrf.mxu0
    %v3012 = vpop.f32.mrf.mxu0
    %3013 = vdwg.mxu0
    %v3014 = vsel %vm65, %v3006, %v3008
    %v3015 = vadd.f32 %v2928, %v3014
    %v3016 = vxor.u32 %v3015, 2147483648
    %v3017 = vmul.f32 %v3016, 1.442695
    %v3018 = vpow.pop %v3017
    %v3019 = vadd.f32 %v3018, 1.0
    %v3020 = vrcp.pop %v3019
    %v3021 = vmul.f32 1.0, %v3020
    %3022 = vrot.lane.b32.xlu0 %v3021, 64
    %v3023 = vpop.permute.xlu0 %3022
    %v3024 = vmul.f32 %v3021, %v2898
    %v3025 = vadd.f32 %v3023, %v3023
    %v3026 = vsub.f32 %v3025, 1.0
    %v3027 = vmul.f32 %v3021, %v3026
    %3029 = vrot.lane.b32.xlu0 %v3027, 32
    %v3030 = vpop.permute.xlu0 %3029
    %v3032 = vadd.f32 %v3024, %v3030
    %v3033 = vadd.f32 %v3032, %v3032
    %v3034 = vxor.u32 %v3033, 2147483648
    %v3035 = vmul.f32 %v3034, 1.442695
    %v3036 = vpow.pop %v3035
    %v3037 = vadd.f32 %v3036, 1.0
    %v3038 = vrcp.pop %v3037
    %v3039 = vmul.f32 1.0, %v3038
    %v3040 = vadd.f32 %v3039, %v3039
    %v3041 = vsub.f32 %v3040, 1.0
    %3043 = vrot.lane.b32.xlu0 %v3041, 64
    %v3044 = vpop.permute.xlu0 %3043
    %v3046 = vmul.f32 %v3021, %v3044
    %3048 = vrot.lane.b32.xlu0 %v3046, 32
    %v3049 = vpop.permute.xlu0 %3048
    %3051 = vrot.lane.b32.xlu0 %v1997, 64
    %v3052 = vpop.permute.xlu0 %3051
    %v3054 = vsel %vm198, %v3049, %v3052
    %v3055 = vld [vmem:[%s7] sm:$0xff]
    %v3056 = vld [vmem:[%s7 + $0x8] sm:$0xff]
    %v3057 = vld [vmem:[%s7 + $0x10] sm:$0xff]
    %v3058 = vld [vmem:[%s7 + $0x18] sm:$0xff]
    %v3059 = vld [vmem:[%s7 + $0x20] sm:$0xff]
    %v3060 = vld [vmem:[%s7 + $0x28] sm:$0xff]
    %v3061 = vld [vmem:[%s7 + $0x30] sm:$0xff]
    %v3062 = vld [vmem:[%s7 + $0x38] sm:$0xff]
    %v3063 = vld [vmem:[#allocation6] sm:$0x1]
    %v3065 = vlaneseq
    %v3066 = vshrl.u32 %v3065, 7
    %v3067 = vsub.s32 0, %v3066
    %v3068 = vrot.slane %v3063, %v3067
    %vm3070 = vcmask 523264
    %v3072 = vsel %vm3070, %v3054, 0
    %3074 = vmatprep.subr.mxu0 0.0
    %3075 = vmatpush1.msra.mxu0 0.0
    %3076 = vmatprep.subr.mxu0 0.0
    %3077 = vmatpush1.msra.mxu0 0.0
    %3078 = vmatprep.subr.mxu0 0.0
    %3079 = vmatpush1.msra.mxu0 0.0
    %3080 = vmatprep.subr.mxu0 0.0
    %3081 = vmatpush1.msra.mxu0 0.0
    %3082 = vmatprep.subr.mxu0 0.0
    %3083 = vmatpush1.msra.mxu0 0.0
    %3084 = vmatprep.subr.mxu0 0.0
    %3085 = vmatpush1.msra.mxu0 0.0
    %3086 = vmatprep.subr.mxu0 0.0
    %3087 = vmatpush1.msra.mxu0 0.0
    %3088 = vmatprep.subr.mxu0 0.0
    %3089 = vmatpush1.msra.mxu0 0.0
    %3090 = vmatprep.subr.mxu0 0.0
    %3091 = vmatpush1.msra.mxu0 %v3062
    %3092 = vmatprep.subr.mxu0 0.0
    %3093 = vmatpush1.msra.mxu0 %v3061
    %3094 = vmatprep.subr.mxu0 0.0
    %3095 = vmatpush1.msra.mxu0 %v3060
    %3096 = vmatprep.subr.mxu0 0.0
    %3097 = vmatpush1.msra.mxu0 %v3059
    %3098 = vmatprep.subr.mxu0 0.0
    %3099 = vmatpush1.msra.mxu0 %v3058
    %3100 = vmatprep.subr.mxu0 0.0
    %3101 = vmatpush1.msra.mxu0 %v3057
    %3102 = vmatprep.subr.mxu0 0.0
    %3103 = vmatpush1.msra.mxu0 %v3056
    %3104 = vmatprep.subr.mxu0 0.0
    %3105 = vmatpush1.msra.mxu0 %v3055
    %3106 = vmatprep.subr.mxu0 0.0
    %3107 = vmatpush2.msra.mxu0 0.0
    %3108 = vmatprep.subr.mxu0 0.0
    %3109 = vmatpush2.msra.mxu0 0.0
    %3110 = vmatprep.subr.mxu0 0.0
    %3111 = vmatpush2.msra.mxu0 0.0
    %3112 = vmatprep.subr.mxu0 0.0
    %3113 = vmatpush2.msra.mxu0 0.0
    %3114 = vmatprep.subr.mxu0 0.0
    %3115 = vmatpush2.msra.mxu0 0.0
    %3116 = vmatprep.subr.mxu0 0.0
    %3117 = vmatpush2.msra.mxu0 0.0
    %3118 = vmatprep.subr.mxu0 0.0
    %3119 = vmatpush2.msra.mxu0 0.0
    %3120 = vmatprep.subr.mxu0 0.0
    %3121 = vmatpush2.msra.mxu0 0.0
    %3122 = vmatprep.subr.mxu0 0.0
    %3123 = vmatpush2.msra.mxu0 0.0
    %3124 = vmatprep.subr.mxu0 0.0
    %3125 = vmatpush2.msra.mxu0 0.0
    %3126 = vmatprep.subr.mxu0 0.0
    %3127 = vmatpush2.msra.mxu0 0.0
    %3128 = vmatprep.subr.mxu0 0.0
    %3129 = vmatpush2.msra.mxu0 0.0
    %3130 = vmatprep.subr.mxu0 0.0
    %3131 = vmatpush2.msra.mxu0 0.0
    %3132 = vmatprep.subr.mxu0 0.0
    %3133 = vmatpush2.msra.mxu0 0.0
    %3134 = vmatprep.subr.mxu0 0.0
    %3135 = vmatpush2.msra.mxu0 0.0
    %3136 = vmatprep.subr.mxu0 0.0
    %3137 = vmatpush2.msra.mxu0 0.0
    %3138 = vmatprep.mubr.f32.mxu0 0.0
    %3139 = vmatmul.mubr.f32.gmra.mxu0 %v3072
    %v3140 = vpop.f32.mrf.mxu0
    %v3141 = vadd.f32 %v3068, %v3140
    %v3142 = vpop.f32.mrf.mxu0
    %3143 = vdwg.mxu0
    %vm3144 = vcmask 7168
    %3145 = vst.msk [vmem:[%s9] sm:$0xff] %vm3144, %v3141
    // Predicated region
    $region46: #{tpu_custom_call.1} parent=1 // pred_check
      _
    $region47: #{tpu_custom_call.1} parent=1 // pred_check_branch
      %3147 = sbr.rel (0) target = $region49
    $region48: #{tpu_custom_call.1} parent=1 // pred_region
      _
    $region49: #{tpu_custom_call.1} parent=1 // pred_fallthru
      _
    // Predicated region
    $region50: #{tpu_custom_call.1} parent=1 // pred_check
      _
    $region51: #{tpu_custom_call.1} parent=1 // pred_check_branch
      %3149 = sbr.rel (0) target = $region53
    $region52: #{tpu_custom_call.1} parent=1 // pred_region
      _
    $region53: #{tpu_custom_call.1} parent=1 // pred_fallthru
      _
    %3150 = vsyncpa [#allocation8], 1
    %3151 = vsyncpa [#allocation10], 1

</llo_original>
